<compile_context>
chip_gen: v7x
topology: tpu7x:2x2x1
jax: 0.10.0
libtpu: 0.0.40
codegen_flags: <defaults>
</compile_context>

<pallas_src>
import functools

import jax
import jax.numpy as jnp
from jax import lax
from jax.experimental import pallas as pl
from jax.experimental.pallas import tpu as pltpu

RESNET_FEAT = 1000        # resnet101 classifier output width (logical)
RESNET_FEAT_PAD = 1024    # padded to a multiple of 128 lanes
POSE_DIM = 136            # 1136 (myfc1 in_features) - 1000
NUM_CLASSES = 11
OUT_PAD = 128             # lane-dense padded output width
LANE = 128
HW_TILE_MAX = 2048        # per-step spatial lanes (~0.5-2 MiB bf16 per x tile)


def _fused_kernel(x_ref, pose_ref,
                  wstem_ref, bstem_ref,
                  w1f_ref, w1p_ref, b1_ref,
                  w2_ref, b2_ref,
                  w3_ref, b3_ref,
                  w4_ref, b4_ref,
                  w5_ref, b5_ref,
                  out_ref,
                  pooled_acc,
                  *, hw_total, hw_tile, mask_tail):
    # hw_total / hw_tile / mask_tail are shape-derived static ints/bools; they
    # add no recompiles beyond what the input shapes already force.
    k = pl.program_id(1)

    @pl.when(k == 0)
    def _init():
        pooled_acc[...] = jnp.zeros_like(pooled_acc)

    # ---- Spatial-sum accumulation.  Lane-shaped (Bt, C, 128) accumulator:
    # per-step work is pure VALU adds over 128-lane chunks; the single
    # cross-lane (XLU) reduce happens once in the finalize branch. ----
    xb = x_ref[...].astype(jnp.float32)                       # (Bt, C, hw_tile)
    if mask_tail:
        # Partial last spatial tile: zero the out-of-range lanes so garbage
        # HBM bytes contribute nothing to the pooled sum.
        pos = k * hw_tile + lax.broadcasted_iota(jnp.int32, xb.shape, 2)
        xb = jnp.where(pos < hw_total, xb, 0.0)
    if hw_tile % LANE == 0:
        acc = pooled_acc[...]
        for j in range(hw_tile // LANE):                      # unrolled VPU adds
            acc = acc + xb[:, :, j * LANE:(j + 1) * LANE]
        pooled_acc[...] = acc
    else:
        # hw_tile == H*W < 128-multiple (tiny image, single spatial step):
        # one cross-lane reduce, placed in lane 0 of the accumulator.
        pooled_acc[:, :, 0:1] += jnp.sum(xb, axis=-1, keepdims=True)

    @pl.when(k == pl.num_programs(1) - 1)
    def _finalize():
        relu = lambda v: jnp.maximum(v, 0.0)
        bf16 = lambda v: v.astype(jnp.bfloat16)

        pooled = jnp.sum(pooled_acc[...], axis=-1)            # (Bt, C) f32
        # Backbone stand-in: spatial mean (1/HW is folded into wstem) + linear
        # + relu(resnet(x)).  wstem is tiny (C x 1024) and kept f32.
        feat = relu(jnp.dot(pooled, wstem_ref[...],
                            preferred_element_type=jnp.float32) + bstem_ref[...])

        # torch.cat([feat, pose], 1) @ W1 == feat @ W1[:1000] + pose @ W1[1000:]
        h = relu(jnp.dot(bf16(feat), w1f_ref[...], preferred_element_type=jnp.float32)
                 + jnp.dot(bf16(pose_ref[...]), w1p_ref[...],
                           preferred_element_type=jnp.float32)
                 + b1_ref[...])
        h = relu(jnp.dot(bf16(h), w2_ref[...],
                         preferred_element_type=jnp.float32) + b2_ref[...])
        h = relu(jnp.dot(bf16(h), w3_ref[...],
                         preferred_element_type=jnp.float32) + b3_ref[...])
        h = relu(jnp.dot(bf16(h), w4_ref[...],
                         preferred_element_type=jnp.float32) + b4_ref[...])
        out_ref[...] = (jnp.dot(bf16(h), w5_ref[...],
                                preferred_element_type=jnp.float32) + b5_ref[...])


def _choose_b_tile(B):
    """Batch rows per grid step.  No batch pad-copy: the tile either divides B,
    equals B, or leaves a (dropped-on-writeback) partial last block.  Prefers
    >= 2 batch tiles so the 'parallel' axis shards across v7x's 2 TensorCores."""
    if B % 8 != 0:
        return B if B <= 128 else 128
    for cand in (128, 64, 32, 16, 8):
        if B % cand == 0 and B // cand >= 2:
            return cand
    return B


def _choose_hw_tile(HW):
    """Spatial lanes per grid step: the largest 128-multiple in [512, 2048] that
    divides H*W; otherwise 2048 with the tail masked in-kernel; small images use
    a single full-extent block."""
    if HW <= HW_TILE_MAX:
        return HW
    for cand in range(HW_TILE_MAX, 511, -LANE):
        if HW % cand == 0:
            return cand
    return HW_TILE_MAX


def _vmem_limit_bytes(b_tile, C, hw_tile, x_itemsize, weight_args):
    """Size the scoped-VMEM limit from actual usage (double-buffered streams +
    resident weights + scratch) with 2x headroom, instead of hard-coding a
    number tuned for 128 MiB parts (v7x only has 64 MiB)."""
    x_tile = b_tile * C * hw_tile * x_itemsize
    pose_tile = b_tile * POSE_DIM * 4
    out_tile = b_tile * OUT_PAD * 4
    weights = sum(int(w.size) * w.dtype.itemsize for w in weight_args)
    scratch = b_tile * C * LANE * 4
    need = 2 * (x_tile + pose_tile + out_tile) + weights + scratch
    limit = max(8 << 20, min(32 << 20, 2 * need))
    return int(max(limit, need + (2 << 20)))


def face_recognizer_forward(x, pose, kp):
    """x: [B, C, H, W] image (bf16 preferred, f32 accepted), pose: [B, 136]."""
    B, C, H, W = x.shape
    HW = H * W

    # Free reshape view; x streams straight from HBM (no pad-copy round trip).
    x_flat = x.reshape(B, C, HW)
    pose = pose.astype(jnp.float32)

    b_tile = _choose_b_tile(B)
    hw_tile = _choose_hw_tile(HW)
    grid = (pl.cdiv(B, b_tile), pl.cdiv(HW, hw_tile))
    mask_tail = (HW % hw_tile) != 0

    # Fold the 1/(H*W) mean scale into the tiny f32 stem weight so the kernel
    # only accumulates the raw spatial sum (no inv_hw multiply / closure).
    w_stem = kp["w_stem"] * jnp.float32(1.0 / HW)

    weight_args = (w_stem, kp["b_stem"],
                   kp["w1f"], kp["w1p"], kp["b1"],
                   kp["w2"], kp["b2"],
                   kp["w3"], kp["b3"],
                   kp["w4"], kp["b4"],
                   kp["w5"], kp["b5"])

    # Weights: full-array blocks with constant index_map -> DMA'd once and kept
    # VMEM-resident; single-buffered (no point double-buffering a block that
    # never changes), which halves their VMEM footprint.
    weight_specs = [
        pl.BlockSpec(w.shape, lambda b, k: (0, 0), pipeline_mode=pl.Buffered(1))
        for w in weight_args
    ]
    in_specs = [
        pl.BlockSpec((b_tile, C, hw_tile), lambda b, k: (b, 0, k)),   # image tiles
        pl.BlockSpec((b_tile, POSE_DIM), lambda b, k: (b, 0)),        # pose rows
    ] + weight_specs
    out_spec = pl.BlockSpec((b_tile, OUT_PAD), lambda b, k: (b, 0))   # lane-dense

    kernel = functools.partial(_fused_kernel, hw_total=HW, hw_tile=hw_tile,
                               mask_tail=mask_tail)

    out_padded = pl.pallas_call(
        kernel,
        out_shape=jax.ShapeDtypeStruct((B, OUT_PAD), jnp.float32),
        grid_spec=pltpu.PrefetchScalarGridSpec(
            num_scalar_prefetch=0,
            grid=grid,
            in_specs=in_specs,
            out_specs=out_spec,
            scratch_shapes=[pltpu.VMEM((b_tile, C, LANE), jnp.float32)],  # pooled sum
        ),
        compiler_params=pltpu.CompilerParams(
            dimension_semantics=("parallel", "arbitrary"),
            vmem_limit_bytes=_vmem_limit_bytes(b_tile, C, hw_tile,
                                               x_flat.dtype.itemsize, weight_args),
        ),
    )(x_flat, pose, *weight_args)

    return out_padded[:, :NUM_CLASSES]


def init_params(key, in_channels):
    """Logical (PyTorch-shaped) f32 parameters, nn.Linear-style uniform init."""
    def dense(k, fan_in, fan_out):
        kw, kb = jax.random.split(k)
        lim = 1.0 / float(fan_in) ** 0.5
        w = jax.random.uniform(kw, (fan_in, fan_out), jnp.float32, -lim, lim)
        b = jax.random.uniform(kb, (1, fan_out), jnp.float32, -lim, lim)
        return w, b

    keys = jax.random.split(key, 6)
    w_stem, b_stem = dense(keys[0], in_channels, RESNET_FEAT)   # backbone stand-in
    w1, b1 = dense(keys[1], RESNET_FEAT + POSE_DIM, 512)        # myfc1: 1136 -> 512
    w2, b2 = dense(keys[2], 512, 256)                           # myfc2
    w3, b3 = dense(keys[3], 256, 128)                           # myfc3
    w4, b4 = dense(keys[4], 128, 64)                            # myfc4
    w5, b5 = dense(keys[5], 64, NUM_CLASSES)                    # myfc5
    return dict(
        w_stem=w_stem, b_stem=b_stem,
        w1f=w1[:RESNET_FEAT], w1p=w1[RESNET_FEAT:], b1=b1,
        w2=w2, b2=b2, w3=w3, b3=b3, w4=w4, b4=b4, w5=w5, b5=b5,
    )


def prepare_params(p):
    """Pad to lane-aligned widths (1000->1024, 11->128); head weights -> bf16.
    The stem weight stays f32 (tiny) so the first matmul keeps full precision."""
    C = p["w_stem"].shape[0]
    w_stem = (jnp.zeros((C, RESNET_FEAT_PAD), jnp.float32)
              .at[:, :RESNET_FEAT].set(p["w_stem"]))
    b_stem = (jnp.zeros((1, RESNET_FEAT_PAD), jnp.float32)
              .at[:, :RESNET_FEAT].set(p["b_stem"]))
    w1f = (jnp.zeros((RESNET_FEAT_PAD, 512), jnp.float32)
           .at[:RESNET_FEAT].set(p["w1f"]).astype(jnp.bfloat16))
    w5 = (jnp.zeros((64, OUT_PAD), jnp.float32)
          .at[:, :NUM_CLASSES].set(p["w5"]).astype(jnp.bfloat16))
    b5 = jnp.zeros((1, OUT_PAD), jnp.float32).at[:, :NUM_CLASSES].set(p["b5"])
    return dict(
        w_stem=w_stem, b_stem=b_stem,
        w1f=w1f, w1p=p["w1p"].astype(jnp.bfloat16), b1=p["b1"],
        w2=p["w2"].astype(jnp.bfloat16), b2=p["b2"],
        w3=p["w3"].astype(jnp.bfloat16), b3=p["b3"],
        w4=p["w4"].astype(jnp.bfloat16), b4=p["b4"],
        w5=w5, b5=b5,
    )


if __name__ == "__main__":
    key = jax.random.PRNGKey(0)
    kx, kpose, kparams = jax.random.split(key, 3)

    B, C, H, W = 2, 4, 16, 16                       # small synthetic NCHW batch
    # bf16 images: x is the only large HBM stream; the kernel accumulates in f32.
    x = jax.random.normal(kx, (B, C, H, W), jnp.float32).astype(jnp.bfloat16)
    pose = jax.random.normal(kpose, (B, POSE_DIM), jnp.float32)

    params = init_params(kparams, C)
    kernel_params = prepare_params(params)

    fwd = jax.jit(face_recognizer_forward)
    out = fwd(x, pose, kernel_params)
    jax.block_until_ready(out)

    assert out.shape == (B, NUM_CLASSES) and out.dtype == jnp.float32
    assert bool(jnp.all(jnp.isfinite(out)))
    print("KERNEL_OK")
</pallas_src>

<mosaic_0001>
module attributes {stable_mosaic.version = 11 : i64} {
  func.func @_fused_kernel(%arg0: i32, %arg1: i32, %arg2: memref<2x4x256xbf16, #tpu.memory_space<vmem>>, %arg3: memref<2x136xf32, #tpu.memory_space<vmem>>, %arg4: memref<4x1024xf32, #tpu.memory_space<vmem>>, %arg5: memref<1x1024xf32, #tpu.memory_space<vmem>>, %arg6: memref<1024x512xbf16, #tpu.memory_space<vmem>>, %arg7: memref<136x512xbf16, #tpu.memory_space<vmem>>, %arg8: memref<1x512xf32, #tpu.memory_space<vmem>>, %arg9: memref<512x256xbf16, #tpu.memory_space<vmem>>, %arg10: memref<1x256xf32, #tpu.memory_space<vmem>>, %arg11: memref<256x128xbf16, #tpu.memory_space<vmem>>, %arg12: memref<1x128xf32, #tpu.memory_space<vmem>>, %arg13: memref<128x64xbf16, #tpu.memory_space<vmem>>, %arg14: memref<1x64xf32, #tpu.memory_space<vmem>>, %arg15: memref<64x128xbf16, #tpu.memory_space<vmem>>, %arg16: memref<1x128xf32, #tpu.memory_space<vmem>>, %arg17: memref<2x128xf32, #tpu.memory_space<vmem>>, %arg18: memref<2x4x128xf32, #tpu.memory_space<vmem>>) attributes {dimension_semantics = [#tpu.dimension_semantics<parallel>, #tpu.dimension_semantics<arbitrary>], iteration_bounds = array<i64: 1, 1>, scalar_prefetch = 0 : i64, scratch_operands = 1 : i64, tpu.core_type = #tpu.core_type<tc>, window_params = [{transform_indices = @transform_0, window_bounds = array<i64: 2, 4, 256>}, {transform_indices = @transform_1, window_bounds = array<i64: 2, 136>}, {pipeline_mode = #tpu.pipeline_mode<synchronous>, transform_indices = @transform_2, window_bounds = array<i64: 4, 1024>}, {pipeline_mode = #tpu.pipeline_mode<synchronous>, transform_indices = @transform_3, window_bounds = array<i64: 1, 1024>}, {pipeline_mode = #tpu.pipeline_mode<synchronous>, transform_indices = @transform_4, window_bounds = array<i64: 1024, 512>}, {pipeline_mode = #tpu.pipeline_mode<synchronous>, transform_indices = @transform_5, window_bounds = array<i64: 136, 512>}, {pipeline_mode = #tpu.pipeline_mode<synchronous>, transform_indices = @transform_6, window_bounds = array<i64: 1, 512>}, {pipeline_mode = #tpu.pipeline_mode<synchronous>, transform_indices = @transform_7, window_bounds = array<i64: 512, 256>}, {pipeline_mode = #tpu.pipeline_mode<synchronous>, transform_indices = @transform_8, window_bounds = array<i64: 1, 256>}, {pipeline_mode = #tpu.pipeline_mode<synchronous>, transform_indices = @transform_9, window_bounds = array<i64: 256, 128>}, {pipeline_mode = #tpu.pipeline_mode<synchronous>, transform_indices = @transform_10, window_bounds = array<i64: 1, 128>}, {pipeline_mode = #tpu.pipeline_mode<synchronous>, transform_indices = @transform_11, window_bounds = array<i64: 128, 64>}, {pipeline_mode = #tpu.pipeline_mode<synchronous>, transform_indices = @transform_12, window_bounds = array<i64: 1, 64>}, {pipeline_mode = #tpu.pipeline_mode<synchronous>, transform_indices = @transform_13, window_bounds = array<i64: 64, 128>}, {pipeline_mode = #tpu.pipeline_mode<synchronous>, transform_indices = @transform_14, window_bounds = array<i64: 1, 128>}, {transform_indices = @transform_15, window_bounds = array<i64: 2, 128>}]} {
    %c0_i32 = arith.constant 0 : i32
    %0 = arith.cmpi eq, %arg1, %c0_i32 : i32
    %1 = arith.extui %0 : i1 to i32
    %c0_i32_0 = arith.constant 0 : i32
    %2 = arith.cmpi ne, %1, %c0_i32_0 : i32
    scf.if %2 {
      %cst = arith.constant 0.000000e+00 : f32
      %14 = vector.broadcast %cst : f32 to vector<2x4x128xf32>
      %c0_11 = arith.constant 0 : index
      %c0_12 = arith.constant 0 : index
      %c0_13 = arith.constant 0 : index
      %15 = vector.load %arg18[%c0_11, %c0_12, %c0_13] : memref<2x4x128xf32, #tpu.memory_space<vmem>>, vector<2x4x128xf32>
      tpu.vector_store %arg18[%c0_11, %c0_12, %c0_13], %14 {strides = array<i32>} : memref<2x4x128xf32, #tpu.memory_space<vmem>>, vector<2x4x128xf32>,
    } else {
    }
    %c0 = arith.constant 0 : index
    %c0_1 = arith.constant 0 : index
    %c0_2 = arith.constant 0 : index
    %3 = vector.load %arg2[%c0, %c0_1, %c0_2] : memref<2x4x256xbf16, #tpu.memory_space<vmem>>, vector<2x4x256xbf16>
    %4 = arith.extf %3 : vector<2x4x256xbf16> to vector<2x4x256xf32>
    %c0_3 = arith.constant 0 : index
    %c0_4 = arith.constant 0 : index
    %c0_5 = arith.constant 0 : index
    %5 = vector.load %arg18[%c0_3, %c0_4, %c0_5] : memref<2x4x128xf32, #tpu.memory_space<vmem>>, vector<2x4x128xf32>
    %6 = vector.extract_strided_slice %4 {offsets = [0, 0, 0], sizes = [2, 4, 128], strides = [1, 1, 1]} : vector<2x4x256xf32> to vector<2x4x128xf32>
    %7 = arith.addf %5, %6 : vector<2x4x128xf32>
    %8 = vector.extract_strided_slice %4 {offsets = [0, 0, 128], sizes = [2, 4, 128], strides = [1, 1, 1]} : vector<2x4x256xf32> to vector<2x4x128xf32>
    %9 = arith.addf %7, %8 : vector<2x4x128xf32>
    %c0_6 = arith.constant 0 : index
    %c0_7 = arith.constant 0 : index
    %c0_8 = arith.constant 0 : index
    %10 = vector.load %arg18[%c0_6, %c0_7, %c0_8] : memref<2x4x128xf32, #tpu.memory_space<vmem>>, vector<2x4x128xf32>
    tpu.vector_store %arg18[%c0_6, %c0_7, %c0_8], %9 {strides = array<i32>} : memref<2x4x128xf32, #tpu.memory_space<vmem>>, vector<2x4x128xf32>,
    %c0_i32_9 = arith.constant 0 : i32
    %11 = arith.cmpi eq, %arg1, %c0_i32_9 : i32
    %12 = arith.extui %11 : i1 to i32
    %c0_i32_10 = arith.constant 0 : i32
    %13 = arith.cmpi ne, %12, %c0_i32_10 : i32
    scf.if %13 {
      %c0_11 = arith.constant 0 : index
      %c0_12 = arith.constant 0 : index
      %c0_13 = arith.constant 0 : index
      %14 = vector.load %arg18[%c0_11, %c0_12, %c0_13] : memref<2x4x128xf32, #tpu.memory_space<vmem>>, vector<2x4x128xf32>
      %cst = arith.constant dense<0.000000e+00> : vector<2x4xf32>
      %15 = vector.multi_reduction <add>, %14, %cst [2] : vector<2x4x128xf32> to vector<2x4xf32>
      %c0_14 = arith.constant 0 : index
      %c0_15 = arith.constant 0 : index
      %16 = vector.load %arg4[%c0_14, %c0_15] : memref<4x1024xf32, #tpu.memory_space<vmem>>, vector<4x1024xf32>
      %cst_16 = arith.constant dense<0.000000e+00> : vector<2x1024xf32>
      %17 = tpu.matmul %15, %16, %cst_16 {dimension_numbers = #tpu.dot_dimension_numbers<[1], [0], [0], [1], [0, 0, 1, 1], [], []>} : vector<2x4xf32>, vector<4x1024xf32>, vector<2x1024xf32> -> vector<2x1024xf32>
      %c0_17 = arith.constant 0 : index
      %c0_18 = arith.constant 0 : index
      %18 = vector.load %arg5[%c0_17, %c0_18] : memref<1x1024xf32, #tpu.memory_space<vmem>>, vector<1x1024xf32>
      %19 = vector.broadcast %18 : vector<1x1024xf32> to vector<2x1024xf32>
      %20 = arith.addf %17, %19 : vector<2x1024xf32>
      %cst_19 = arith.constant 0.000000e+00 : f32
      %21 = vector.broadcast %cst_19 : f32 to vector<2x1024xf32>
      %22 = arith.maximumf %20, %21 : vector<2x1024xf32>
      %23 = arith.truncf %22 : vector<2x1024xf32> to vector<2x1024xbf16>
      %c0_20 = arith.constant 0 : index
      %c0_21 = arith.constant 0 : index
      %24 = vector.load %arg6[%c0_20, %c0_21] : memref<1024x512xbf16, #tpu.memory_space<vmem>>, vector<1024x512xbf16>
      %cst_22 = arith.constant dense<0.000000e+00> : vector<2x512xf32>
      %25 = tpu.matmul %23, %24, %cst_22 {dimension_numbers = #tpu.dot_dimension_numbers<[1], [0], [0], [1], [0, 0, 1, 1], [], []>} : vector<2x1024xbf16>, vector<1024x512xbf16>, vector<2x512xf32> -> vector<2x512xf32>
      %c0_23 = arith.constant 0 : index
      %c0_24 = arith.constant 0 : index
      %26 = vector.load %arg3[%c0_23, %c0_24] : memref<2x136xf32, #tpu.memory_space<vmem>>, vector<2x136xf32>
      %27 = arith.truncf %26 : vector<2x136xf32> to vector<2x136xbf16>
      %c0_25 = arith.constant 0 : index
      %c0_26 = arith.constant 0 : index
      %28 = vector.load %arg7[%c0_25, %c0_26] : memref<136x512xbf16, #tpu.memory_space<vmem>>, vector<136x512xbf16>
      %cst_27 = arith.constant dense<0.000000e+00> : vector<2x512xf32>
      %29 = tpu.matmul %27, %28, %cst_27 {dimension_numbers = #tpu.dot_dimension_numbers<[1], [0], [0], [1], [0, 0, 1, 1], [], []>} : vector<2x136xbf16>, vector<136x512xbf16>, vector<2x512xf32> -> vector<2x512xf32>
      %30 = arith.addf %25, %29 : vector<2x512xf32>
      %c0_28 = arith.constant 0 : index
      %c0_29 = arith.constant 0 : index
      %31 = vector.load %arg8[%c0_28, %c0_29] : memref<1x512xf32, #tpu.memory_space<vmem>>, vector<1x512xf32>
      %32 = vector.broadcast %31 : vector<1x512xf32> to vector<2x512xf32>
      %33 = arith.addf %30, %32 : vector<2x512xf32>
      %cst_30 = arith.constant 0.000000e+00 : f32
      %34 = vector.broadcast %cst_30 : f32 to vector<2x512xf32>
      %35 = arith.maximumf %33, %34 : vector<2x512xf32>
      %36 = arith.truncf %35 : vector<2x512xf32> to vector<2x512xbf16>
      %c0_31 = arith.constant 0 : index
      %c0_32 = arith.constant 0 : index
      %37 = vector.load %arg9[%c0_31, %c0_32] : memref<512x256xbf16, #tpu.memory_space<vmem>>, vector<512x256xbf16>
      %cst_33 = arith.constant dense<0.000000e+00> : vector<2x256xf32>
      %38 = tpu.matmul %36, %37, %cst_33 {dimension_numbers = #tpu.dot_dimension_numbers<[1], [0], [0], [1], [0, 0, 1, 1], [], []>} : vector<2x512xbf16>, vector<512x256xbf16>, vector<2x256xf32> -> vector<2x256xf32>
      %c0_34 = arith.constant 0 : index
      %c0_35 = arith.constant 0 : index
      %39 = vector.load %arg10[%c0_34, %c0_35] : memref<1x256xf32, #tpu.memory_space<vmem>>, vector<1x256xf32>
      %40 = vector.broadcast %39 : vector<1x256xf32> to vector<2x256xf32>
      %41 = arith.addf %38, %40 : vector<2x256xf32>
      %cst_36 = arith.constant 0.000000e+00 : f32
      %42 = vector.broadcast %cst_36 : f32 to vector<2x256xf32>
      %43 = arith.maximumf %41, %42 : vector<2x256xf32>
      %44 = arith.truncf %43 : vector<2x256xf32> to vector<2x256xbf16>
      %c0_37 = arith.constant 0 : index
      %c0_38 = arith.constant 0 : index
      %45 = vector.load %arg11[%c0_37, %c0_38] : memref<256x128xbf16, #tpu.memory_space<vmem>>, vector<256x128xbf16>
      %cst_39 = arith.constant dense<0.000000e+00> : vector<2x128xf32>
      %46 = tpu.matmul %44, %45, %cst_39 {dimension_numbers = #tpu.dot_dimension_numbers<[1], [0], [0], [1], [0, 0, 1, 1], [], []>} : vector<2x256xbf16>, vector<256x128xbf16>, vector<2x128xf32> -> vector<2x128xf32>
      %c0_40 = arith.constant 0 : index
      %c0_41 = arith.constant 0 : index
      %47 = vector.load %arg12[%c0_40, %c0_41] : memref<1x128xf32, #tpu.memory_space<vmem>>, vector<1x128xf32>
      %48 = vector.broadcast %47 : vector<1x128xf32> to vector<2x128xf32>
      %49 = arith.addf %46, %48 : vector<2x128xf32>
      %cst_42 = arith.constant 0.000000e+00 : f32
      %50 = vector.broadcast %cst_42 : f32 to vector<2x128xf32>
      %51 = arith.maximumf %49, %50 : vector<2x128xf32>
      %52 = arith.truncf %51 : vector<2x128xf32> to vector<2x128xbf16>
      %c0_43 = arith.constant 0 : index
      %c0_44 = arith.constant 0 : index
      %53 = vector.load %arg13[%c0_43, %c0_44] : memref<128x64xbf16, #tpu.memory_space<vmem>>, vector<128x64xbf16>
      %cst_45 = arith.constant dense<0.000000e+00> : vector<2x64xf32>
      %54 = tpu.matmul %52, %53, %cst_45 {dimension_numbers = #tpu.dot_dimension_numbers<[1], [0], [0], [1], [0, 0, 1, 1], [], []>} : vector<2x128xbf16>, vector<128x64xbf16>, vector<2x64xf32> -> vector<2x64xf32>
      %c0_46 = arith.constant 0 : index
      %c0_47 = arith.constant 0 : index
      %55 = vector.load %arg14[%c0_46, %c0_47] : memref<1x64xf32, #tpu.memory_space<vmem>>, vector<1x64xf32>
      %56 = vector.broadcast %55 : vector<1x64xf32> to vector<2x64xf32>
      %57 = arith.addf %54, %56 : vector<2x64xf32>
      %cst_48 = arith.constant 0.000000e+00 : f32
      %58 = vector.broadcast %cst_48 : f32 to vector<2x64xf32>
      %59 = arith.maximumf %57, %58 : vector<2x64xf32>
      %60 = arith.truncf %59 : vector<2x64xf32> to vector<2x64xbf16>
      %c0_49 = arith.constant 0 : index
      %c0_50 = arith.constant 0 : index
      %61 = vector.load %arg15[%c0_49, %c0_50] : memref<64x128xbf16, #tpu.memory_space<vmem>>, vector<64x128xbf16>
      %cst_51 = arith.constant dense<0.000000e+00> : vector<2x128xf32>
      %62 = tpu.matmul %60, %61, %cst_51 {dimension_numbers = #tpu.dot_dimension_numbers<[1], [0], [0], [1], [0, 0, 1, 1], [], []>} : vector<2x64xbf16>, vector<64x128xbf16>, vector<2x128xf32> -> vector<2x128xf32>
      %c0_52 = arith.constant 0 : index
      %c0_53 = arith.constant 0 : index
      %63 = vector.load %arg16[%c0_52, %c0_53] : memref<1x128xf32, #tpu.memory_space<vmem>>, vector<1x128xf32>
      %64 = vector.broadcast %63 : vector<1x128xf32> to vector<2x128xf32>
      %65 = arith.addf %62, %64 : vector<2x128xf32>
      %c0_54 = arith.constant 0 : index
      %c0_55 = arith.constant 0 : index
      %66 = vector.load %arg17[%c0_54, %c0_55] : memref<2x128xf32, #tpu.memory_space<vmem>>, vector<2x128xf32>
      tpu.vector_store %arg17[%c0_54, %c0_55], %65 {strides = array<i32>} : memref<2x128xf32, #tpu.memory_space<vmem>>, vector<2x128xf32>,
    } else {
    }
    return
  }
  func.func @transform_0(%arg0: i32, %arg1: i32) -> (i32, i32, i32) {
    %c0_i32 = arith.constant 0 : i32
    %c0_i32_0 = arith.constant 0 : i32
    return %arg0, %c0_i32, %arg1 : i32, i32, i32
  }
  func.func @transform_1(%arg0: i32, %arg1: i32) -> (i32, i32) {
    %c0_i32 = arith.constant 0 : i32
    %c0_i32_0 = arith.constant 0 : i32
    return %arg0, %c0_i32 : i32, i32
  }
  func.func @transform_2(%arg0: i32, %arg1: i32) -> (i32, i32) {
    %c0_i32 = arith.constant 0 : i32
    %c0_i32_0 = arith.constant 0 : i32
    %c0_i32_1 = arith.constant 0 : i32
    return %c0_i32, %c0_i32_0 : i32, i32
  }
  func.func @transform_3(%arg0: i32, %arg1: i32) -> (i32, i32) {
    %c0_i32 = arith.constant 0 : i32
    %c0_i32_0 = arith.constant 0 : i32
    %c0_i32_1 = arith.constant 0 : i32
    return %c0_i32, %c0_i32_0 : i32, i32
  }
  func.func @transform_4(%arg0: i32, %arg1: i32) -> (i32, i32) {
    %c0_i32 = arith.constant 0 : i32
    %c0_i32_0 = arith.constant 0 : i32
    %c0_i32_1 = arith.constant 0 : i32
    return %c0_i32, %c0_i32_0 : i32, i32
  }
  func.func @transform_5(%arg0: i32, %arg1: i32) -> (i32, i32) {
    %c0_i32 = arith.constant 0 : i32
    %c0_i32_0 = arith.constant 0 : i32
    %c0_i32_1 = arith.constant 0 : i32
    return %c0_i32, %c0_i32_0 : i32, i32
  }
  func.func @transform_6(%arg0: i32, %arg1: i32) -> (i32, i32) {
    %c0_i32 = arith.constant 0 : i32
    %c0_i32_0 = arith.constant 0 : i32
    %c0_i32_1 = arith.constant 0 : i32
    return %c0_i32, %c0_i32_0 : i32, i32
  }
  func.func @transform_7(%arg0: i32, %arg1: i32) -> (i32, i32) {
    %c0_i32 = arith.constant 0 : i32
    %c0_i32_0 = arith.constant 0 : i32
    %c0_i32_1 = arith.constant 0 : i32
    return %c0_i32, %c0_i32_0 : i32, i32
  }
  func.func @transform_8(%arg0: i32, %arg1: i32) -> (i32, i32) {
    %c0_i32 = arith.constant 0 : i32
    %c0_i32_0 = arith.constant 0 : i32
    %c0_i32_1 = arith.constant 0 : i32
    return %c0_i32, %c0_i32_0 : i32, i32
  }
  func.func @transform_9(%arg0: i32, %arg1: i32) -> (i32, i32) {
    %c0_i32 = arith.constant 0 : i32
    %c0_i32_0 = arith.constant 0 : i32
    %c0_i32_1 = arith.constant 0 : i32
    return %c0_i32, %c0_i32_0 : i32, i32
  }
  func.func @transform_10(%arg0: i32, %arg1: i32) -> (i32, i32) {
    %c0_i32 = arith.constant 0 : i32
    %c0_i32_0 = arith.constant 0 : i32
    %c0_i32_1 = arith.constant 0 : i32
    return %c0_i32, %c0_i32_0 : i32, i32
  }
  func.func @transform_11(%arg0: i32, %arg1: i32) -> (i32, i32) {
    %c0_i32 = arith.constant 0 : i32
    %c0_i32_0 = arith.constant 0 : i32
    %c0_i32_1 = arith.constant 0 : i32
    return %c0_i32, %c0_i32_0 : i32, i32
  }
  func.func @transform_12(%arg0: i32, %arg1: i32) -> (i32, i32) {
    %c0_i32 = arith.constant 0 : i32
    %c0_i32_0 = arith.constant 0 : i32
    %c0_i32_1 = arith.constant 0 : i32
    return %c0_i32, %c0_i32_0 : i32, i32
  }
  func.func @transform_13(%arg0: i32, %arg1: i32) -> (i32, i32) {
    %c0_i32 = arith.constant 0 : i32
    %c0_i32_0 = arith.constant 0 : i32
    %c0_i32_1 = arith.constant 0 : i32
    return %c0_i32, %c0_i32_0 : i32, i32
  }
  func.func @transform_14(%arg0: i32, %arg1: i32) -> (i32, i32) {
    %c0_i32 = arith.constant 0 : i32
    %c0_i32_0 = arith.constant 0 : i32
    %c0_i32_1 = arith.constant 0 : i32
    return %c0_i32, %c0_i32_0 : i32, i32
  }
  func.func @transform_15(%arg0: i32, %arg1: i32) -> (i32, i32) {
    %c0_i32 = arith.constant 0 : i32
    %c0_i32_0 = arith.constant 0 : i32
    return %arg0, %c0_i32 : i32, i32
  }
}

</mosaic_0001>

<llo_original>
// kernel: face_recognizer_forward.1
$region0: #{face_recognizer_forward.1}
  #allocation0 [shape = 'u32[]', space=smem, size = 0x4, offset = 0x4, fixed_abs, tag = 'smem constant byte address 0x4 - core index']
  #allocation1 [shape = 'u32[144,128]{1,0:T(1,128)}', space=vmem, size = 0x12000, scoped, tag = 'internal scratch']
  #allocation2 [shape = 'f32[2,4,128]{2,1,0:T(4,128)}', space=vmem, size = 0x1000, scoped, tag = 'scratch operand']
  %s0 = inlined_call_operand.vmem [shape: bf16[2,4,256], index: 0, kind: input, shape index: {}]
  %s1 = inlined_call_operand.vmem [shape: f32[2,136], index: 1, kind: input, shape index: {}]
  %s2 = inlined_call_operand.vmem [shape: f32[4,1024], index: 2, kind: input, shape index: {}]
  %s3 = inlined_call_operand.vmem [shape: f32[1,1024], index: 3, kind: input, shape index: {}]
  %s4 = inlined_call_operand.hbm [shape: bf16[1024,512], index: 4, kind: input, shape index: {}]
  %s5 = inlined_call_operand.hbm [shape: bf16[136,512], index: 5, kind: input, shape index: {}]
  %s6 = inlined_call_operand.vmem [shape: f32[1,512], index: 6, kind: input, shape index: {}]
  %s7 = inlined_call_operand.hbm [shape: bf16[512,256], index: 7, kind: input, shape index: {}]
  %s8 = inlined_call_operand.vmem [shape: f32[1,256], index: 8, kind: input, shape index: {}]
  %s9 = inlined_call_operand.vmem [shape: bf16[256,128], index: 9, kind: input, shape index: {}]
  %s10 = inlined_call_operand.vmem [shape: f32[1,128], index: 10, kind: input, shape index: {}]
  %s11 = inlined_call_operand.vmem [shape: bf16[128,64], index: 11, kind: input, shape index: {}]
  %s12 = inlined_call_operand.vmem [shape: f32[1,64], index: 12, kind: input, shape index: {}]
  %s13 = inlined_call_operand.vmem [shape: bf16[64,128], index: 13, kind: input, shape index: {}]
  %s14 = inlined_call_operand.vmem [shape: f32[1,128], index: 14, kind: input, shape index: {}]
  %s15 = inlined_call_operand.hbm [shape: f32[2,128], index: 15, kind: output, shape index: {}]
  %s16 = sld [smem:[#allocation0]]
  $region90: #{face_recognizer_forward.1} parent=0
    _
  %s18 = ssub.s32 1, %s16
  %s19 = scalar_select 0, %s18, %s16
  $region1: #{face_recognizer_forward.1} parent=0
    #allocation3 [shape = 'u8[1048576]{0}', space=vmem, size = 0x100000, scoped, tag = 'input window, operand 4, single buffered']
    #allocation4 [shape = 's32[1]{0}', space=sflag, size = 0x4, scoped, tag = 'scoped memory for face_recognizer_forward.1']
    #allocation5 [shape = 's32[1]{0}', space=sflag, size = 0x4, scoped, tag = 'scoped memory for face_recognizer_forward.1']
    #allocation6 [shape = 'u8[139264]{0}', space=vmem, size = 0x22000, scoped, tag = 'input window, operand 5, single buffered']
    #allocation7 [shape = 's32[1]{0}', space=sflag, size = 0x4, scoped, tag = 'scoped memory for face_recognizer_forward.1']
    #allocation8 [shape = 'u8[262144]{0}', space=vmem, size = 0x40000, scoped, tag = 'input window, operand 7, single buffered']
    #allocation9 [shape = 'u8[1024]{0}', space=vmem, size = 0x400, scoped, tag = 'output window, operand 0, single buffered']
    %20 = vsyncpa [#allocation4], 0
    %21 = vsyncpa [#allocation7], 0
    %22 = vsyncpa [#allocation5], 0
    // Predicated region
    $region2: #{face_recognizer_forward.1} parent=1 // pred_check
      _
    $region3: #{face_recognizer_forward.1} parent=1 // pred_check_branch
      %24 = sbr.rel (0) target = $region5
    $region4: #{face_recognizer_forward.1} parent=1 // pred_region
      _
    $region5: #{face_recognizer_forward.1} parent=1 // pred_fallthru
      _
    // Predicated region
    $region6: #{face_recognizer_forward.1} parent=1 // pred_check
      _
    $region7: #{face_recognizer_forward.1} parent=1 // pred_check_branch
      %26 = sbr.rel (0) target = $region9
    $region8: #{face_recognizer_forward.1} parent=1 // pred_region
      _
    $region9: #{face_recognizer_forward.1} parent=1 // pred_fallthru
      _
    // Predicated region
    $region10: #{face_recognizer_forward.1} parent=1 // pred_check
      _
    $region11: #{face_recognizer_forward.1} parent=1 // pred_check_branch
      %28 = sbr.rel (0) target = $region13
    $region12: #{face_recognizer_forward.1} parent=1 // pred_region
      _
    $region13: #{face_recognizer_forward.1} parent=1 // pred_fallthru
      _
    // Predicated region
    $region14: #{face_recognizer_forward.1} parent=1 // pred_check
      _
    $region15: #{face_recognizer_forward.1} parent=1 // pred_check_branch
      %30 = sbr.rel (0) target = $region17
    $region16: #{face_recognizer_forward.1} parent=1 // pred_region
      _
    $region17: #{face_recognizer_forward.1} parent=1 // pred_fallthru
      _
    // Predicated region
    $region18: #{face_recognizer_forward.1} parent=1 // pred_check
      _
    $region19: #{face_recognizer_forward.1} parent=1 // pred_check_branch
      %32 = sbr.rel (0) target = $region21
    $region20: #{face_recognizer_forward.1} parent=1 // pred_region
      %s34 = ssub.s32 32768, 32768
      %35 = vsyncadd [#allocation4], %s34
      %s36 = sshll.u32 [#allocation3], 4
      %s37 = int_to_ptr.vmem [resolvable:$true] %s36
      %42 = dma.hbm_to_vmem [thread:$0]  %s4, 32768, %s37, [#allocation4], 256, 256, 16
    $region21: #{face_recognizer_forward.1} parent=1 // pred_fallthru
      _
    // Predicated region
    $region22: #{face_recognizer_forward.1} parent=1 // pred_check
      _
    $region23: #{face_recognizer_forward.1} parent=1 // pred_check_branch
      %44 = sbr.rel (0) target = $region25
    $region24: #{face_recognizer_forward.1} parent=1 // pred_region
      %s46 = ssub.s32 4352, 4352
      %47 = vsyncadd [#allocation7], %s46
      %s48 = sshll.u32 [#allocation6], 4
      %s49 = int_to_ptr.vmem [resolvable:$true] %s48
      %54 = dma.hbm_to_vmem [thread:$0]  %s5, 4352, %s49, [#allocation7], 256, 256, 16
    $region25: #{face_recognizer_forward.1} parent=1 // pred_fallthru
      _
    // Predicated region
    $region26: #{face_recognizer_forward.1} parent=1 // pred_check
      _
    $region27: #{face_recognizer_forward.1} parent=1 // pred_check_branch
      %56 = sbr.rel (0) target = $region29
    $region28: #{face_recognizer_forward.1} parent=1 // pred_region
      _
    $region29: #{face_recognizer_forward.1} parent=1 // pred_fallthru
      _
    // Predicated region
    $region30: #{face_recognizer_forward.1} parent=1 // pred_check
      _
    $region31: #{face_recognizer_forward.1} parent=1 // pred_check_branch
      %58 = sbr.rel (0) target = $region33
    $region32: #{face_recognizer_forward.1} parent=1 // pred_region
      %s60 = ssub.s32 8192, 8192
      %61 = vsyncadd [#allocation7], %s60
      %s62 = sshll.u32 [#allocation8], 4
      %s63 = int_to_ptr.vmem [resolvable:$true] %s62
      %68 = dma.hbm_to_vmem [thread:$0]  %s7, 8192, %s63, [#allocation7], 128, 128, 8
    $region33: #{face_recognizer_forward.1} parent=1 // pred_fallthru
      _
    // Predicated region
    $region34: #{face_recognizer_forward.1} parent=1 // pred_check
      _
    $region35: #{face_recognizer_forward.1} parent=1 // pred_check_branch
      %70 = sbr.rel (0) target = $region37
    $region36: #{face_recognizer_forward.1} parent=1 // pred_region
      _
    $region37: #{face_recognizer_forward.1} parent=1 // pred_fallthru
      _
    // Predicated region
    $region38: #{face_recognizer_forward.1} parent=1 // pred_check
      _
    $region39: #{face_recognizer_forward.1} parent=1 // pred_check_branch
      %72 = sbr.rel (0) target = $region41
    $region40: #{face_recognizer_forward.1} parent=1 // pred_region
      _
    $region41: #{face_recognizer_forward.1} parent=1 // pred_fallthru
      _
    // Predicated region
    $region42: #{face_recognizer_forward.1} parent=1 // pred_check
      _
    $region43: #{face_recognizer_forward.1} parent=1 // pred_check_branch
      %74 = sbr.rel (0) target = $region45
    $region44: #{face_recognizer_forward.1} parent=1 // pred_region
      _
    $region45: #{face_recognizer_forward.1} parent=1 // pred_fallthru
      _
    // Predicated region
    $region46: #{face_recognizer_forward.1} parent=1 // pred_check
      _
    $region47: #{face_recognizer_forward.1} parent=1 // pred_check_branch
      %76 = sbr.rel (0) target = $region49
    $region48: #{face_recognizer_forward.1} parent=1 // pred_region
      _
    $region49: #{face_recognizer_forward.1} parent=1 // pred_fallthru
      _
    // Predicated region
    $region50: #{face_recognizer_forward.1} parent=1 // pred_check
      _
    $region51: #{face_recognizer_forward.1} parent=1 // pred_check_branch
      %78 = sbr.rel (0) target = $region53
    $region52: #{face_recognizer_forward.1} parent=1 // pred_region
      _
    $region53: #{face_recognizer_forward.1} parent=1 // pred_fallthru
      _
    // Predicated region
    $region54: #{face_recognizer_forward.1} parent=1 // pred_check
      _
    $region55: #{face_recognizer_forward.1} parent=1 // pred_check_branch
      %80 = sbr.rel (0) target = $region57
    $region56: #{face_recognizer_forward.1} parent=1 // pred_region
      _
    $region57: #{face_recognizer_forward.1} parent=1 // pred_fallthru
      _
    // Predicated region
    $region58: #{face_recognizer_forward.1} parent=1 // pred_check
      _
    $region59: #{face_recognizer_forward.1} parent=1 // pred_check_branch
      %82 = sbr.rel (0) target = $region61
    $region60: #{face_recognizer_forward.1} parent=1 // pred_region
      _
    $region61: #{face_recognizer_forward.1} parent=1 // pred_fallthru
      _
    // Predicated region
    $region62: #{face_recognizer_forward.1} parent=1 // pred_check
      _
    $region63: #{face_recognizer_forward.1} parent=1 // pred_check_branch
      %84 = sbr.rel (0) target = $region65
    $region64: #{face_recognizer_forward.1} parent=1 // pred_region
      %85 = dma.done [#allocation4], 32768
    $region65: #{face_recognizer_forward.1} parent=1 // pred_fallthru
      _
    // Predicated region
    $region66: #{face_recognizer_forward.1} parent=1 // pred_check
      _
    $region67: #{face_recognizer_forward.1} parent=1 // pred_check_branch
      %87 = sbr.rel (0) target = $region69
    $region68: #{face_recognizer_forward.1} parent=1 // pred_region
      %88 = dma.done [#allocation7], 4352
    $region69: #{face_recognizer_forward.1} parent=1 // pred_fallthru
      _
    // Predicated region
    $region70: #{face_recognizer_forward.1} parent=1 // pred_check
      _
    $region71: #{face_recognizer_forward.1} parent=1 // pred_check_branch
      %90 = sbr.rel (0) target = $region73
    $region72: #{face_recognizer_forward.1} parent=1 // pred_region
      %91 = dma.done [#allocation7], 8192
    $region73: #{face_recognizer_forward.1} parent=1 // pred_fallthru
      _
    %p93 = scmp.eq.s32.totalorder 0, 0
    // Predicated region
    $region74: #{face_recognizer_forward.1} parent=1 // pred_check
      %p94 = pneg %p93
    $region75: #{face_recognizer_forward.1} parent=1 // pred_check_branch
      %96 = sbr.rel (%p94) target = $region77
    $region76: #{face_recognizer_forward.1} parent=1 // pred_region
      %97 = vst [vmem:[#allocation2] sm:$0xf] 0.0
      %98 = vst [vmem:[#allocation2 + $0x4] sm:$0xf] 0.0
    $region77: #{face_recognizer_forward.1} parent=1 // pred_fallthru
      _
    %v99 = vld [vmem:[%s0] sm:$0xf]
    %v100 = vld [vmem:[%s0 + $0x4] sm:$0xf]
    %v101 = vunpack.c.l.bf16 %v99
    %v102 = vunpack.c.l.bf16 %v100
    %v103 = vld [vmem:[#allocation2] sm:$0xf]
    %v104 = vld [vmem:[#allocation2 + $0x4] sm:$0xf]
    %v105 = vadd.f32 %v103, %v101
    %v106 = vadd.f32 %v104, %v102
    %v109 = vcombine.high %v101, %v101
    %v110 = vcombine.high %v102, %v102
    %v113 = vadd.f32 %v105, %v109
    %v114 = vadd.f32 %v106, %v110
    %115 = vst [vmem:[#allocation2] sm:$0xf] %v113
    %116 = vst [vmem:[#allocation2 + $0x4] sm:$0xf] %v114
    // Predicated region
    $region78: #{face_recognizer_forward.1} parent=1 // pred_check
      %p117 = pneg %p93
    $region79: #{face_recognizer_forward.1} parent=1 // pred_check_branch
      %119 = sbr.rel (%p117) target = $region81
    $region80: #{face_recognizer_forward.1} parent=1 // pred_region
      %v120 = vld [vmem:[#allocation2] sm:$0xf]
      %v121 = vld [vmem:[#allocation2 + $0x4] sm:$0xf]
      %vm122 = vcmask 1043456
      %v123 = vsel %vm122, %v120, 0.0
      %124 = vadd.xlane.f32.xlu0 %v123
      %v125 = vpop.xlane.xlu0 %124
      %v126 = vsel %vm122, %v121, 0.0
      %127 = vadd.xlane.f32.xlu0 %v126
      %v128 = vpop.xlane.xlu0 %127
      %v129 = vld [vmem:[%s2] sm:$0xff]
      %v130 = vld [vmem:[%s2 + $0x8] sm:$0xff]
      %v131 = vld [vmem:[%s2 + $0x10] sm:$0xff]
      %v132 = vld [vmem:[%s2 + $0x18] sm:$0xff]
      %v133 = vld [vmem:[%s3] sm:$0xff]
      %v135 = vlaneseq
      %v136 = vshrl.u32 %v135, 7
      %v137 = vsub.s32 0, %v136
      %v138 = vrot.slane %v133, %v137
      %v139 = vlaneseq
      %v140 = vshrl.u32 %v139, 7
      %v141 = vsub.s32 1, %v140
      %v142 = vrot.slane %v133, %v141
      %v143 = vlaneseq
      %v144 = vshrl.u32 %v143, 7
      %v145 = vsub.s32 2, %v144
      %v146 = vrot.slane %v133, %v145
      %v147 = vlaneseq
      %v148 = vshrl.u32 %v147, 7
      %v149 = vsub.s32 3, %v148
      %v150 = vrot.slane %v133, %v149
      %v151 = vlaneseq
      %v152 = vshrl.u32 %v151, 7
      %v153 = vsub.s32 4, %v152
      %v154 = vrot.slane %v133, %v153
      %v155 = vlaneseq
      %v156 = vshrl.u32 %v155, 7
      %v157 = vsub.s32 5, %v156
      %v158 = vrot.slane %v133, %v157
      %v159 = vlaneseq
      %v160 = vshrl.u32 %v159, 7
      %v161 = vsub.s32 6, %v160
      %v162 = vrot.slane %v133, %v161
      %v163 = vlaneseq
      %v164 = vshrl.u32 %v163, 7
      %v165 = vsub.s32 7, %v164
      %v166 = vrot.slane %v133, %v165
      %v177 = vlaneseq
      %v178 = vand.u32 %v177, 127
      %v179 = vlaneseq
      %v180 = vshrl.u32 %v179, 7
      %v181 = vsub.s32 %v178, %v180
      %v182 = vrot.slane %v125, %v181
      %v183 = vlaneseq
      %v184 = vshrl.u32 %v183, 7
      %v185 = vsub.s32 %v178, %v184
      %v186 = vrot.slane %v128, %v185
      %vm187 = vcmask 1041409
      %v188 = vsel %vm187, %v186, %v182
      %v193 = vcombine.high %v129, %v129
      %v194 = vcombine.high %v130, %v130
      %v195 = vcombine.high %v131, %v131
      %v196 = vcombine.high %v132, %v132
      %vm197 = vcmask 31744
      %v198 = vsel %vm197, %v188, 0
      %v200 = vsel %vm122, %v129, 0
      %v202 = vsel %vm122, %v193, 0
      %v204 = vsel %vm122, %v130, 0
      %v206 = vsel %vm122, %v194, 0
      %v208 = vsel %vm122, %v131, 0
      %v210 = vsel %vm122, %v195, 0
      %v212 = vsel %vm122, %v132, 0
      %v214 = vsel %vm122, %v196, 0
      %216 = vmatprep.subr.mxu0 %v202
      %217 = vmatpush1.msra.mxu0 %v200
      %218 = vmatprep.subr.mxu0 0.0
      %219 = vmatpush1.msra.mxu0 0.0
      %220 = vmatprep.subr.mxu0 0.0
      %221 = vmatpush1.msra.mxu0 0.0
      %222 = vmatprep.subr.mxu0 0.0
      %223 = vmatpush1.msra.mxu0 0.0
      %224 = vmatprep.subr.mxu0 0.0
      %225 = vmatpush1.msra.mxu0 0.0
      %226 = vmatprep.subr.mxu0 0.0
      %227 = vmatpush1.msra.mxu0 0.0
      %228 = vmatprep.subr.mxu0 0.0
      %229 = vmatpush1.msra.mxu0 0.0
      %230 = vmatprep.subr.mxu0 0.0
      %231 = vmatpush1.msra.mxu0 0.0
      %232 = vmatprep.subr.mxu0 0.0
      %233 = vmatpush1.msra.mxu0 0.0
      %234 = vmatprep.subr.mxu0 0.0
      %235 = vmatpush1.msra.mxu0 0.0
      %236 = vmatprep.subr.mxu0 0.0
      %237 = vmatpush1.msra.mxu0 0.0
      %238 = vmatprep.subr.mxu0 0.0
      %239 = vmatpush1.msra.mxu0 0.0
      %240 = vmatprep.subr.mxu0 0.0
      %241 = vmatpush1.msra.mxu0 0.0
      %242 = vmatprep.subr.mxu0 0.0
      %243 = vmatpush1.msra.mxu0 0.0
      %244 = vmatprep.subr.mxu0 0.0
      %245 = vmatpush1.msra.mxu0 0.0
      %246 = vmatprep.subr.mxu0 0.0
      %247 = vmatpush1.msra.mxu0 0.0
      %248 = vmatprep.subr.mxu0 0.0
      %249 = vmatpush1.msra.mxu0 0.0
      %250 = vmatprep.subr.mxu0 0.0
      %251 = vmatpush1.msra.mxu0 0.0
      %252 = vmatprep.subr.mxu0 0.0
      %253 = vmatpush1.msra.mxu0 0.0
      %254 = vmatprep.subr.mxu0 0.0
      %255 = vmatpush1.msra.mxu0 0.0
      %256 = vmatprep.subr.mxu0 0.0
      %257 = vmatpush1.msra.mxu0 0.0
      %258 = vmatprep.subr.mxu0 0.0
      %259 = vmatpush1.msra.mxu0 0.0
      %260 = vmatprep.subr.mxu0 0.0
      %261 = vmatpush1.msra.mxu0 0.0
      %262 = vmatprep.subr.mxu0 0.0
      %263 = vmatpush1.msra.mxu0 0.0
      %264 = vmatprep.subr.mxu0 0.0
      %265 = vmatpush1.msra.mxu0 0.0
      %266 = vmatprep.subr.mxu0 0.0
      %267 = vmatpush1.msra.mxu0 0.0
      %268 = vmatprep.subr.mxu0 0.0
      %269 = vmatpush1.msra.mxu0 0.0
      %270 = vmatprep.subr.mxu0 0.0
      %271 = vmatpush1.msra.mxu0 0.0
      %272 = vmatprep.subr.mxu0 0.0
      %273 = vmatpush1.msra.mxu0 0.0
      %274 = vmatprep.subr.mxu0 0.0
      %275 = vmatpush1.msra.mxu0 0.0
      %276 = vmatprep.subr.mxu0 0.0
      %277 = vmatpush1.msra.mxu0 0.0
      %278 = vmatprep.subr.mxu0 0.0
      %279 = vmatpush1.msra.mxu0 0.0
      %280 = vmatprep.mubr.f32.mxu0 0.0
      %281 = vmatmul.mubr.f32.gmra.mrb[0].mxu0 %v198
      %v282 = vpop.f32.mrb[0].mxu0
      %v283 = vadd.f32 %v138, %v282
      %v284 = vpop.f32.mrb[0].mxu0
      %v285 = vadd.f32 %v142, %v284
      %286 = vdwg.mxu0
      %287 = vmatprep.subr.mxu0 %v206
      %288 = vmatpush1.msra.mxu0 %v204
      %289 = vmatprep.subr.mxu0 0.0
      %290 = vmatpush1.msra.mxu0 0.0
      %291 = vmatprep.subr.mxu0 0.0
      %292 = vmatpush1.msra.mxu0 0.0
      %293 = vmatprep.subr.mxu0 0.0
      %294 = vmatpush1.msra.mxu0 0.0
      %295 = vmatprep.subr.mxu0 0.0
      %296 = vmatpush1.msra.mxu0 0.0
      %297 = vmatprep.subr.mxu0 0.0
      %298 = vmatpush1.msra.mxu0 0.0
      %299 = vmatprep.subr.mxu0 0.0
      %300 = vmatpush1.msra.mxu0 0.0
      %301 = vmatprep.subr.mxu0 0.0
      %302 = vmatpush1.msra.mxu0 0.0
      %303 = vmatprep.subr.mxu0 0.0
      %304 = vmatpush1.msra.mxu0 0.0
      %305 = vmatprep.subr.mxu0 0.0
      %306 = vmatpush1.msra.mxu0 0.0
      %307 = vmatprep.subr.mxu0 0.0
      %308 = vmatpush1.msra.mxu0 0.0
      %309 = vmatprep.subr.mxu0 0.0
      %310 = vmatpush1.msra.mxu0 0.0
      %311 = vmatprep.subr.mxu0 0.0
      %312 = vmatpush1.msra.mxu0 0.0
      %313 = vmatprep.subr.mxu0 0.0
      %314 = vmatpush1.msra.mxu0 0.0
      %315 = vmatprep.subr.mxu0 0.0
      %316 = vmatpush1.msra.mxu0 0.0
      %317 = vmatprep.subr.mxu0 0.0
      %318 = vmatpush1.msra.mxu0 0.0
      %319 = vmatprep.subr.mxu0 0.0
      %320 = vmatpush1.msra.mxu0 0.0
      %321 = vmatprep.subr.mxu0 0.0
      %322 = vmatpush1.msra.mxu0 0.0
      %323 = vmatprep.subr.mxu0 0.0
      %324 = vmatpush1.msra.mxu0 0.0
      %325 = vmatprep.subr.mxu0 0.0
      %326 = vmatpush1.msra.mxu0 0.0
      %327 = vmatprep.subr.mxu0 0.0
      %328 = vmatpush1.msra.mxu0 0.0
      %329 = vmatprep.subr.mxu0 0.0
      %330 = vmatpush1.msra.mxu0 0.0
      %331 = vmatprep.subr.mxu0 0.0
      %332 = vmatpush1.msra.mxu0 0.0
      %333 = vmatprep.subr.mxu0 0.0
      %334 = vmatpush1.msra.mxu0 0.0
      %335 = vmatprep.subr.mxu0 0.0
      %336 = vmatpush1.msra.mxu0 0.0
      %337 = vmatprep.subr.mxu0 0.0
      %338 = vmatpush1.msra.mxu0 0.0
      %339 = vmatprep.subr.mxu0 0.0
      %340 = vmatpush1.msra.mxu0 0.0
      %341 = vmatprep.subr.mxu0 0.0
      %342 = vmatpush1.msra.mxu0 0.0
      %343 = vmatprep.subr.mxu0 0.0
      %344 = vmatpush1.msra.mxu0 0.0
      %345 = vmatprep.subr.mxu0 0.0
      %346 = vmatpush1.msra.mxu0 0.0
      %347 = vmatprep.subr.mxu0 0.0
      %348 = vmatpush1.msra.mxu0 0.0
      %349 = vmatprep.subr.mxu0 0.0
      %350 = vmatpush1.msra.mxu0 0.0
      %351 = vmatprep.mubr.f32.mxu0 0.0
      %352 = vmatmul.mubr.f32.gmra.mrb[0].mxu0 %v198
      %v353 = vpop.f32.mrb[0].mxu0
      %v354 = vadd.f32 %v146, %v353
      %v355 = vpop.f32.mrb[0].mxu0
      %v356 = vadd.f32 %v150, %v355
      %357 = vdwg.mxu0
      %358 = vmatprep.subr.mxu0 %v210
      %359 = vmatpush1.msra.mxu0 %v208
      %360 = vmatprep.subr.mxu0 0.0
      %361 = vmatpush1.msra.mxu0 0.0
      %362 = vmatprep.subr.mxu0 0.0
      %363 = vmatpush1.msra.mxu0 0.0
      %364 = vmatprep.subr.mxu0 0.0
      %365 = vmatpush1.msra.mxu0 0.0
      %366 = vmatprep.subr.mxu0 0.0
      %367 = vmatpush1.msra.mxu0 0.0
      %368 = vmatprep.subr.mxu0 0.0
      %369 = vmatpush1.msra.mxu0 0.0
      %370 = vmatprep.subr.mxu0 0.0
      %371 = vmatpush1.msra.mxu0 0.0
      %372 = vmatprep.subr.mxu0 0.0
      %373 = vmatpush1.msra.mxu0 0.0
      %374 = vmatprep.subr.mxu0 0.0
      %375 = vmatpush1.msra.mxu0 0.0
      %376 = vmatprep.subr.mxu0 0.0
      %377 = vmatpush1.msra.mxu0 0.0
      %378 = vmatprep.subr.mxu0 0.0
      %379 = vmatpush1.msra.mxu0 0.0
      %380 = vmatprep.subr.mxu0 0.0
      %381 = vmatpush1.msra.mxu0 0.0
      %382 = vmatprep.subr.mxu0 0.0
      %383 = vmatpush1.msra.mxu0 0.0
      %384 = vmatprep.subr.mxu0 0.0
      %385 = vmatpush1.msra.mxu0 0.0
      %386 = vmatprep.subr.mxu0 0.0
      %387 = vmatpush1.msra.mxu0 0.0
      %388 = vmatprep.subr.mxu0 0.0
      %389 = vmatpush1.msra.mxu0 0.0
      %390 = vmatprep.subr.mxu0 0.0
      %391 = vmatpush1.msra.mxu0 0.0
      %392 = vmatprep.subr.mxu0 0.0
      %393 = vmatpush1.msra.mxu0 0.0
      %394 = vmatprep.subr.mxu0 0.0
      %395 = vmatpush1.msra.mxu0 0.0
      %396 = vmatprep.subr.mxu0 0.0
      %397 = vmatpush1.msra.mxu0 0.0
      %398 = vmatprep.subr.mxu0 0.0
      %399 = vmatpush1.msra.mxu0 0.0
      %400 = vmatprep.subr.mxu0 0.0
      %401 = vmatpush1.msra.mxu0 0.0
      %402 = vmatprep.subr.mxu0 0.0
      %403 = vmatpush1.msra.mxu0 0.0
      %404 = vmatprep.subr.mxu0 0.0
      %405 = vmatpush1.msra.mxu0 0.0
      %406 = vmatprep.subr.mxu0 0.0
      %407 = vmatpush1.msra.mxu0 0.0
      %408 = vmatprep.subr.mxu0 0.0
      %409 = vmatpush1.msra.mxu0 0.0
      %410 = vmatprep.subr.mxu0 0.0
      %411 = vmatpush1.msra.mxu0 0.0
      %412 = vmatprep.subr.mxu0 0.0
      %413 = vmatpush1.msra.mxu0 0.0
      %414 = vmatprep.subr.mxu0 0.0
      %415 = vmatpush1.msra.mxu0 0.0
      %416 = vmatprep.subr.mxu0 0.0
      %417 = vmatpush1.msra.mxu0 0.0
      %418 = vmatprep.subr.mxu0 0.0
      %419 = vmatpush1.msra.mxu0 0.0
      %420 = vmatprep.subr.mxu0 0.0
      %421 = vmatpush1.msra.mxu0 0.0
      %422 = vmatprep.mubr.f32.mxu0 0.0
      %423 = vmatmul.mubr.f32.gmra.mrb[0].mxu0 %v198
      %v424 = vpop.f32.mrb[0].mxu0
      %v425 = vadd.f32 %v154, %v424
      %v426 = vpop.f32.mrb[0].mxu0
      %v427 = vadd.f32 %v158, %v426
      %428 = vdwg.mxu0
      %429 = vmatprep.subr.mxu0 %v214
      %430 = vmatpush1.msra.mxu0 %v212
      %431 = vmatprep.subr.mxu0 0.0
      %432 = vmatpush1.msra.mxu0 0.0
      %433 = vmatprep.subr.mxu0 0.0
      %434 = vmatpush1.msra.mxu0 0.0
      %435 = vmatprep.subr.mxu0 0.0
      %436 = vmatpush1.msra.mxu0 0.0
      %437 = vmatprep.subr.mxu0 0.0
      %438 = vmatpush1.msra.mxu0 0.0
      %439 = vmatprep.subr.mxu0 0.0
      %440 = vmatpush1.msra.mxu0 0.0
      %441 = vmatprep.subr.mxu0 0.0
      %442 = vmatpush1.msra.mxu0 0.0
      %443 = vmatprep.subr.mxu0 0.0
      %444 = vmatpush1.msra.mxu0 0.0
      %445 = vmatprep.subr.mxu0 0.0
      %446 = vmatpush1.msra.mxu0 0.0
      %447 = vmatprep.subr.mxu0 0.0
      %448 = vmatpush1.msra.mxu0 0.0
      %449 = vmatprep.subr.mxu0 0.0
      %450 = vmatpush1.msra.mxu0 0.0
      %451 = vmatprep.subr.mxu0 0.0
      %452 = vmatpush1.msra.mxu0 0.0
      %453 = vmatprep.subr.mxu0 0.0
      %454 = vmatpush1.msra.mxu0 0.0
      %455 = vmatprep.subr.mxu0 0.0
      %456 = vmatpush1.msra.mxu0 0.0
      %457 = vmatprep.subr.mxu0 0.0
      %458 = vmatpush1.msra.mxu0 0.0
      %459 = vmatprep.subr.mxu0 0.0
      %460 = vmatpush1.msra.mxu0 0.0
      %461 = vmatprep.subr.mxu0 0.0
      %462 = vmatpush1.msra.mxu0 0.0
      %463 = vmatprep.subr.mxu0 0.0
      %464 = vmatpush1.msra.mxu0 0.0
      %465 = vmatprep.subr.mxu0 0.0
      %466 = vmatpush1.msra.mxu0 0.0
      %467 = vmatprep.subr.mxu0 0.0
      %468 = vmatpush1.msra.mxu0 0.0
      %469 = vmatprep.subr.mxu0 0.0
      %470 = vmatpush1.msra.mxu0 0.0
      %471 = vmatprep.subr.mxu0 0.0
      %472 = vmatpush1.msra.mxu0 0.0
      %473 = vmatprep.subr.mxu0 0.0
      %474 = vmatpush1.msra.mxu0 0.0
      %475 = vmatprep.subr.mxu0 0.0
      %476 = vmatpush1.msra.mxu0 0.0
      %477 = vmatprep.subr.mxu0 0.0
      %478 = vmatpush1.msra.mxu0 0.0
      %479 = vmatprep.subr.mxu0 0.0
      %480 = vmatpush1.msra.mxu0 0.0
      %481 = vmatprep.subr.mxu0 0.0
      %482 = vmatpush1.msra.mxu0 0.0
      %483 = vmatprep.subr.mxu0 0.0
      %484 = vmatpush1.msra.mxu0 0.0
      %485 = vmatprep.subr.mxu0 0.0
      %486 = vmatpush1.msra.mxu0 0.0
      %487 = vmatprep.subr.mxu0 0.0
      %488 = vmatpush1.msra.mxu0 0.0
      %489 = vmatprep.subr.mxu0 0.0
      %490 = vmatpush1.msra.mxu0 0.0
      %491 = vmatprep.subr.mxu0 0.0
      %492 = vmatpush1.msra.mxu0 0.0
      %493 = vmatprep.mubr.f32.mxu0 0.0
      %494 = vmatmul.mubr.f32.gmra.mrb[0].mxu0 %v198
      %v495 = vpop.f32.mrb[0].mxu0
      %v496 = vadd.f32 %v162, %v495
      %v497 = vpop.f32.mrb[0].mxu0
      %v498 = vadd.f32 %v166, %v497
      %499 = vdwg.mxu0
      %v500 = vmax.f32 %v283, 0.0
      %v501 = vmax.f32 %v285, 0.0
      %v502 = vmax.f32 %v354, 0.0
      %v503 = vmax.f32 %v356, 0.0
      %v504 = vmax.f32 %v425, 0.0
      %v505 = vmax.f32 %v427, 0.0
      %v506 = vmax.f32 %v496, 0.0
      %v507 = vmax.f32 %v498, 0.0
      %v508 = vpack.c.bf16 %v500, %v500
      %v509 = vpack.c.bf16 %v501, %v501
      %v510 = vpack.c.bf16 %v502, %v502
      %v511 = vpack.c.bf16 %v503, %v503
      %v512 = vpack.c.bf16 %v504, %v504
      %v513 = vpack.c.bf16 %v505, %v505
      %v514 = vpack.c.bf16 %v506, %v506
      %v515 = vpack.c.bf16 %v507, %v507
      %v516 = vld [vmem:[#allocation3] sm:$0xff]
      %v517 = vld [vmem:[#allocation3 + $0x8] sm:$0xff]
      %v518 = vld [vmem:[#allocation3 + $0x10] sm:$0xff]
      %v519 = vld [vmem:[#allocation3 + $0x18] sm:$0xff]
      %v520 = vld [vmem:[#allocation3 + $0x20] sm:$0xff]
      %v521 = vld [vmem:[#allocation3 + $0x28] sm:$0xff]
      %v522 = vld [vmem:[#allocation3 + $0x30] sm:$0xff]
      %v523 = vld [vmem:[#allocation3 + $0x38] sm:$0xff]
      %v524 = vld [vmem:[#allocation3 + $0x40] sm:$0xff]
      %v525 = vld [vmem:[#allocation3 + $0x48] sm:$0xff]
      %v526 = vld [vmem:[#allocation3 + $0x50] sm:$0xff]
      %v527 = vld [vmem:[#allocation3 + $0x58] sm:$0xff]
      %v528 = vld [vmem:[#allocation3 + $0x60] sm:$0xff]
      %v529 = vld [vmem:[#allocation3 + $0x68] sm:$0xff]
      %v530 = vld [vmem:[#allocation3 + $0x70] sm:$0xff]
      %v531 = vld [vmem:[#allocation3 + $0x78] sm:$0xff]
      %v532 = vld [vmem:[#allocation3 + $0x80] sm:$0xff]
      %v533 = vld [vmem:[#allocation3 + $0x88] sm:$0xff]
      %v534 = vld [vmem:[#allocation3 + $0x90] sm:$0xff]
      %v535 = vld [vmem:[#allocation3 + $0x98] sm:$0xff]
      %v536 = vld [vmem:[#allocation3 + $0xa0] sm:$0xff]
      %v537 = vld [vmem:[#allocation3 + $0xa8] sm:$0xff]
      %v538 = vld [vmem:[#allocation3 + $0xb0] sm:$0xff]
      %v539 = vld [vmem:[#allocation3 + $0xb8] sm:$0xff]
      %v540 = vld [vmem:[#allocation3 + $0xc0] sm:$0xff]
      %v541 = vld [vmem:[#allocation3 + $0xc8] sm:$0xff]
      %v542 = vld [vmem:[#allocation3 + $0xd0] sm:$0xff]
      %v543 = vld [vmem:[#allocation3 + $0xd8] sm:$0xff]
      %v544 = vld [vmem:[#allocation3 + $0xe0] sm:$0xff]
      %v545 = vld [vmem:[#allocation3 + $0xe8] sm:$0xff]
      %v546 = vld [vmem:[#allocation3 + $0xf0] sm:$0xff]
      %v547 = vld [vmem:[#allocation3 + $0xf8] sm:$0xff]
      %v548 = vld [vmem:[#allocation3 + $0x100] sm:$0xff]
      %v549 = vld [vmem:[#allocation3 + $0x108] sm:$0xff]
      %v550 = vld [vmem:[#allocation3 + $0x110] sm:$0xff]
      %v551 = vld [vmem:[#allocation3 + $0x118] sm:$0xff]
      %v552 = vld [vmem:[#allocation3 + $0x120] sm:$0xff]
      %v553 = vld [vmem:[#allocation3 + $0x128] sm:$0xff]
      %v554 = vld [vmem:[#allocation3 + $0x130] sm:$0xff]
      %v555 = vld [vmem:[#allocation3 + $0x138] sm:$0xff]
      %v556 = vld [vmem:[#allocation3 + $0x140] sm:$0xff]
      %v557 = vld [vmem:[#allocation3 + $0x148] sm:$0xff]
      %v558 = vld [vmem:[#allocation3 + $0x150] sm:$0xff]
      %v559 = vld [vmem:[#allocation3 + $0x158] sm:$0xff]
      %v560 = vld [vmem:[#allocation3 + $0x160] sm:$0xff]
      %v561 = vld [vmem:[#allocation3 + $0x168] sm:$0xff]
      %v562 = vld [vmem:[#allocation3 + $0x170] sm:$0xff]
      %v563 = vld [vmem:[#allocation3 + $0x178] sm:$0xff]
      %v564 = vld [vmem:[#allocation3 + $0x180] sm:$0xff]
      %v565 = vld [vmem:[#allocation3 + $0x188] sm:$0xff]
      %v566 = vld [vmem:[#allocation3 + $0x190] sm:$0xff]
      %v567 = vld [vmem:[#allocation3 + $0x198] sm:$0xff]
      %v568 = vld [vmem:[#allocation3 + $0x1a0] sm:$0xff]
      %v569 = vld [vmem:[#allocation3 + $0x1a8] sm:$0xff]
      %v570 = vld [vmem:[#allocation3 + $0x1b0] sm:$0xff]
      %v571 = vld [vmem:[#allocation3 + $0x1b8] sm:$0xff]
      %v572 = vld [vmem:[#allocation3 + $0x1c0] sm:$0xff]
      %v573 = vld [vmem:[#allocation3 + $0x1c8] sm:$0xff]
      %v574 = vld [vmem:[#allocation3 + $0x1d0] sm:$0xff]
      %v575 = vld [vmem:[#allocation3 + $0x1d8] sm:$0xff]
      %v576 = vld [vmem:[#allocation3 + $0x1e0] sm:$0xff]
      %v577 = vld [vmem:[#allocation3 + $0x1e8] sm:$0xff]
      %v578 = vld [vmem:[#allocation3 + $0x1f0] sm:$0xff]
      %v579 = vld [vmem:[#allocation3 + $0x1f8] sm:$0xff]
      %v580 = vld [vmem:[#allocation3 + $0x200] sm:$0xff]
      %v581 = vld [vmem:[#allocation3 + $0x208] sm:$0xff]
      %v582 = vld [vmem:[#allocation3 + $0x210] sm:$0xff]
      %v583 = vld [vmem:[#allocation3 + $0x218] sm:$0xff]
      %v584 = vld [vmem:[#allocation3 + $0x220] sm:$0xff]
      %v585 = vld [vmem:[#allocation3 + $0x228] sm:$0xff]
      %v586 = vld [vmem:[#allocation3 + $0x230] sm:$0xff]
      %v587 = vld [vmem:[#allocation3 + $0x238] sm:$0xff]
      %v588 = vld [vmem:[#allocation3 + $0x240] sm:$0xff]
      %v589 = vld [vmem:[#allocation3 + $0x248] sm:$0xff]
      %v590 = vld [vmem:[#allocation3 + $0x250] sm:$0xff]
      %v591 = vld [vmem:[#allocation3 + $0x258] sm:$0xff]
      %v592 = vld [vmem:[#allocation3 + $0x260] sm:$0xff]
      %v593 = vld [vmem:[#allocation3 + $0x268] sm:$0xff]
      %v594 = vld [vmem:[#allocation3 + $0x270] sm:$0xff]
      %v595 = vld [vmem:[#allocation3 + $0x278] sm:$0xff]
      %v596 = vld [vmem:[#allocation3 + $0x280] sm:$0xff]
      %v597 = vld [vmem:[#allocation3 + $0x288] sm:$0xff]
      %v598 = vld [vmem:[#allocation3 + $0x290] sm:$0xff]
      %v599 = vld [vmem:[#allocation3 + $0x298] sm:$0xff]
      %v600 = vld [vmem:[#allocation3 + $0x2a0] sm:$0xff]
      %v601 = vld [vmem:[#allocation3 + $0x2a8] sm:$0xff]
      %v602 = vld [vmem:[#allocation3 + $0x2b0] sm:$0xff]
      %v603 = vld [vmem:[#allocation3 + $0x2b8] sm:$0xff]
      %v604 = vld [vmem:[#allocation3 + $0x2c0] sm:$0xff]
      %v605 = vld [vmem:[#allocation3 + $0x2c8] sm:$0xff]
      %v606 = vld [vmem:[#allocation3 + $0x2d0] sm:$0xff]
      %v607 = vld [vmem:[#allocation3 + $0x2d8] sm:$0xff]
      %v608 = vld [vmem:[#allocation3 + $0x2e0] sm:$0xff]
      %v609 = vld [vmem:[#allocation3 + $0x2e8] sm:$0xff]
      %v610 = vld [vmem:[#allocation3 + $0x2f0] sm:$0xff]
      %v611 = vld [vmem:[#allocation3 + $0x2f8] sm:$0xff]
      %v612 = vld [vmem:[#allocation3 + $0x300] sm:$0xff]
      %v613 = vld [vmem:[#allocation3 + $0x308] sm:$0xff]
      %v614 = vld [vmem:[#allocation3 + $0x310] sm:$0xff]
      %v615 = vld [vmem:[#allocation3 + $0x318] sm:$0xff]
      %v616 = vld [vmem:[#allocation3 + $0x320] sm:$0xff]
      %v617 = vld [vmem:[#allocation3 + $0x328] sm:$0xff]
      %v618 = vld [vmem:[#allocation3 + $0x330] sm:$0xff]
      %v619 = vld [vmem:[#allocation3 + $0x338] sm:$0xff]
      %v620 = vld [vmem:[#allocation3 + $0x340] sm:$0xff]
      %v621 = vld [vmem:[#allocation3 + $0x348] sm:$0xff]
      %v622 = vld [vmem:[#allocation3 + $0x350] sm:$0xff]
      %v623 = vld [vmem:[#allocation3 + $0x358] sm:$0xff]
      %v624 = vld [vmem:[#allocation3 + $0x360] sm:$0xff]
      %v625 = vld [vmem:[#allocation3 + $0x368] sm:$0xff]
      %v626 = vld [vmem:[#allocation3 + $0x370] sm:$0xff]
      %v627 = vld [vmem:[#allocation3 + $0x378] sm:$0xff]
      %v628 = vld [vmem:[#allocation3 + $0x380] sm:$0xff]
      %v629 = vld [vmem:[#allocation3 + $0x388] sm:$0xff]
      %v630 = vld [vmem:[#allocation3 + $0x390] sm:$0xff]
      %v631 = vld [vmem:[#allocation3 + $0x398] sm:$0xff]
      %v632 = vld [vmem:[#allocation3 + $0x3a0] sm:$0xff]
      %v633 = vld [vmem:[#allocation3 + $0x3a8] sm:$0xff]
      %v634 = vld [vmem:[#allocation3 + $0x3b0] sm:$0xff]
      %v635 = vld [vmem:[#allocation3 + $0x3b8] sm:$0xff]
      %v636 = vld [vmem:[#allocation3 + $0x3c0] sm:$0xff]
      %v637 = vld [vmem:[#allocation3 + $0x3c8] sm:$0xff]
      %v638 = vld [vmem:[#allocation3 + $0x3d0] sm:$0xff]
      %v639 = vld [vmem:[#allocation3 + $0x3d8] sm:$0xff]
      %v640 = vld [vmem:[#allocation3 + $0x3e0] sm:$0xff]
      %v641 = vld [vmem:[#allocation3 + $0x3e8] sm:$0xff]
      %v642 = vld [vmem:[#allocation3 + $0x3f0] sm:$0xff]
      %v643 = vld [vmem:[#allocation3 + $0x3f8] sm:$0xff]
      %v644 = vld [vmem:[#allocation3 + $0x400] sm:$0xff]
      %v645 = vld [vmem:[#allocation3 + $0x408] sm:$0xff]
      %v646 = vld [vmem:[#allocation3 + $0x410] sm:$0xff]
      %v647 = vld [vmem:[#allocation3 + $0x418] sm:$0xff]
      %v648 = vld [vmem:[#allocation3 + $0x420] sm:$0xff]
      %v649 = vld [vmem:[#allocation3 + $0x428] sm:$0xff]
      %v650 = vld [vmem:[#allocation3 + $0x430] sm:$0xff]
      %v651 = vld [vmem:[#allocation3 + $0x438] sm:$0xff]
      %v652 = vld [vmem:[#allocation3 + $0x440] sm:$0xff]
      %v653 = vld [vmem:[#allocation3 + $0x448] sm:$0xff]
      %v654 = vld [vmem:[#allocation3 + $0x450] sm:$0xff]
      %v655 = vld [vmem:[#allocation3 + $0x458] sm:$0xff]
      %v656 = vld [vmem:[#allocation3 + $0x460] sm:$0xff]
      %v657 = vld [vmem:[#allocation3 + $0x468] sm:$0xff]
      %v658 = vld [vmem:[#allocation3 + $0x470] sm:$0xff]
      %v659 = vld [vmem:[#allocation3 + $0x478] sm:$0xff]
      %v660 = vld [vmem:[#allocation3 + $0x480] sm:$0xff]
      %v661 = vld [vmem:[#allocation3 + $0x488] sm:$0xff]
      %v662 = vld [vmem:[#allocation3 + $0x490] sm:$0xff]
      %v663 = vld [vmem:[#allocation3 + $0x498] sm:$0xff]
      %v664 = vld [vmem:[#allocation3 + $0x4a0] sm:$0xff]
      %v665 = vld [vmem:[#allocation3 + $0x4a8] sm:$0xff]
      %v666 = vld [vmem:[#allocation3 + $0x4b0] sm:$0xff]
      %v667 = vld [vmem:[#allocation3 + $0x4b8] sm:$0xff]
      %v668 = vld [vmem:[#allocation3 + $0x4c0] sm:$0xff]
      %v669 = vld [vmem:[#allocation3 + $0x4c8] sm:$0xff]
      %v670 = vld [vmem:[#allocation3 + $0x4d0] sm:$0xff]
      %v671 = vld [vmem:[#allocation3 + $0x4d8] sm:$0xff]
      %v672 = vld [vmem:[#allocation3 + $0x4e0] sm:$0xff]
      %v673 = vld [vmem:[#allocation3 + $0x4e8] sm:$0xff]
      %v674 = vld [vmem:[#allocation3 + $0x4f0] sm:$0xff]
      %v675 = vld [vmem:[#allocation3 + $0x4f8] sm:$0xff]
      %v676 = vld [vmem:[#allocation3 + $0x500] sm:$0xff]
      %v677 = vld [vmem:[#allocation3 + $0x508] sm:$0xff]
      %v678 = vld [vmem:[#allocation3 + $0x510] sm:$0xff]
      %v679 = vld [vmem:[#allocation3 + $0x518] sm:$0xff]
      %v680 = vld [vmem:[#allocation3 + $0x520] sm:$0xff]
      %v681 = vld [vmem:[#allocation3 + $0x528] sm:$0xff]
      %v682 = vld [vmem:[#allocation3 + $0x530] sm:$0xff]
      %v683 = vld [vmem:[#allocation3 + $0x538] sm:$0xff]
      %v684 = vld [vmem:[#allocation3 + $0x540] sm:$0xff]
      %v685 = vld [vmem:[#allocation3 + $0x548] sm:$0xff]
      %v686 = vld [vmem:[#allocation3 + $0x550] sm:$0xff]
      %v687 = vld [vmem:[#allocation3 + $0x558] sm:$0xff]
      %v688 = vld [vmem:[#allocation3 + $0x560] sm:$0xff]
      %v689 = vld [vmem:[#allocation3 + $0x568] sm:$0xff]
      %v690 = vld [vmem:[#allocation3 + $0x570] sm:$0xff]
      %v691 = vld [vmem:[#allocation3 + $0x578] sm:$0xff]
      %v692 = vld [vmem:[#allocation3 + $0x580] sm:$0xff]
      %v693 = vld [vmem:[#allocation3 + $0x588] sm:$0xff]
      %v694 = vld [vmem:[#allocation3 + $0x590] sm:$0xff]
      %v695 = vld [vmem:[#allocation3 + $0x598] sm:$0xff]
      %v696 = vld [vmem:[#allocation3 + $0x5a0] sm:$0xff]
      %v697 = vld [vmem:[#allocation3 + $0x5a8] sm:$0xff]
      %v698 = vld [vmem:[#allocation3 + $0x5b0] sm:$0xff]
      %v699 = vld [vmem:[#allocation3 + $0x5b8] sm:$0xff]
      %v700 = vld [vmem:[#allocation3 + $0x5c0] sm:$0xff]
      %v701 = vld [vmem:[#allocation3 + $0x5c8] sm:$0xff]
      %v702 = vld [vmem:[#allocation3 + $0x5d0] sm:$0xff]
      %v703 = vld [vmem:[#allocation3 + $0x5d8] sm:$0xff]
      %v704 = vld [vmem:[#allocation3 + $0x5e0] sm:$0xff]
      %v705 = vld [vmem:[#allocation3 + $0x5e8] sm:$0xff]
      %v706 = vld [vmem:[#allocation3 + $0x5f0] sm:$0xff]
      %v707 = vld [vmem:[#allocation3 + $0x5f8] sm:$0xff]
      %v708 = vld [vmem:[#allocation3 + $0x600] sm:$0xff]
      %v709 = vld [vmem:[#allocation3 + $0x608] sm:$0xff]
      %v710 = vld [vmem:[#allocation3 + $0x610] sm:$0xff]
      %v711 = vld [vmem:[#allocation3 + $0x618] sm:$0xff]
      %v712 = vld [vmem:[#allocation3 + $0x620] sm:$0xff]
      %v713 = vld [vmem:[#allocation3 + $0x628] sm:$0xff]
      %v714 = vld [vmem:[#allocation3 + $0x630] sm:$0xff]
      %v715 = vld [vmem:[#allocation3 + $0x638] sm:$0xff]
      %v716 = vld [vmem:[#allocation3 + $0x640] sm:$0xff]
      %v717 = vld [vmem:[#allocation3 + $0x648] sm:$0xff]
      %v718 = vld [vmem:[#allocation3 + $0x650] sm:$0xff]
      %v719 = vld [vmem:[#allocation3 + $0x658] sm:$0xff]
      %v720 = vld [vmem:[#allocation3 + $0x660] sm:$0xff]
      %v721 = vld [vmem:[#allocation3 + $0x668] sm:$0xff]
      %v722 = vld [vmem:[#allocation3 + $0x670] sm:$0xff]
      %v723 = vld [vmem:[#allocation3 + $0x678] sm:$0xff]
      %v724 = vld [vmem:[#allocation3 + $0x680] sm:$0xff]
      %v725 = vld [vmem:[#allocation3 + $0x688] sm:$0xff]
      %v726 = vld [vmem:[#allocation3 + $0x690] sm:$0xff]
      %v727 = vld [vmem:[#allocation3 + $0x698] sm:$0xff]
      %v728 = vld [vmem:[#allocation3 + $0x6a0] sm:$0xff]
      %v729 = vld [vmem:[#allocation3 + $0x6a8] sm:$0xff]
      %v730 = vld [vmem:[#allocation3 + $0x6b0] sm:$0xff]
      %v731 = vld [vmem:[#allocation3 + $0x6b8] sm:$0xff]
      %v732 = vld [vmem:[#allocation3 + $0x6c0] sm:$0xff]
      %v733 = vld [vmem:[#allocation3 + $0x6c8] sm:$0xff]
      %v734 = vld [vmem:[#allocation3 + $0x6d0] sm:$0xff]
      %v735 = vld [vmem:[#allocation3 + $0x6d8] sm:$0xff]
      %v736 = vld [vmem:[#allocation3 + $0x6e0] sm:$0xff]
      %v737 = vld [vmem:[#allocation3 + $0x6e8] sm:$0xff]
      %v738 = vld [vmem:[#allocation3 + $0x6f0] sm:$0xff]
      %v739 = vld [vmem:[#allocation3 + $0x6f8] sm:$0xff]
      %v740 = vld [vmem:[#allocation3 + $0x700] sm:$0xff]
      %v741 = vld [vmem:[#allocation3 + $0x708] sm:$0xff]
      %v742 = vld [vmem:[#allocation3 + $0x710] sm:$0xff]
      %v743 = vld [vmem:[#allocation3 + $0x718] sm:$0xff]
      %v744 = vld [vmem:[#allocation3 + $0x720] sm:$0xff]
      %v745 = vld [vmem:[#allocation3 + $0x728] sm:$0xff]
      %v746 = vld [vmem:[#allocation3 + $0x730] sm:$0xff]
      %v747 = vld [vmem:[#allocation3 + $0x738] sm:$0xff]
      %v748 = vld [vmem:[#allocation3 + $0x740] sm:$0xff]
      %v749 = vld [vmem:[#allocation3 + $0x748] sm:$0xff]
      %v750 = vld [vmem:[#allocation3 + $0x750] sm:$0xff]
      %v751 = vld [vmem:[#allocation3 + $0x758] sm:$0xff]
      %v752 = vld [vmem:[#allocation3 + $0x760] sm:$0xff]
      %v753 = vld [vmem:[#allocation3 + $0x768] sm:$0xff]
      %v754 = vld [vmem:[#allocation3 + $0x770] sm:$0xff]
      %v755 = vld [vmem:[#allocation3 + $0x778] sm:$0xff]
      %v756 = vld [vmem:[#allocation3 + $0x780] sm:$0xff]
      %v757 = vld [vmem:[#allocation3 + $0x788] sm:$0xff]
      %v758 = vld [vmem:[#allocation3 + $0x790] sm:$0xff]
      %v759 = vld [vmem:[#allocation3 + $0x798] sm:$0xff]
      %v760 = vld [vmem:[#allocation3 + $0x7a0] sm:$0xff]
      %v761 = vld [vmem:[#allocation3 + $0x7a8] sm:$0xff]
      %v762 = vld [vmem:[#allocation3 + $0x7b0] sm:$0xff]
      %v763 = vld [vmem:[#allocation3 + $0x7b8] sm:$0xff]
      %v764 = vld [vmem:[#allocation3 + $0x7c0] sm:$0xff]
      %v765 = vld [vmem:[#allocation3 + $0x7c8] sm:$0xff]
      %v766 = vld [vmem:[#allocation3 + $0x7d0] sm:$0xff]
      %v767 = vld [vmem:[#allocation3 + $0x7d8] sm:$0xff]
      %v768 = vld [vmem:[#allocation3 + $0x7e0] sm:$0xff]
      %v769 = vld [vmem:[#allocation3 + $0x7e8] sm:$0xff]
      %v770 = vld [vmem:[#allocation3 + $0x7f0] sm:$0xff]
      %v771 = vld [vmem:[#allocation3 + $0x7f8] sm:$0xff]
      %v772 = vld [vmem:[%s1] sm:$0xf]
      %v775 = vunpack.c.l.s4 1983009808
      %v776 = vunpack.c.0.s8 %v775
      %v777 = vlaneseq
      %v778 = vshrl.u32 %v777, 7
      %v779 = vsub.s32 %v776, %v778
      %v780 = vrot.slane %v772, %v779
      %v781 = vcombine.high %v780, %v780
      %v784 = vpack.c.bf16 %v780, %v780
      %v785 = vpack.c.bf16 %v781, %v781
      %v786 = vld [vmem:[#allocation6] sm:$0xff]
      %v787 = vld [vmem:[#allocation6 + $0x8] sm:$0xff]
      %v788 = vld [vmem:[#allocation6 + $0x10] sm:$0xff]
      %v789 = vld [vmem:[#allocation6 + $0x18] sm:$0xff]
      %v790 = vld [vmem:[#allocation6 + $0x20] sm:$0xff]
      %v791 = vld [vmem:[#allocation6 + $0x28] sm:$0xff]
      %v792 = vld [vmem:[#allocation6 + $0x30] sm:$0xff]
      %v793 = vld [vmem:[#allocation6 + $0x38] sm:$0xff]
      %v794 = vld [vmem:[#allocation6 + $0x40] sm:$0xff]
      %v795 = vld [vmem:[#allocation6 + $0x48] sm:$0xff]
      %v796 = vld [vmem:[#allocation6 + $0x50] sm:$0xff]
      %v797 = vld [vmem:[#allocation6 + $0x58] sm:$0xff]
      %v798 = vld [vmem:[#allocation6 + $0x60] sm:$0xff]
      %v799 = vld [vmem:[#allocation6 + $0x68] sm:$0xff]
      %v800 = vld [vmem:[#allocation6 + $0x70] sm:$0xff]
      %v801 = vld [vmem:[#allocation6 + $0x78] sm:$0xff]
      %v802 = vld [vmem:[#allocation6 + $0x80] sm:$0xff]
      %v803 = vld [vmem:[#allocation6 + $0x88] sm:$0xff]
      %v804 = vld [vmem:[#allocation6 + $0x90] sm:$0xff]
      %v805 = vld [vmem:[#allocation6 + $0x98] sm:$0xff]
      %v806 = vld [vmem:[#allocation6 + $0xa0] sm:$0xff]
      %v807 = vld [vmem:[#allocation6 + $0xa8] sm:$0xff]
      %v808 = vld [vmem:[#allocation6 + $0xb0] sm:$0xff]
      %v809 = vld [vmem:[#allocation6 + $0xb8] sm:$0xff]
      %v810 = vld [vmem:[#allocation6 + $0xc0] sm:$0xff]
      %v811 = vld [vmem:[#allocation6 + $0xc8] sm:$0xff]
      %v812 = vld [vmem:[#allocation6 + $0xd0] sm:$0xff]
      %v813 = vld [vmem:[#allocation6 + $0xd8] sm:$0xff]
      %v814 = vld [vmem:[#allocation6 + $0xe0] sm:$0xff]
      %v815 = vld [vmem:[#allocation6 + $0xe8] sm:$0xff]
      %v816 = vld [vmem:[#allocation6 + $0xf0] sm:$0xff]
      %v817 = vld [vmem:[#allocation6 + $0xf8] sm:$0xff]
      %v818 = vld [vmem:[#allocation6 + $0x100] sm:$0xff]
      %v819 = vld [vmem:[#allocation6 + $0x108] sm:$0xff]
      %v854 = vunpack.c.l.b16 %v786
      %v855 = vunpack.c.h.b16 %v786
      %v856 = vunpack.c.l.b16 %v787
      %v857 = vunpack.c.h.b16 %v787
      %v858 = vunpack.c.l.b16 %v788
      %v859 = vunpack.c.h.b16 %v788
      %v860 = vunpack.c.l.b16 %v789
      %v861 = vunpack.c.h.b16 %v789
      %v862 = vunpack.c.l.b16 %v790
      %v863 = vunpack.c.h.b16 %v790
      %v864 = vunpack.c.l.b16 %v791
      %v865 = vunpack.c.h.b16 %v791
      %v866 = vunpack.c.l.b16 %v792
      %v867 = vunpack.c.h.b16 %v792
      %v868 = vunpack.c.l.b16 %v793
      %v869 = vunpack.c.h.b16 %v793
      %v870 = vunpack.c.l.b16 %v794
      %v871 = vunpack.c.h.b16 %v794
      %v872 = vunpack.c.l.b16 %v795
      %v873 = vunpack.c.h.b16 %v795
      %v874 = vunpack.c.l.b16 %v796
      %v875 = vunpack.c.h.b16 %v796
      %v876 = vunpack.c.l.b16 %v797
      %v877 = vunpack.c.h.b16 %v797
      %v878 = vunpack.c.l.b16 %v798
      %v879 = vunpack.c.h.b16 %v798
      %v880 = vunpack.c.l.b16 %v799
      %v881 = vunpack.c.h.b16 %v799
      %v882 = vunpack.c.l.b16 %v800
      %v883 = vunpack.c.h.b16 %v800
      %v884 = vunpack.c.l.b16 %v801
      %v885 = vunpack.c.h.b16 %v801
      %v886 = vunpack.c.l.b16 %v802
      %v887 = vunpack.c.h.b16 %v802
      %v888 = vunpack.c.l.b16 %v803
      %v889 = vunpack.c.h.b16 %v803
      %v890 = vunpack.c.l.b16 %v804
      %v891 = vunpack.c.h.b16 %v804
      %v892 = vunpack.c.l.b16 %v805
      %v893 = vunpack.c.h.b16 %v805
      %v894 = vunpack.c.l.b16 %v806
      %v895 = vunpack.c.h.b16 %v806
      %v896 = vunpack.c.l.b16 %v807
      %v897 = vunpack.c.h.b16 %v807
      %v898 = vunpack.c.l.b16 %v808
      %v899 = vunpack.c.h.b16 %v808
      %v900 = vunpack.c.l.b16 %v809
      %v901 = vunpack.c.h.b16 %v809
      %v902 = vunpack.c.l.b16 %v810
      %v903 = vunpack.c.h.b16 %v810
      %v904 = vunpack.c.l.b16 %v811
      %v905 = vunpack.c.h.b16 %v811
      %v906 = vunpack.c.l.b16 %v812
      %v907 = vunpack.c.h.b16 %v812
      %v908 = vunpack.c.l.b16 %v813
      %v909 = vunpack.c.h.b16 %v813
      %v910 = vunpack.c.l.b16 %v814
      %v911 = vunpack.c.h.b16 %v814
      %v912 = vunpack.c.l.b16 %v815
      %v913 = vunpack.c.h.b16 %v815
      %v914 = vunpack.c.l.b16 %v816
      %v915 = vunpack.c.h.b16 %v816
      %v916 = vunpack.c.l.b16 %v817
      %v917 = vunpack.c.h.b16 %v817
      %v918 = vunpack.c.l.b16 %v818
      %v919 = vunpack.c.h.b16 %v818
      %v920 = vunpack.c.l.b16 %v819
      %v921 = vunpack.c.h.b16 %v819
      %v922 = vpack.c.b16 %v858, %v854
      %v923 = vpack.c.b16 %v859, %v855
      %v924 = vpack.c.b16 %v860, %v856
      %v925 = vpack.c.b16 %v861, %v857
      %v926 = vpack.c.b16 %v866, %v862
      %v927 = vpack.c.b16 %v867, %v863
      %v928 = vpack.c.b16 %v868, %v864
      %v929 = vpack.c.b16 %v869, %v865
      %v930 = vpack.c.b16 %v874, %v870
      %v931 = vpack.c.b16 %v875, %v871
      %v932 = vpack.c.b16 %v876, %v872
      %v933 = vpack.c.b16 %v877, %v873
      %v934 = vpack.c.b16 %v882, %v878
      %v935 = vpack.c.b16 %v883, %v879
      %v936 = vpack.c.b16 %v884, %v880
      %v937 = vpack.c.b16 %v885, %v881
      %v938 = vpack.c.b16 %v890, %v886
      %v939 = vpack.c.b16 %v891, %v887
      %v940 = vpack.c.b16 %v892, %v888
      %v941 = vpack.c.b16 %v893, %v889
      %v942 = vpack.c.b16 %v898, %v894
      %v943 = vpack.c.b16 %v899, %v895
      %v944 = vpack.c.b16 %v900, %v896
      %v945 = vpack.c.b16 %v901, %v897
      %v946 = vpack.c.b16 %v906, %v902
      %v947 = vpack.c.b16 %v907, %v903
      %v948 = vpack.c.b16 %v908, %v904
      %v949 = vpack.c.b16 %v909, %v905
      %v950 = vpack.c.b16 %v914, %v910
      %v951 = vpack.c.b16 %v915, %v911
      %v952 = vpack.c.b16 %v916, %v912
      %v953 = vpack.c.b16 %v917, %v913
      %v954 = vpack.c.b16 %v918, %v918
      %v955 = vpack.c.b16 %v919, %v919
      %v956 = vpack.c.b16 %v920, %v920
      %v957 = vpack.c.b16 %v921, %v921
      %vm990 = vcmask 64512
      %v992 = vsel %vm990, %v785, 0
      %v995 = vsel %vm122, %v954, 0
      %v998 = vsel %vm122, %v955, 0
      %v1001 = vsel %vm122, %v956, 0
      %v1004 = vsel %vm122, %v957, 0
      %1006 = vmatprep.subr.bf16.mxu0 %v923
      %1007 = vmatpush1.bf16.msra.mxu0 %v922
      %1008 = vmatprep.subr.bf16.mxu0 %v927
      %1009 = vmatpush1.bf16.msra.mxu0 %v926
      %1010 = vmatprep.subr.bf16.mxu0 %v931
      %1011 = vmatpush1.bf16.msra.mxu0 %v930
      %1012 = vmatprep.subr.bf16.mxu0 %v935
      %1013 = vmatpush1.bf16.msra.mxu0 %v934
      %1014 = vmatprep.subr.bf16.mxu0 %v939
      %1015 = vmatpush1.bf16.msra.mxu0 %v938
      %1016 = vmatprep.subr.bf16.mxu0 %v943
      %1017 = vmatpush1.bf16.msra.mxu0 %v942
      %1018 = vmatprep.subr.bf16.mxu0 %v947
      %1019 = vmatpush1.bf16.msra.mxu0 %v946
      %1020 = vmatprep.subr.bf16.mxu0 %v951
      %1021 = vmatpush1.bf16.msra.mxu0 %v950
      %1022 = vmatprep.subr.bf16.mxu0 %v998
      %1023 = vmatpush1.bf16.msra.mxu0 %v995
      %1024 = vmatprep.subr.bf16.mxu0 0
      %1025 = vmatpush1.bf16.msra.mxu0 0
      %1026 = vmatprep.subr.bf16.mxu0 0
      %1027 = vmatpush1.bf16.msra.mxu0 0
      %1028 = vmatprep.subr.bf16.mxu0 0
      %1029 = vmatpush1.bf16.msra.mxu0 0
      %1030 = vmatprep.subr.bf16.mxu0 0
      %1031 = vmatpush1.bf16.msra.mxu0 0
      %1032 = vmatprep.subr.bf16.mxu0 0
      %1033 = vmatpush1.bf16.msra.mxu0 0
      %1034 = vmatprep.subr.bf16.mxu0 0
      %1035 = vmatpush1.bf16.msra.mxu0 0
      %1036 = vmatprep.subr.bf16.mxu0 0
      %1037 = vmatpush1.bf16.msra.mxu0 0
      %1038 = vmatprep.mubr.bf16.mxu0 %v992
      %1039 = vmatmul.mubr.bf16.gmra.mrb[0].mxu0 %v784
      %v1040 = vpop.f32.mrb[0].mxu0
      %v1041 = vadd.f32 0.0, %v1040
      %v1042 = vpop.f32.mrb[0].mxu0
      %v1043 = vadd.f32 0.0, %v1042
      %v1044 = vpop.f32.mrb[0].mxu0
      %v1045 = vpop.f32.mrb[0].mxu0
      %1046 = vdwg.mxu0
      %1047 = vmatprep.subr.bf16.mxu0 %v925
      %1048 = vmatpush1.bf16.msra.mxu0 %v924
      %1049 = vmatprep.subr.bf16.mxu0 %v929
      %1050 = vmatpush1.bf16.msra.mxu0 %v928
      %1051 = vmatprep.subr.bf16.mxu0 %v933
      %1052 = vmatpush1.bf16.msra.mxu0 %v932
      %1053 = vmatprep.subr.bf16.mxu0 %v937
      %1054 = vmatpush1.bf16.msra.mxu0 %v936
      %1055 = vmatprep.subr.bf16.mxu0 %v941
      %1056 = vmatpush1.bf16.msra.mxu0 %v940
      %1057 = vmatprep.subr.bf16.mxu0 %v945
      %1058 = vmatpush1.bf16.msra.mxu0 %v944
      %1059 = vmatprep.subr.bf16.mxu0 %v949
      %1060 = vmatpush1.bf16.msra.mxu0 %v948
      %1061 = vmatprep.subr.bf16.mxu0 %v953
      %1062 = vmatpush1.bf16.msra.mxu0 %v952
      %1063 = vmatprep.subr.bf16.mxu0 %v1004
      %1064 = vmatpush1.bf16.msra.mxu0 %v1001
      %1065 = vmatprep.subr.bf16.mxu0 0
      %1066 = vmatpush1.bf16.msra.mxu0 0
      %1067 = vmatprep.subr.bf16.mxu0 0
      %1068 = vmatpush1.bf16.msra.mxu0 0
      %1069 = vmatprep.subr.bf16.mxu0 0
      %1070 = vmatpush1.bf16.msra.mxu0 0
      %1071 = vmatprep.subr.bf16.mxu0 0
      %1072 = vmatpush1.bf16.msra.mxu0 0
      %1073 = vmatprep.subr.bf16.mxu0 0
      %1074 = vmatpush1.bf16.msra.mxu0 0
      %1075 = vmatprep.subr.bf16.mxu0 0
      %1076 = vmatpush1.bf16.msra.mxu0 0
      %1077 = vmatprep.subr.bf16.mxu0 0
      %1078 = vmatpush1.bf16.msra.mxu0 0
      %1079 = vmatprep.mubr.bf16.mxu0 %v992
      %1080 = vmatmul.mubr.bf16.gmra.mrb[0].mxu0 %v784
      %v1081 = vpop.f32.mrb[0].mxu0
      %v1082 = vadd.f32 0.0, %v1081
      %v1083 = vpop.f32.mrb[0].mxu0
      %v1084 = vadd.f32 0.0, %v1083
      %v1085 = vpop.f32.mrb[0].mxu0
      %v1086 = vpop.f32.mrb[0].mxu0
      %1087 = vdwg.mxu0
      %v1344 = vunpack.c.l.b16 %v516
      %v1345 = vunpack.c.h.b16 %v516
      %v1346 = vunpack.c.l.b16 %v517
      %v1347 = vunpack.c.h.b16 %v517
      %v1348 = vunpack.c.l.b16 %v518
      %v1349 = vunpack.c.h.b16 %v518
      %v1350 = vunpack.c.l.b16 %v519
      %v1351 = vunpack.c.h.b16 %v519
      %v1352 = vunpack.c.l.b16 %v520
      %v1353 = vunpack.c.h.b16 %v520
      %v1354 = vunpack.c.l.b16 %v521
      %v1355 = vunpack.c.h.b16 %v521
      %v1356 = vunpack.c.l.b16 %v522
      %v1357 = vunpack.c.h.b16 %v522
      %v1358 = vunpack.c.l.b16 %v523
      %v1359 = vunpack.c.h.b16 %v523
      %v1360 = vunpack.c.l.b16 %v524
      %v1361 = vunpack.c.h.b16 %v524
      %v1362 = vunpack.c.l.b16 %v525
      %v1363 = vunpack.c.h.b16 %v525
      %v1364 = vunpack.c.l.b16 %v526
      %v1365 = vunpack.c.h.b16 %v526
      %v1366 = vunpack.c.l.b16 %v527
      %v1367 = vunpack.c.h.b16 %v527
      %v1368 = vunpack.c.l.b16 %v528
      %v1369 = vunpack.c.h.b16 %v528
      %v1370 = vunpack.c.l.b16 %v529
      %v1371 = vunpack.c.h.b16 %v529
      %v1372 = vunpack.c.l.b16 %v530
      %v1373 = vunpack.c.h.b16 %v530
      %v1374 = vunpack.c.l.b16 %v531
      %v1375 = vunpack.c.h.b16 %v531
      %v1376 = vunpack.c.l.b16 %v532
      %v1377 = vunpack.c.h.b16 %v532
      %v1378 = vunpack.c.l.b16 %v533
      %v1379 = vunpack.c.h.b16 %v533
      %v1380 = vunpack.c.l.b16 %v534
      %v1381 = vunpack.c.h.b16 %v534
      %v1382 = vunpack.c.l.b16 %v535
      %v1383 = vunpack.c.h.b16 %v535
      %v1384 = vunpack.c.l.b16 %v536
      %v1385 = vunpack.c.h.b16 %v536
      %v1386 = vunpack.c.l.b16 %v537
      %v1387 = vunpack.c.h.b16 %v537
      %v1388 = vunpack.c.l.b16 %v538
      %v1389 = vunpack.c.h.b16 %v538
      %v1390 = vunpack.c.l.b16 %v539
      %v1391 = vunpack.c.h.b16 %v539
      %v1392 = vunpack.c.l.b16 %v540
      %v1393 = vunpack.c.h.b16 %v540
      %v1394 = vunpack.c.l.b16 %v541
      %v1395 = vunpack.c.h.b16 %v541
      %v1396 = vunpack.c.l.b16 %v542
      %v1397 = vunpack.c.h.b16 %v542
      %v1398 = vunpack.c.l.b16 %v543
      %v1399 = vunpack.c.h.b16 %v543
      %v1400 = vunpack.c.l.b16 %v544
      %v1401 = vunpack.c.h.b16 %v544
      %v1402 = vunpack.c.l.b16 %v545
      %v1403 = vunpack.c.h.b16 %v545
      %v1404 = vunpack.c.l.b16 %v546
      %v1405 = vunpack.c.h.b16 %v546
      %v1406 = vunpack.c.l.b16 %v547
      %v1407 = vunpack.c.h.b16 %v547
      %v1408 = vunpack.c.l.b16 %v548
      %v1409 = vunpack.c.h.b16 %v548
      %v1410 = vunpack.c.l.b16 %v549
      %v1411 = vunpack.c.h.b16 %v549
      %v1412 = vunpack.c.l.b16 %v550
      %v1413 = vunpack.c.h.b16 %v550
      %v1414 = vunpack.c.l.b16 %v551
      %v1415 = vunpack.c.h.b16 %v551
      %v1416 = vunpack.c.l.b16 %v552
      %v1417 = vunpack.c.h.b16 %v552
      %v1418 = vunpack.c.l.b16 %v553
      %v1419 = vunpack.c.h.b16 %v553
      %v1420 = vunpack.c.l.b16 %v554
      %v1421 = vunpack.c.h.b16 %v554
      %v1422 = vunpack.c.l.b16 %v555
      %v1423 = vunpack.c.h.b16 %v555
      %v1424 = vunpack.c.l.b16 %v556
      %v1425 = vunpack.c.h.b16 %v556
      %v1426 = vunpack.c.l.b16 %v557
      %v1427 = vunpack.c.h.b16 %v557
      %v1428 = vunpack.c.l.b16 %v558
      %v1429 = vunpack.c.h.b16 %v558
      %v1430 = vunpack.c.l.b16 %v559
      %v1431 = vunpack.c.h.b16 %v559
      %v1432 = vunpack.c.l.b16 %v560
      %v1433 = vunpack.c.h.b16 %v560
      %v1434 = vunpack.c.l.b16 %v561
      %v1435 = vunpack.c.h.b16 %v561
      %v1436 = vunpack.c.l.b16 %v562
      %v1437 = vunpack.c.h.b16 %v562
      %v1438 = vunpack.c.l.b16 %v563
      %v1439 = vunpack.c.h.b16 %v563
      %v1440 = vunpack.c.l.b16 %v564
      %v1441 = vunpack.c.h.b16 %v564
      %v1442 = vunpack.c.l.b16 %v565
      %v1443 = vunpack.c.h.b16 %v565
      %v1444 = vunpack.c.l.b16 %v566
      %v1445 = vunpack.c.h.b16 %v566
      %v1446 = vunpack.c.l.b16 %v567
      %v1447 = vunpack.c.h.b16 %v567
      %v1448 = vunpack.c.l.b16 %v568
      %v1449 = vunpack.c.h.b16 %v568
      %v1450 = vunpack.c.l.b16 %v569
      %v1451 = vunpack.c.h.b16 %v569
      %v1452 = vunpack.c.l.b16 %v570
      %v1453 = vunpack.c.h.b16 %v570
      %v1454 = vunpack.c.l.b16 %v571
      %v1455 = vunpack.c.h.b16 %v571
      %v1456 = vunpack.c.l.b16 %v572
      %v1457 = vunpack.c.h.b16 %v572
      %v1458 = vunpack.c.l.b16 %v573
      %v1459 = vunpack.c.h.b16 %v573
      %v1460 = vunpack.c.l.b16 %v574
      %v1461 = vunpack.c.h.b16 %v574
      %v1462 = vunpack.c.l.b16 %v575
      %v1463 = vunpack.c.h.b16 %v575
      %v1464 = vunpack.c.l.b16 %v576
      %v1465 = vunpack.c.h.b16 %v576
      %v1466 = vunpack.c.l.b16 %v577
      %v1467 = vunpack.c.h.b16 %v577
      %v1468 = vunpack.c.l.b16 %v578
      %v1469 = vunpack.c.h.b16 %v578
      %v1470 = vunpack.c.l.b16 %v579
      %v1471 = vunpack.c.h.b16 %v579
      %v1472 = vunpack.c.l.b16 %v580
      %v1473 = vunpack.c.h.b16 %v580
      %v1474 = vunpack.c.l.b16 %v581
      %v1475 = vunpack.c.h.b16 %v581
      %v1476 = vunpack.c.l.b16 %v582
      %v1477 = vunpack.c.h.b16 %v582
      %v1478 = vunpack.c.l.b16 %v583
      %v1479 = vunpack.c.h.b16 %v583
      %v1480 = vunpack.c.l.b16 %v584
      %v1481 = vunpack.c.h.b16 %v584
      %v1482 = vunpack.c.l.b16 %v585
      %v1483 = vunpack.c.h.b16 %v585
      %v1484 = vunpack.c.l.b16 %v586
      %v1485 = vunpack.c.h.b16 %v586
      %v1486 = vunpack.c.l.b16 %v587
      %v1487 = vunpack.c.h.b16 %v587
      %v1488 = vunpack.c.l.b16 %v588
      %v1489 = vunpack.c.h.b16 %v588
      %v1490 = vunpack.c.l.b16 %v589
      %v1491 = vunpack.c.h.b16 %v589
      %v1492 = vunpack.c.l.b16 %v590
      %v1493 = vunpack.c.h.b16 %v590
      %v1494 = vunpack.c.l.b16 %v591
      %v1495 = vunpack.c.h.b16 %v591
      %v1496 = vunpack.c.l.b16 %v592
      %v1497 = vunpack.c.h.b16 %v592
      %v1498 = vunpack.c.l.b16 %v593
      %v1499 = vunpack.c.h.b16 %v593
      %v1500 = vunpack.c.l.b16 %v594
      %v1501 = vunpack.c.h.b16 %v594
      %v1502 = vunpack.c.l.b16 %v595
      %v1503 = vunpack.c.h.b16 %v595
      %v1504 = vunpack.c.l.b16 %v596
      %v1505 = vunpack.c.h.b16 %v596
      %v1506 = vunpack.c.l.b16 %v597
      %v1507 = vunpack.c.h.b16 %v597
      %v1508 = vunpack.c.l.b16 %v598
      %v1509 = vunpack.c.h.b16 %v598
      %v1510 = vunpack.c.l.b16 %v599
      %v1511 = vunpack.c.h.b16 %v599
      %v1512 = vunpack.c.l.b16 %v600
      %v1513 = vunpack.c.h.b16 %v600
      %v1514 = vunpack.c.l.b16 %v601
      %v1515 = vunpack.c.h.b16 %v601
      %v1516 = vunpack.c.l.b16 %v602
      %v1517 = vunpack.c.h.b16 %v602
      %v1518 = vunpack.c.l.b16 %v603
      %v1519 = vunpack.c.h.b16 %v603
      %v1520 = vunpack.c.l.b16 %v604
      %v1521 = vunpack.c.h.b16 %v604
      %v1522 = vunpack.c.l.b16 %v605
      %v1523 = vunpack.c.h.b16 %v605
      %v1524 = vunpack.c.l.b16 %v606
      %v1525 = vunpack.c.h.b16 %v606
      %v1526 = vunpack.c.l.b16 %v607
      %v1527 = vunpack.c.h.b16 %v607
      %v1528 = vunpack.c.l.b16 %v608
      %v1529 = vunpack.c.h.b16 %v608
      %v1530 = vunpack.c.l.b16 %v609
      %v1531 = vunpack.c.h.b16 %v609
      %v1532 = vunpack.c.l.b16 %v610
      %v1533 = vunpack.c.h.b16 %v610
      %v1534 = vunpack.c.l.b16 %v611
      %v1535 = vunpack.c.h.b16 %v611
      %v1536 = vunpack.c.l.b16 %v612
      %v1537 = vunpack.c.h.b16 %v612
      %v1538 = vunpack.c.l.b16 %v613
      %v1539 = vunpack.c.h.b16 %v613
      %v1540 = vunpack.c.l.b16 %v614
      %v1541 = vunpack.c.h.b16 %v614
      %v1542 = vunpack.c.l.b16 %v615
      %v1543 = vunpack.c.h.b16 %v615
      %v1544 = vunpack.c.l.b16 %v616
      %v1545 = vunpack.c.h.b16 %v616
      %v1546 = vunpack.c.l.b16 %v617
      %v1547 = vunpack.c.h.b16 %v617
      %v1548 = vunpack.c.l.b16 %v618
      %v1549 = vunpack.c.h.b16 %v618
      %v1550 = vunpack.c.l.b16 %v619
      %v1551 = vunpack.c.h.b16 %v619
      %v1552 = vunpack.c.l.b16 %v620
      %v1553 = vunpack.c.h.b16 %v620
      %v1554 = vunpack.c.l.b16 %v621
      %v1555 = vunpack.c.h.b16 %v621
      %v1556 = vunpack.c.l.b16 %v622
      %v1557 = vunpack.c.h.b16 %v622
      %v1558 = vunpack.c.l.b16 %v623
      %v1559 = vunpack.c.h.b16 %v623
      %v1560 = vunpack.c.l.b16 %v624
      %v1561 = vunpack.c.h.b16 %v624
      %v1562 = vunpack.c.l.b16 %v625
      %v1563 = vunpack.c.h.b16 %v625
      %v1564 = vunpack.c.l.b16 %v626
      %v1565 = vunpack.c.h.b16 %v626
      %v1566 = vunpack.c.l.b16 %v627
      %v1567 = vunpack.c.h.b16 %v627
      %v1568 = vunpack.c.l.b16 %v628
      %v1569 = vunpack.c.h.b16 %v628
      %v1570 = vunpack.c.l.b16 %v629
      %v1571 = vunpack.c.h.b16 %v629
      %v1572 = vunpack.c.l.b16 %v630
      %v1573 = vunpack.c.h.b16 %v630
      %v1574 = vunpack.c.l.b16 %v631
      %v1575 = vunpack.c.h.b16 %v631
      %v1576 = vunpack.c.l.b16 %v632
      %v1577 = vunpack.c.h.b16 %v632
      %v1578 = vunpack.c.l.b16 %v633
      %v1579 = vunpack.c.h.b16 %v633
      %v1580 = vunpack.c.l.b16 %v634
      %v1581 = vunpack.c.h.b16 %v634
      %v1582 = vunpack.c.l.b16 %v635
      %v1583 = vunpack.c.h.b16 %v635
      %v1584 = vunpack.c.l.b16 %v636
      %v1585 = vunpack.c.h.b16 %v636
      %v1586 = vunpack.c.l.b16 %v637
      %v1587 = vunpack.c.h.b16 %v637
      %v1588 = vunpack.c.l.b16 %v638
      %v1589 = vunpack.c.h.b16 %v638
      %v1590 = vunpack.c.l.b16 %v639
      %v1591 = vunpack.c.h.b16 %v639
      %v1592 = vunpack.c.l.b16 %v640
      %v1593 = vunpack.c.h.b16 %v640
      %v1594 = vunpack.c.l.b16 %v641
      %v1595 = vunpack.c.h.b16 %v641
      %v1596 = vunpack.c.l.b16 %v642
      %v1597 = vunpack.c.h.b16 %v642
      %v1598 = vunpack.c.l.b16 %v643
      %v1599 = vunpack.c.h.b16 %v643
      %v1600 = vunpack.c.l.b16 %v644
      %v1601 = vunpack.c.h.b16 %v644
      %v1602 = vunpack.c.l.b16 %v645
      %v1603 = vunpack.c.h.b16 %v645
      %v1604 = vunpack.c.l.b16 %v646
      %v1605 = vunpack.c.h.b16 %v646
      %v1606 = vunpack.c.l.b16 %v647
      %v1607 = vunpack.c.h.b16 %v647
      %v1608 = vunpack.c.l.b16 %v648
      %v1609 = vunpack.c.h.b16 %v648
      %v1610 = vunpack.c.l.b16 %v649
      %v1611 = vunpack.c.h.b16 %v649
      %v1612 = vunpack.c.l.b16 %v650
      %v1613 = vunpack.c.h.b16 %v650
      %v1614 = vunpack.c.l.b16 %v651
      %v1615 = vunpack.c.h.b16 %v651
      %v1616 = vunpack.c.l.b16 %v652
      %v1617 = vunpack.c.h.b16 %v652
      %v1618 = vunpack.c.l.b16 %v653
      %v1619 = vunpack.c.h.b16 %v653
      %v1620 = vunpack.c.l.b16 %v654
      %v1621 = vunpack.c.h.b16 %v654
      %v1622 = vunpack.c.l.b16 %v655
      %v1623 = vunpack.c.h.b16 %v655
      %v1624 = vunpack.c.l.b16 %v656
      %v1625 = vunpack.c.h.b16 %v656
      %v1626 = vunpack.c.l.b16 %v657
      %v1627 = vunpack.c.h.b16 %v657
      %v1628 = vunpack.c.l.b16 %v658
      %v1629 = vunpack.c.h.b16 %v658
      %v1630 = vunpack.c.l.b16 %v659
      %v1631 = vunpack.c.h.b16 %v659
      %v1632 = vunpack.c.l.b16 %v660
      %v1633 = vunpack.c.h.b16 %v660
      %v1634 = vunpack.c.l.b16 %v661
      %v1635 = vunpack.c.h.b16 %v661
      %v1636 = vunpack.c.l.b16 %v662
      %v1637 = vunpack.c.h.b16 %v662
      %v1638 = vunpack.c.l.b16 %v663
      %v1639 = vunpack.c.h.b16 %v663
      %v1640 = vunpack.c.l.b16 %v664
      %v1641 = vunpack.c.h.b16 %v664
      %v1642 = vunpack.c.l.b16 %v665
      %v1643 = vunpack.c.h.b16 %v665
      %v1644 = vunpack.c.l.b16 %v666
      %v1645 = vunpack.c.h.b16 %v666
      %v1646 = vunpack.c.l.b16 %v667
      %v1647 = vunpack.c.h.b16 %v667
      %v1648 = vunpack.c.l.b16 %v668
      %v1649 = vunpack.c.h.b16 %v668
      %v1650 = vunpack.c.l.b16 %v669
      %v1651 = vunpack.c.h.b16 %v669
      %v1652 = vunpack.c.l.b16 %v670
      %v1653 = vunpack.c.h.b16 %v670
      %v1654 = vunpack.c.l.b16 %v671
      %v1655 = vunpack.c.h.b16 %v671
      %v1656 = vunpack.c.l.b16 %v672
      %v1657 = vunpack.c.h.b16 %v672
      %v1658 = vunpack.c.l.b16 %v673
      %v1659 = vunpack.c.h.b16 %v673
      %v1660 = vunpack.c.l.b16 %v674
      %v1661 = vunpack.c.h.b16 %v674
      %v1662 = vunpack.c.l.b16 %v675
      %v1663 = vunpack.c.h.b16 %v675
      %v1664 = vunpack.c.l.b16 %v676
      %v1665 = vunpack.c.h.b16 %v676
      %v1666 = vunpack.c.l.b16 %v677
      %v1667 = vunpack.c.h.b16 %v677
      %v1668 = vunpack.c.l.b16 %v678
      %v1669 = vunpack.c.h.b16 %v678
      %v1670 = vunpack.c.l.b16 %v679
      %v1671 = vunpack.c.h.b16 %v679
      %v1672 = vunpack.c.l.b16 %v680
      %v1673 = vunpack.c.h.b16 %v680
      %v1674 = vunpack.c.l.b16 %v681
      %v1675 = vunpack.c.h.b16 %v681
      %v1676 = vunpack.c.l.b16 %v682
      %v1677 = vunpack.c.h.b16 %v682
      %v1678 = vunpack.c.l.b16 %v683
      %v1679 = vunpack.c.h.b16 %v683
      %v1680 = vunpack.c.l.b16 %v684
      %v1681 = vunpack.c.h.b16 %v684
      %v1682 = vunpack.c.l.b16 %v685
      %v1683 = vunpack.c.h.b16 %v685
      %v1684 = vunpack.c.l.b16 %v686
      %v1685 = vunpack.c.h.b16 %v686
      %v1686 = vunpack.c.l.b16 %v687
      %v1687 = vunpack.c.h.b16 %v687
      %v1688 = vunpack.c.l.b16 %v688
      %v1689 = vunpack.c.h.b16 %v688
      %v1690 = vunpack.c.l.b16 %v689
      %v1691 = vunpack.c.h.b16 %v689
      %v1692 = vunpack.c.l.b16 %v690
      %v1693 = vunpack.c.h.b16 %v690
      %v1694 = vunpack.c.l.b16 %v691
      %v1695 = vunpack.c.h.b16 %v691
      %v1696 = vunpack.c.l.b16 %v692
      %v1697 = vunpack.c.h.b16 %v692
      %v1698 = vunpack.c.l.b16 %v693
      %v1699 = vunpack.c.h.b16 %v693
      %v1700 = vunpack.c.l.b16 %v694
      %v1701 = vunpack.c.h.b16 %v694
      %v1702 = vunpack.c.l.b16 %v695
      %v1703 = vunpack.c.h.b16 %v695
      %v1704 = vunpack.c.l.b16 %v696
      %v1705 = vunpack.c.h.b16 %v696
      %v1706 = vunpack.c.l.b16 %v697
      %v1707 = vunpack.c.h.b16 %v697
      %v1708 = vunpack.c.l.b16 %v698
      %v1709 = vunpack.c.h.b16 %v698
      %v1710 = vunpack.c.l.b16 %v699
      %v1711 = vunpack.c.h.b16 %v699
      %v1712 = vunpack.c.l.b16 %v700
      %v1713 = vunpack.c.h.b16 %v700
      %v1714 = vunpack.c.l.b16 %v701
      %v1715 = vunpack.c.h.b16 %v701
      %v1716 = vunpack.c.l.b16 %v702
      %v1717 = vunpack.c.h.b16 %v702
      %v1718 = vunpack.c.l.b16 %v703
      %v1719 = vunpack.c.h.b16 %v703
      %v1720 = vunpack.c.l.b16 %v704
      %v1721 = vunpack.c.h.b16 %v704
      %v1722 = vunpack.c.l.b16 %v705
      %v1723 = vunpack.c.h.b16 %v705
      %v1724 = vunpack.c.l.b16 %v706
      %v1725 = vunpack.c.h.b16 %v706
      %v1726 = vunpack.c.l.b16 %v707
      %v1727 = vunpack.c.h.b16 %v707
      %v1728 = vunpack.c.l.b16 %v708
      %v1729 = vunpack.c.h.b16 %v708
      %v1730 = vunpack.c.l.b16 %v709
      %v1731 = vunpack.c.h.b16 %v709
      %v1732 = vunpack.c.l.b16 %v710
      %v1733 = vunpack.c.h.b16 %v710
      %v1734 = vunpack.c.l.b16 %v711
      %v1735 = vunpack.c.h.b16 %v711
      %v1736 = vunpack.c.l.b16 %v712
      %v1737 = vunpack.c.h.b16 %v712
      %v1738 = vunpack.c.l.b16 %v713
      %v1739 = vunpack.c.h.b16 %v713
      %v1740 = vunpack.c.l.b16 %v714
      %v1741 = vunpack.c.h.b16 %v714
      %v1742 = vunpack.c.l.b16 %v715
      %v1743 = vunpack.c.h.b16 %v715
      %v1744 = vunpack.c.l.b16 %v716
      %v1745 = vunpack.c.h.b16 %v716
      %v1746 = vunpack.c.l.b16 %v717
      %v1747 = vunpack.c.h.b16 %v717
      %v1748 = vunpack.c.l.b16 %v718
      %v1749 = vunpack.c.h.b16 %v718
      %v1750 = vunpack.c.l.b16 %v719
      %v1751 = vunpack.c.h.b16 %v719
      %v1752 = vunpack.c.l.b16 %v720
      %v1753 = vunpack.c.h.b16 %v720
      %v1754 = vunpack.c.l.b16 %v721
      %v1755 = vunpack.c.h.b16 %v721
      %v1756 = vunpack.c.l.b16 %v722
      %v1757 = vunpack.c.h.b16 %v722
      %v1758 = vunpack.c.l.b16 %v723
      %v1759 = vunpack.c.h.b16 %v723
      %v1760 = vunpack.c.l.b16 %v724
      %v1761 = vunpack.c.h.b16 %v724
      %v1762 = vunpack.c.l.b16 %v725
      %v1763 = vunpack.c.h.b16 %v725
      %v1764 = vunpack.c.l.b16 %v726
      %v1765 = vunpack.c.h.b16 %v726
      %v1766 = vunpack.c.l.b16 %v727
      %v1767 = vunpack.c.h.b16 %v727
      %v1768 = vunpack.c.l.b16 %v728
      %v1769 = vunpack.c.h.b16 %v728
      %v1770 = vunpack.c.l.b16 %v729
      %v1771 = vunpack.c.h.b16 %v729
      %v1772 = vunpack.c.l.b16 %v730
      %v1773 = vunpack.c.h.b16 %v730
      %v1774 = vunpack.c.l.b16 %v731
      %v1775 = vunpack.c.h.b16 %v731
      %v1776 = vunpack.c.l.b16 %v732
      %v1777 = vunpack.c.h.b16 %v732
      %v1778 = vunpack.c.l.b16 %v733
      %v1779 = vunpack.c.h.b16 %v733
      %v1780 = vunpack.c.l.b16 %v734
      %v1781 = vunpack.c.h.b16 %v734
      %v1782 = vunpack.c.l.b16 %v735
      %v1783 = vunpack.c.h.b16 %v735
      %v1784 = vunpack.c.l.b16 %v736
      %v1785 = vunpack.c.h.b16 %v736
      %v1786 = vunpack.c.l.b16 %v737
      %v1787 = vunpack.c.h.b16 %v737
      %v1788 = vunpack.c.l.b16 %v738
      %v1789 = vunpack.c.h.b16 %v738
      %v1790 = vunpack.c.l.b16 %v739
      %v1791 = vunpack.c.h.b16 %v739
      %v1792 = vunpack.c.l.b16 %v740
      %v1793 = vunpack.c.h.b16 %v740
      %v1794 = vunpack.c.l.b16 %v741
      %v1795 = vunpack.c.h.b16 %v741
      %v1796 = vunpack.c.l.b16 %v742
      %v1797 = vunpack.c.h.b16 %v742
      %v1798 = vunpack.c.l.b16 %v743
      %v1799 = vunpack.c.h.b16 %v743
      %v1800 = vunpack.c.l.b16 %v744
      %v1801 = vunpack.c.h.b16 %v744
      %v1802 = vunpack.c.l.b16 %v745
      %v1803 = vunpack.c.h.b16 %v745
      %v1804 = vunpack.c.l.b16 %v746
      %v1805 = vunpack.c.h.b16 %v746
      %v1806 = vunpack.c.l.b16 %v747
      %v1807 = vunpack.c.h.b16 %v747
      %v1808 = vunpack.c.l.b16 %v748
      %v1809 = vunpack.c.h.b16 %v748
      %v1810 = vunpack.c.l.b16 %v749
      %v1811 = vunpack.c.h.b16 %v749
      %v1812 = vunpack.c.l.b16 %v750
      %v1813 = vunpack.c.h.b16 %v750
      %v1814 = vunpack.c.l.b16 %v751
      %v1815 = vunpack.c.h.b16 %v751
      %v1816 = vunpack.c.l.b16 %v752
      %v1817 = vunpack.c.h.b16 %v752
      %v1818 = vunpack.c.l.b16 %v753
      %v1819 = vunpack.c.h.b16 %v753
      %v1820 = vunpack.c.l.b16 %v754
      %v1821 = vunpack.c.h.b16 %v754
      %v1822 = vunpack.c.l.b16 %v755
      %v1823 = vunpack.c.h.b16 %v755
      %v1824 = vunpack.c.l.b16 %v756
      %v1825 = vunpack.c.h.b16 %v756
      %v1826 = vunpack.c.l.b16 %v757
      %v1827 = vunpack.c.h.b16 %v757
      %v1828 = vunpack.c.l.b16 %v758
      %v1829 = vunpack.c.h.b16 %v758
      %v1830 = vunpack.c.l.b16 %v759
      %v1831 = vunpack.c.h.b16 %v759
      %v1832 = vunpack.c.l.b16 %v760
      %v1833 = vunpack.c.h.b16 %v760
      %v1834 = vunpack.c.l.b16 %v761
      %v1835 = vunpack.c.h.b16 %v761
      %v1836 = vunpack.c.l.b16 %v762
      %v1837 = vunpack.c.h.b16 %v762
      %v1838 = vunpack.c.l.b16 %v763
      %v1839 = vunpack.c.h.b16 %v763
      %v1840 = vunpack.c.l.b16 %v764
      %v1841 = vunpack.c.h.b16 %v764
      %v1842 = vunpack.c.l.b16 %v765
      %v1843 = vunpack.c.h.b16 %v765
      %v1844 = vunpack.c.l.b16 %v766
      %v1845 = vunpack.c.h.b16 %v766
      %v1846 = vunpack.c.l.b16 %v767
      %v1847 = vunpack.c.h.b16 %v767
      %v1848 = vunpack.c.l.b16 %v768
      %v1849 = vunpack.c.h.b16 %v768
      %v1850 = vunpack.c.l.b16 %v769
      %v1851 = vunpack.c.h.b16 %v769
      %v1852 = vunpack.c.l.b16 %v770
      %v1853 = vunpack.c.h.b16 %v770
      %v1854 = vunpack.c.l.b16 %v771
      %v1855 = vunpack.c.h.b16 %v771
      %v1856 = vpack.c.b16 %v1348, %v1344
      %v1857 = vpack.c.b16 %v1349, %v1345
      %v1858 = vpack.c.b16 %v1350, %v1346
      %v1859 = vpack.c.b16 %v1351, %v1347
      %v1860 = vpack.c.b16 %v1356, %v1352
      %v1861 = vpack.c.b16 %v1357, %v1353
      %v1862 = vpack.c.b16 %v1358, %v1354
      %v1863 = vpack.c.b16 %v1359, %v1355
      %v1864 = vpack.c.b16 %v1364, %v1360
      %v1865 = vpack.c.b16 %v1365, %v1361
      %v1866 = vpack.c.b16 %v1366, %v1362
      %v1867 = vpack.c.b16 %v1367, %v1363
      %v1868 = vpack.c.b16 %v1372, %v1368
      %v1869 = vpack.c.b16 %v1373, %v1369
      %v1870 = vpack.c.b16 %v1374, %v1370
      %v1871 = vpack.c.b16 %v1375, %v1371
      %v1872 = vpack.c.b16 %v1380, %v1376
      %v1873 = vpack.c.b16 %v1381, %v1377
      %v1874 = vpack.c.b16 %v1382, %v1378
      %v1875 = vpack.c.b16 %v1383, %v1379
      %v1876 = vpack.c.b16 %v1388, %v1384
      %v1877 = vpack.c.b16 %v1389, %v1385
      %v1878 = vpack.c.b16 %v1390, %v1386
      %v1879 = vpack.c.b16 %v1391, %v1387
      %v1880 = vpack.c.b16 %v1396, %v1392
      %v1881 = vpack.c.b16 %v1397, %v1393
      %v1882 = vpack.c.b16 %v1398, %v1394
      %v1883 = vpack.c.b16 %v1399, %v1395
      %v1884 = vpack.c.b16 %v1404, %v1400
      %v1885 = vpack.c.b16 %v1405, %v1401
      %v1886 = vpack.c.b16 %v1406, %v1402
      %v1887 = vpack.c.b16 %v1407, %v1403
      %v1888 = vpack.c.b16 %v1412, %v1408
      %v1889 = vpack.c.b16 %v1413, %v1409
      %v1890 = vpack.c.b16 %v1414, %v1410
      %v1891 = vpack.c.b16 %v1415, %v1411
      %v1892 = vpack.c.b16 %v1420, %v1416
      %v1893 = vpack.c.b16 %v1421, %v1417
      %v1894 = vpack.c.b16 %v1422, %v1418
      %v1895 = vpack.c.b16 %v1423, %v1419
      %v1896 = vpack.c.b16 %v1428, %v1424
      %v1897 = vpack.c.b16 %v1429, %v1425
      %v1898 = vpack.c.b16 %v1430, %v1426
      %v1899 = vpack.c.b16 %v1431, %v1427
      %v1900 = vpack.c.b16 %v1436, %v1432
      %v1901 = vpack.c.b16 %v1437, %v1433
      %v1902 = vpack.c.b16 %v1438, %v1434
      %v1903 = vpack.c.b16 %v1439, %v1435
      %v1904 = vpack.c.b16 %v1444, %v1440
      %v1905 = vpack.c.b16 %v1445, %v1441
      %v1906 = vpack.c.b16 %v1446, %v1442
      %v1907 = vpack.c.b16 %v1447, %v1443
      %v1908 = vpack.c.b16 %v1452, %v1448
      %v1909 = vpack.c.b16 %v1453, %v1449
      %v1910 = vpack.c.b16 %v1454, %v1450
      %v1911 = vpack.c.b16 %v1455, %v1451
      %v1912 = vpack.c.b16 %v1460, %v1456
      %v1913 = vpack.c.b16 %v1461, %v1457
      %v1914 = vpack.c.b16 %v1462, %v1458
      %v1915 = vpack.c.b16 %v1463, %v1459
      %v1916 = vpack.c.b16 %v1468, %v1464
      %v1917 = vpack.c.b16 %v1469, %v1465
      %v1918 = vpack.c.b16 %v1470, %v1466
      %v1919 = vpack.c.b16 %v1471, %v1467
      %v1920 = vpack.c.b16 %v1476, %v1472
      %v1921 = vpack.c.b16 %v1477, %v1473
      %v1922 = vpack.c.b16 %v1478, %v1474
      %v1923 = vpack.c.b16 %v1479, %v1475
      %v1924 = vpack.c.b16 %v1484, %v1480
      %v1925 = vpack.c.b16 %v1485, %v1481
      %v1926 = vpack.c.b16 %v1486, %v1482
      %v1927 = vpack.c.b16 %v1487, %v1483
      %v1928 = vpack.c.b16 %v1492, %v1488
      %v1929 = vpack.c.b16 %v1493, %v1489
      %v1930 = vpack.c.b16 %v1494, %v1490
      %v1931 = vpack.c.b16 %v1495, %v1491
      %v1932 = vpack.c.b16 %v1500, %v1496
      %v1933 = vpack.c.b16 %v1501, %v1497
      %v1934 = vpack.c.b16 %v1502, %v1498
      %v1935 = vpack.c.b16 %v1503, %v1499
      %v1936 = vpack.c.b16 %v1508, %v1504
      %v1937 = vpack.c.b16 %v1509, %v1505
      %v1938 = vpack.c.b16 %v1510, %v1506
      %v1939 = vpack.c.b16 %v1511, %v1507
      %v1940 = vpack.c.b16 %v1516, %v1512
      %v1941 = vpack.c.b16 %v1517, %v1513
      %v1942 = vpack.c.b16 %v1518, %v1514
      %v1943 = vpack.c.b16 %v1519, %v1515
      %v1944 = vpack.c.b16 %v1524, %v1520
      %v1945 = vpack.c.b16 %v1525, %v1521
      %v1946 = vpack.c.b16 %v1526, %v1522
      %v1947 = vpack.c.b16 %v1527, %v1523
      %v1948 = vpack.c.b16 %v1532, %v1528
      %v1949 = vpack.c.b16 %v1533, %v1529
      %v1950 = vpack.c.b16 %v1534, %v1530
      %v1951 = vpack.c.b16 %v1535, %v1531
      %v1952 = vpack.c.b16 %v1540, %v1536
      %v1953 = vpack.c.b16 %v1541, %v1537
      %v1954 = vpack.c.b16 %v1542, %v1538
      %v1955 = vpack.c.b16 %v1543, %v1539
      %v1956 = vpack.c.b16 %v1548, %v1544
      %v1957 = vpack.c.b16 %v1549, %v1545
      %v1958 = vpack.c.b16 %v1550, %v1546
      %v1959 = vpack.c.b16 %v1551, %v1547
      %v1960 = vpack.c.b16 %v1556, %v1552
      %v1961 = vpack.c.b16 %v1557, %v1553
      %v1962 = vpack.c.b16 %v1558, %v1554
      %v1963 = vpack.c.b16 %v1559, %v1555
      %v1964 = vpack.c.b16 %v1564, %v1560
      %v1965 = vpack.c.b16 %v1565, %v1561
      %v1966 = vpack.c.b16 %v1566, %v1562
      %v1967 = vpack.c.b16 %v1567, %v1563
      %v1968 = vpack.c.b16 %v1572, %v1568
      %v1969 = vpack.c.b16 %v1573, %v1569
      %v1970 = vpack.c.b16 %v1574, %v1570
      %v1971 = vpack.c.b16 %v1575, %v1571
      %v1972 = vpack.c.b16 %v1580, %v1576
      %v1973 = vpack.c.b16 %v1581, %v1577
      %v1974 = vpack.c.b16 %v1582, %v1578
      %v1975 = vpack.c.b16 %v1583, %v1579
      %v1976 = vpack.c.b16 %v1588, %v1584
      %v1977 = vpack.c.b16 %v1589, %v1585
      %v1978 = vpack.c.b16 %v1590, %v1586
      %v1979 = vpack.c.b16 %v1591, %v1587
      %v1980 = vpack.c.b16 %v1596, %v1592
      %v1981 = vpack.c.b16 %v1597, %v1593
      %v1982 = vpack.c.b16 %v1598, %v1594
      %v1983 = vpack.c.b16 %v1599, %v1595
      %v1984 = vpack.c.b16 %v1604, %v1600
      %v1985 = vpack.c.b16 %v1605, %v1601
      %v1986 = vpack.c.b16 %v1606, %v1602
      %v1987 = vpack.c.b16 %v1607, %v1603
      %v1988 = vpack.c.b16 %v1612, %v1608
      %v1989 = vpack.c.b16 %v1613, %v1609
      %v1990 = vpack.c.b16 %v1614, %v1610
      %v1991 = vpack.c.b16 %v1615, %v1611
      %v1992 = vpack.c.b16 %v1620, %v1616
      %v1993 = vpack.c.b16 %v1621, %v1617
      %v1994 = vpack.c.b16 %v1622, %v1618
      %v1995 = vpack.c.b16 %v1623, %v1619
      %v1996 = vpack.c.b16 %v1628, %v1624
      %v1997 = vpack.c.b16 %v1629, %v1625
      %v1998 = vpack.c.b16 %v1630, %v1626
      %v1999 = vpack.c.b16 %v1631, %v1627
      %v2000 = vpack.c.b16 %v1636, %v1632
      %v2001 = vpack.c.b16 %v1637, %v1633
      %v2002 = vpack.c.b16 %v1638, %v1634
      %v2003 = vpack.c.b16 %v1639, %v1635
      %v2004 = vpack.c.b16 %v1644, %v1640
      %v2005 = vpack.c.b16 %v1645, %v1641
      %v2006 = vpack.c.b16 %v1646, %v1642
      %v2007 = vpack.c.b16 %v1647, %v1643
      %v2008 = vpack.c.b16 %v1652, %v1648
      %v2009 = vpack.c.b16 %v1653, %v1649
      %v2010 = vpack.c.b16 %v1654, %v1650
      %v2011 = vpack.c.b16 %v1655, %v1651
      %v2012 = vpack.c.b16 %v1660, %v1656
      %v2013 = vpack.c.b16 %v1661, %v1657
      %v2014 = vpack.c.b16 %v1662, %v1658
      %v2015 = vpack.c.b16 %v1663, %v1659
      %v2016 = vpack.c.b16 %v1668, %v1664
      %v2017 = vpack.c.b16 %v1669, %v1665
      %v2018 = vpack.c.b16 %v1670, %v1666
      %v2019 = vpack.c.b16 %v1671, %v1667
      %v2020 = vpack.c.b16 %v1676, %v1672
      %v2021 = vpack.c.b16 %v1677, %v1673
      %v2022 = vpack.c.b16 %v1678, %v1674
      %v2023 = vpack.c.b16 %v1679, %v1675
      %v2024 = vpack.c.b16 %v1684, %v1680
      %v2025 = vpack.c.b16 %v1685, %v1681
      %v2026 = vpack.c.b16 %v1686, %v1682
      %v2027 = vpack.c.b16 %v1687, %v1683
      %v2028 = vpack.c.b16 %v1692, %v1688
      %v2029 = vpack.c.b16 %v1693, %v1689
      %v2030 = vpack.c.b16 %v1694, %v1690
      %v2031 = vpack.c.b16 %v1695, %v1691
      %v2032 = vpack.c.b16 %v1700, %v1696
      %v2033 = vpack.c.b16 %v1701, %v1697
      %v2034 = vpack.c.b16 %v1702, %v1698
      %v2035 = vpack.c.b16 %v1703, %v1699
      %v2036 = vpack.c.b16 %v1708, %v1704
      %v2037 = vpack.c.b16 %v1709, %v1705
      %v2038 = vpack.c.b16 %v1710, %v1706
      %v2039 = vpack.c.b16 %v1711, %v1707
      %v2040 = vpack.c.b16 %v1716, %v1712
      %v2041 = vpack.c.b16 %v1717, %v1713
      %v2042 = vpack.c.b16 %v1718, %v1714
      %v2043 = vpack.c.b16 %v1719, %v1715
      %v2044 = vpack.c.b16 %v1724, %v1720
      %v2045 = vpack.c.b16 %v1725, %v1721
      %v2046 = vpack.c.b16 %v1726, %v1722
      %v2047 = vpack.c.b16 %v1727, %v1723
      %v2048 = vpack.c.b16 %v1732, %v1728
      %v2049 = vpack.c.b16 %v1733, %v1729
      %v2050 = vpack.c.b16 %v1734, %v1730
      %v2051 = vpack.c.b16 %v1735, %v1731
      %v2052 = vpack.c.b16 %v1740, %v1736
      %v2053 = vpack.c.b16 %v1741, %v1737
      %v2054 = vpack.c.b16 %v1742, %v1738
      %v2055 = vpack.c.b16 %v1743, %v1739
      %v2056 = vpack.c.b16 %v1748, %v1744
      %v2057 = vpack.c.b16 %v1749, %v1745
      %v2058 = vpack.c.b16 %v1750, %v1746
      %v2059 = vpack.c.b16 %v1751, %v1747
      %v2060 = vpack.c.b16 %v1756, %v1752
      %v2061 = vpack.c.b16 %v1757, %v1753
      %v2062 = vpack.c.b16 %v1758, %v1754
      %v2063 = vpack.c.b16 %v1759, %v1755
      %v2064 = vpack.c.b16 %v1764, %v1760
      %v2065 = vpack.c.b16 %v1765, %v1761
      %v2066 = vpack.c.b16 %v1766, %v1762
      %v2067 = vpack.c.b16 %v1767, %v1763
      %v2068 = vpack.c.b16 %v1772, %v1768
      %v2069 = vpack.c.b16 %v1773, %v1769
      %v2070 = vpack.c.b16 %v1774, %v1770
      %v2071 = vpack.c.b16 %v1775, %v1771
      %v2072 = vpack.c.b16 %v1780, %v1776
      %v2073 = vpack.c.b16 %v1781, %v1777
      %v2074 = vpack.c.b16 %v1782, %v1778
      %v2075 = vpack.c.b16 %v1783, %v1779
      %v2076 = vpack.c.b16 %v1788, %v1784
      %v2077 = vpack.c.b16 %v1789, %v1785
      %v2078 = vpack.c.b16 %v1790, %v1786
      %v2079 = vpack.c.b16 %v1791, %v1787
      %v2080 = vpack.c.b16 %v1796, %v1792
      %v2081 = vpack.c.b16 %v1797, %v1793
      %v2082 = vpack.c.b16 %v1798, %v1794
      %v2083 = vpack.c.b16 %v1799, %v1795
      %v2084 = vpack.c.b16 %v1804, %v1800
      %v2085 = vpack.c.b16 %v1805, %v1801
      %v2086 = vpack.c.b16 %v1806, %v1802
      %v2087 = vpack.c.b16 %v1807, %v1803
      %v2088 = vpack.c.b16 %v1812, %v1808
      %v2089 = vpack.c.b16 %v1813, %v1809
      %v2090 = vpack.c.b16 %v1814, %v1810
      %v2091 = vpack.c.b16 %v1815, %v1811
      %v2092 = vpack.c.b16 %v1820, %v1816
      %v2093 = vpack.c.b16 %v1821, %v1817
      %v2094 = vpack.c.b16 %v1822, %v1818
      %v2095 = vpack.c.b16 %v1823, %v1819
      %v2096 = vpack.c.b16 %v1828, %v1824
      %v2097 = vpack.c.b16 %v1829, %v1825
      %v2098 = vpack.c.b16 %v1830, %v1826
      %v2099 = vpack.c.b16 %v1831, %v1827
      %v2100 = vpack.c.b16 %v1836, %v1832
      %v2101 = vpack.c.b16 %v1837, %v1833
      %v2102 = vpack.c.b16 %v1838, %v1834
      %v2103 = vpack.c.b16 %v1839, %v1835
      %v2104 = vpack.c.b16 %v1844, %v1840
      %v2105 = vpack.c.b16 %v1845, %v1841
      %v2106 = vpack.c.b16 %v1846, %v1842
      %v2107 = vpack.c.b16 %v1847, %v1843
      %v2108 = vpack.c.b16 %v1852, %v1848
      %v2109 = vpack.c.b16 %v1853, %v1849
      %v2110 = vpack.c.b16 %v1854, %v1850
      %v2111 = vpack.c.b16 %v1855, %v1851
      %2368 = vmatprep.subr.bf16.mxu0 %v1857
      %2369 = vmatpush1.bf16.msra.mxu0 %v1856
      %2370 = vmatprep.subr.bf16.mxu0 %v1861
      %2371 = vmatpush1.bf16.msra.mxu0 %v1860
      %2372 = vmatprep.subr.bf16.mxu0 %v1865
      %2373 = vmatpush1.bf16.msra.mxu0 %v1864
      %2374 = vmatprep.subr.bf16.mxu0 %v1869
      %2375 = vmatpush1.bf16.msra.mxu0 %v1868
      %2376 = vmatprep.subr.bf16.mxu0 %v1873
      %2377 = vmatpush1.bf16.msra.mxu0 %v1872
      %2378 = vmatprep.subr.bf16.mxu0 %v1877
      %2379 = vmatpush1.bf16.msra.mxu0 %v1876
      %2380 = vmatprep.subr.bf16.mxu0 %v1881
      %2381 = vmatpush1.bf16.msra.mxu0 %v1880
      %2382 = vmatprep.subr.bf16.mxu0 %v1885
      %2383 = vmatpush1.bf16.msra.mxu0 %v1884
      %2384 = vmatprep.subr.bf16.mxu0 %v1889
      %2385 = vmatpush1.bf16.msra.mxu0 %v1888
      %2386 = vmatprep.subr.bf16.mxu0 %v1893
      %2387 = vmatpush1.bf16.msra.mxu0 %v1892
      %2388 = vmatprep.subr.bf16.mxu0 %v1897
      %2389 = vmatpush1.bf16.msra.mxu0 %v1896
      %2390 = vmatprep.subr.bf16.mxu0 %v1901
      %2391 = vmatpush1.bf16.msra.mxu0 %v1900
      %2392 = vmatprep.subr.bf16.mxu0 %v1905
      %2393 = vmatpush1.bf16.msra.mxu0 %v1904
      %2394 = vmatprep.subr.bf16.mxu0 %v1909
      %2395 = vmatpush1.bf16.msra.mxu0 %v1908
      %2396 = vmatprep.subr.bf16.mxu0 %v1913
      %2397 = vmatpush1.bf16.msra.mxu0 %v1912
      %2398 = vmatprep.subr.bf16.mxu0 %v1917
      %2399 = vmatpush1.bf16.msra.mxu0 %v1916
      %2400 = vmatprep.mubr.bf16.mxu0 %v509
      %2401 = vmatmul.mubr.bf16.gmra.mrb[0].mxu0 %v508
      %v2402 = vpop.f32.mrb[0].mxu0
      %v2403 = vadd.f32 %v1041, %v2402
      %v2404 = vpop.f32.mrb[0].mxu0
      %v2405 = vadd.f32 %v1043, %v2404
      %v2406 = vpop.f32.mrb[0].mxu0
      %v2407 = vpop.f32.mrb[0].mxu0
      %2408 = vdwg.mxu0
      %2409 = vmatprep.subr.bf16.mxu0 %v1921
      %2410 = vmatpush1.bf16.msra.mxu0 %v1920
      %2411 = vmatprep.subr.bf16.mxu0 %v1925
      %2412 = vmatpush1.bf16.msra.mxu0 %v1924
      %2413 = vmatprep.subr.bf16.mxu0 %v1929
      %2414 = vmatpush1.bf16.msra.mxu0 %v1928
      %2415 = vmatprep.subr.bf16.mxu0 %v1933
      %2416 = vmatpush1.bf16.msra.mxu0 %v1932
      %2417 = vmatprep.subr.bf16.mxu0 %v1937
      %2418 = vmatpush1.bf16.msra.mxu0 %v1936
      %2419 = vmatprep.subr.bf16.mxu0 %v1941
      %2420 = vmatpush1.bf16.msra.mxu0 %v1940
      %2421 = vmatprep.subr.bf16.mxu0 %v1945
      %2422 = vmatpush1.bf16.msra.mxu0 %v1944
      %2423 = vmatprep.subr.bf16.mxu0 %v1949
      %2424 = vmatpush1.bf16.msra.mxu0 %v1948
      %2425 = vmatprep.subr.bf16.mxu0 %v1953
      %2426 = vmatpush1.bf16.msra.mxu0 %v1952
      %2427 = vmatprep.subr.bf16.mxu0 %v1957
      %2428 = vmatpush1.bf16.msra.mxu0 %v1956
      %2429 = vmatprep.subr.bf16.mxu0 %v1961
      %2430 = vmatpush1.bf16.msra.mxu0 %v1960
      %2431 = vmatprep.subr.bf16.mxu0 %v1965
      %2432 = vmatpush1.bf16.msra.mxu0 %v1964
      %2433 = vmatprep.subr.bf16.mxu0 %v1969
      %2434 = vmatpush1.bf16.msra.mxu0 %v1968
      %2435 = vmatprep.subr.bf16.mxu0 %v1973
      %2436 = vmatpush1.bf16.msra.mxu0 %v1972
      %2437 = vmatprep.subr.bf16.mxu0 %v1977
      %2438 = vmatpush1.bf16.msra.mxu0 %v1976
      %2439 = vmatprep.subr.bf16.mxu0 %v1981
      %2440 = vmatpush1.bf16.msra.mxu0 %v1980
      %2441 = vmatprep.mubr.bf16.mxu0 %v511
      %2442 = vmatmul.mubr.bf16.gmra.mrb[0].mxu0 %v510
      %v2443 = vpop.f32.mrb[0].mxu0
      %v2444 = vadd.f32 %v2403, %v2443
      %v2445 = vpop.f32.mrb[0].mxu0
      %v2446 = vadd.f32 %v2405, %v2445
      %v2447 = vpop.f32.mrb[0].mxu0
      %v2448 = vpop.f32.mrb[0].mxu0
      %2449 = vdwg.mxu0
      %2450 = vmatprep.subr.bf16.mxu0 %v1985
      %2451 = vmatpush1.bf16.msra.mxu0 %v1984
      %2452 = vmatprep.subr.bf16.mxu0 %v1989
      %2453 = vmatpush1.bf16.msra.mxu0 %v1988
      %2454 = vmatprep.subr.bf16.mxu0 %v1993
      %2455 = vmatpush1.bf16.msra.mxu0 %v1992
      %2456 = vmatprep.subr.bf16.mxu0 %v1997
      %2457 = vmatpush1.bf16.msra.mxu0 %v1996
      %2458 = vmatprep.subr.bf16.mxu0 %v2001
      %2459 = vmatpush1.bf16.msra.mxu0 %v2000
      %2460 = vmatprep.subr.bf16.mxu0 %v2005
      %2461 = vmatpush1.bf16.msra.mxu0 %v2004
      %2462 = vmatprep.subr.bf16.mxu0 %v2009
      %2463 = vmatpush1.bf16.msra.mxu0 %v2008
      %2464 = vmatprep.subr.bf16.mxu0 %v2013
      %2465 = vmatpush1.bf16.msra.mxu0 %v2012
      %2466 = vmatprep.subr.bf16.mxu0 %v2017
      %2467 = vmatpush1.bf16.msra.mxu0 %v2016
      %2468 = vmatprep.subr.bf16.mxu0 %v2021
      %2469 = vmatpush1.bf16.msra.mxu0 %v2020
      %2470 = vmatprep.subr.bf16.mxu0 %v2025
      %2471 = vmatpush1.bf16.msra.mxu0 %v2024
      %2472 = vmatprep.subr.bf16.mxu0 %v2029
      %2473 = vmatpush1.bf16.msra.mxu0 %v2028
      %2474 = vmatprep.subr.bf16.mxu0 %v2033
      %2475 = vmatpush1.bf16.msra.mxu0 %v2032
      %2476 = vmatprep.subr.bf16.mxu0 %v2037
      %2477 = vmatpush1.bf16.msra.mxu0 %v2036
      %2478 = vmatprep.subr.bf16.mxu0 %v2041
      %2479 = vmatpush1.bf16.msra.mxu0 %v2040
      %2480 = vmatprep.subr.bf16.mxu0 %v2045
      %2481 = vmatpush1.bf16.msra.mxu0 %v2044
      %2482 = vmatprep.mubr.bf16.mxu0 %v513
      %2483 = vmatmul.mubr.bf16.gmra.mrb[0].mxu0 %v512
      %v2484 = vpop.f32.mrb[0].mxu0
      %v2485 = vadd.f32 %v2444, %v2484
      %v2486 = vpop.f32.mrb[0].mxu0
      %v2487 = vadd.f32 %v2446, %v2486
      %v2488 = vpop.f32.mrb[0].mxu0
      %v2489 = vpop.f32.mrb[0].mxu0
      %2490 = vdwg.mxu0
      %2491 = vmatprep.subr.bf16.mxu0 %v2049
      %2492 = vmatpush1.bf16.msra.mxu0 %v2048
      %2493 = vmatprep.subr.bf16.mxu0 %v2053
      %2494 = vmatpush1.bf16.msra.mxu0 %v2052
      %2495 = vmatprep.subr.bf16.mxu0 %v2057
      %2496 = vmatpush1.bf16.msra.mxu0 %v2056
      %2497 = vmatprep.subr.bf16.mxu0 %v2061
      %2498 = vmatpush1.bf16.msra.mxu0 %v2060
      %2499 = vmatprep.subr.bf16.mxu0 %v2065
      %2500 = vmatpush1.bf16.msra.mxu0 %v2064
      %2501 = vmatprep.subr.bf16.mxu0 %v2069
      %2502 = vmatpush1.bf16.msra.mxu0 %v2068
      %2503 = vmatprep.subr.bf16.mxu0 %v2073
      %2504 = vmatpush1.bf16.msra.mxu0 %v2072
      %2505 = vmatprep.subr.bf16.mxu0 %v2077
      %2506 = vmatpush1.bf16.msra.mxu0 %v2076
      %2507 = vmatprep.subr.bf16.mxu0 %v2081
      %2508 = vmatpush1.bf16.msra.mxu0 %v2080
      %2509 = vmatprep.subr.bf16.mxu0 %v2085
      %2510 = vmatpush1.bf16.msra.mxu0 %v2084
      %2511 = vmatprep.subr.bf16.mxu0 %v2089
      %2512 = vmatpush1.bf16.msra.mxu0 %v2088
      %2513 = vmatprep.subr.bf16.mxu0 %v2093
      %2514 = vmatpush1.bf16.msra.mxu0 %v2092
      %2515 = vmatprep.subr.bf16.mxu0 %v2097
      %2516 = vmatpush1.bf16.msra.mxu0 %v2096
      %2517 = vmatprep.subr.bf16.mxu0 %v2101
      %2518 = vmatpush1.bf16.msra.mxu0 %v2100
      %2519 = vmatprep.subr.bf16.mxu0 %v2105
      %2520 = vmatpush1.bf16.msra.mxu0 %v2104
      %2521 = vmatprep.subr.bf16.mxu0 %v2109
      %2522 = vmatpush1.bf16.msra.mxu0 %v2108
      %2523 = vmatprep.mubr.bf16.mxu0 %v515
      %2524 = vmatmul.mubr.bf16.gmra.mrb[0].mxu0 %v514
      %v2525 = vpop.f32.mrb[0].mxu0
      %v2526 = vadd.f32 %v2485, %v2525
      %v2527 = vpop.f32.mrb[0].mxu0
      %v2528 = vadd.f32 %v2487, %v2527
      %v2529 = vpop.f32.mrb[0].mxu0
      %v2530 = vpop.f32.mrb[0].mxu0
      %2531 = vdwg.mxu0
      %2532 = vmatprep.subr.bf16.mxu0 %v1859
      %2533 = vmatpush1.bf16.msra.mxu0 %v1858
      %2534 = vmatprep.subr.bf16.mxu0 %v1863
      %2535 = vmatpush1.bf16.msra.mxu0 %v1862
      %2536 = vmatprep.subr.bf16.mxu0 %v1867
      %2537 = vmatpush1.bf16.msra.mxu0 %v1866
      %2538 = vmatprep.subr.bf16.mxu0 %v1871
      %2539 = vmatpush1.bf16.msra.mxu0 %v1870
      %2540 = vmatprep.subr.bf16.mxu0 %v1875
      %2541 = vmatpush1.bf16.msra.mxu0 %v1874
      %2542 = vmatprep.subr.bf16.mxu0 %v1879
      %2543 = vmatpush1.bf16.msra.mxu0 %v1878
      %2544 = vmatprep.subr.bf16.mxu0 %v1883
      %2545 = vmatpush1.bf16.msra.mxu0 %v1882
      %2546 = vmatprep.subr.bf16.mxu0 %v1887
      %2547 = vmatpush1.bf16.msra.mxu0 %v1886
      %2548 = vmatprep.subr.bf16.mxu0 %v1891
      %2549 = vmatpush1.bf16.msra.mxu0 %v1890
      %2550 = vmatprep.subr.bf16.mxu0 %v1895
      %2551 = vmatpush1.bf16.msra.mxu0 %v1894
      %2552 = vmatprep.subr.bf16.mxu0 %v1899
      %2553 = vmatpush1.bf16.msra.mxu0 %v1898
      %2554 = vmatprep.subr.bf16.mxu0 %v1903
      %2555 = vmatpush1.bf16.msra.mxu0 %v1902
      %2556 = vmatprep.subr.bf16.mxu0 %v1907
      %2557 = vmatpush1.bf16.msra.mxu0 %v1906
      %2558 = vmatprep.subr.bf16.mxu0 %v1911
      %2559 = vmatpush1.bf16.msra.mxu0 %v1910
      %2560 = vmatprep.subr.bf16.mxu0 %v1915
      %2561 = vmatpush1.bf16.msra.mxu0 %v1914
      %2562 = vmatprep.subr.bf16.mxu0 %v1919
      %2563 = vmatpush1.bf16.msra.mxu0 %v1918
      %2564 = vmatprep.mubr.bf16.mxu0 %v509
      %2565 = vmatmul.mubr.bf16.gmra.mrb[0].mxu0 %v508
      %v2566 = vpop.f32.mrb[0].mxu0
      %v2567 = vadd.f32 %v1082, %v2566
      %v2568 = vpop.f32.mrb[0].mxu0
      %v2569 = vadd.f32 %v1084, %v2568
      %v2570 = vpop.f32.mrb[0].mxu0
      %v2571 = vpop.f32.mrb[0].mxu0
      %2572 = vdwg.mxu0
      %2573 = vmatprep.subr.bf16.mxu0 %v1923
      %2574 = vmatpush1.bf16.msra.mxu0 %v1922
      %2575 = vmatprep.subr.bf16.mxu0 %v1927
      %2576 = vmatpush1.bf16.msra.mxu0 %v1926
      %2577 = vmatprep.subr.bf16.mxu0 %v1931
      %2578 = vmatpush1.bf16.msra.mxu0 %v1930
      %2579 = vmatprep.subr.bf16.mxu0 %v1935
      %2580 = vmatpush1.bf16.msra.mxu0 %v1934
      %2581 = vmatprep.subr.bf16.mxu0 %v1939
      %2582 = vmatpush1.bf16.msra.mxu0 %v1938
      %2583 = vmatprep.subr.bf16.mxu0 %v1943
      %2584 = vmatpush1.bf16.msra.mxu0 %v1942
      %2585 = vmatprep.subr.bf16.mxu0 %v1947
      %2586 = vmatpush1.bf16.msra.mxu0 %v1946
      %2587 = vmatprep.subr.bf16.mxu0 %v1951
      %2588 = vmatpush1.bf16.msra.mxu0 %v1950
      %2589 = vmatprep.subr.bf16.mxu0 %v1955
      %2590 = vmatpush1.bf16.msra.mxu0 %v1954
      %2591 = vmatprep.subr.bf16.mxu0 %v1959
      %2592 = vmatpush1.bf16.msra.mxu0 %v1958
      %2593 = vmatprep.subr.bf16.mxu0 %v1963
      %2594 = vmatpush1.bf16.msra.mxu0 %v1962
      %2595 = vmatprep.subr.bf16.mxu0 %v1967
      %2596 = vmatpush1.bf16.msra.mxu0 %v1966
      %2597 = vmatprep.subr.bf16.mxu0 %v1971
      %2598 = vmatpush1.bf16.msra.mxu0 %v1970
      %2599 = vmatprep.subr.bf16.mxu0 %v1975
      %2600 = vmatpush1.bf16.msra.mxu0 %v1974
      %2601 = vmatprep.subr.bf16.mxu0 %v1979
      %2602 = vmatpush1.bf16.msra.mxu0 %v1978
      %2603 = vmatprep.subr.bf16.mxu0 %v1983
      %2604 = vmatpush1.bf16.msra.mxu0 %v1982
      %2605 = vmatprep.mubr.bf16.mxu0 %v511
      %2606 = vmatmul.mubr.bf16.gmra.mrb[0].mxu0 %v510
      %v2607 = vpop.f32.mrb[0].mxu0
      %v2608 = vadd.f32 %v2567, %v2607
      %v2609 = vpop.f32.mrb[0].mxu0
      %v2610 = vadd.f32 %v2569, %v2609
      %v2611 = vpop.f32.mrb[0].mxu0
      %v2612 = vpop.f32.mrb[0].mxu0
      %2613 = vdwg.mxu0
      %2614 = vmatprep.subr.bf16.mxu0 %v1987
      %2615 = vmatpush1.bf16.msra.mxu0 %v1986
      %2616 = vmatprep.subr.bf16.mxu0 %v1991
      %2617 = vmatpush1.bf16.msra.mxu0 %v1990
      %2618 = vmatprep.subr.bf16.mxu0 %v1995
      %2619 = vmatpush1.bf16.msra.mxu0 %v1994
      %2620 = vmatprep.subr.bf16.mxu0 %v1999
      %2621 = vmatpush1.bf16.msra.mxu0 %v1998
      %2622 = vmatprep.subr.bf16.mxu0 %v2003
      %2623 = vmatpush1.bf16.msra.mxu0 %v2002
      %2624 = vmatprep.subr.bf16.mxu0 %v2007
      %2625 = vmatpush1.bf16.msra.mxu0 %v2006
      %2626 = vmatprep.subr.bf16.mxu0 %v2011
      %2627 = vmatpush1.bf16.msra.mxu0 %v2010
      %2628 = vmatprep.subr.bf16.mxu0 %v2015
      %2629 = vmatpush1.bf16.msra.mxu0 %v2014
      %2630 = vmatprep.subr.bf16.mxu0 %v2019
      %2631 = vmatpush1.bf16.msra.mxu0 %v2018
      %2632 = vmatprep.subr.bf16.mxu0 %v2023
      %2633 = vmatpush1.bf16.msra.mxu0 %v2022
      %2634 = vmatprep.subr.bf16.mxu0 %v2027
      %2635 = vmatpush1.bf16.msra.mxu0 %v2026
      %2636 = vmatprep.subr.bf16.mxu0 %v2031
      %2637 = vmatpush1.bf16.msra.mxu0 %v2030
      %2638 = vmatprep.subr.bf16.mxu0 %v2035
      %2639 = vmatpush1.bf16.msra.mxu0 %v2034
      %2640 = vmatprep.subr.bf16.mxu0 %v2039
      %2641 = vmatpush1.bf16.msra.mxu0 %v2038
      %2642 = vmatprep.subr.bf16.mxu0 %v2043
      %2643 = vmatpush1.bf16.msra.mxu0 %v2042
      %2644 = vmatprep.subr.bf16.mxu0 %v2047
      %2645 = vmatpush1.bf16.msra.mxu0 %v2046
      %2646 = vmatprep.mubr.bf16.mxu0 %v513
      %2647 = vmatmul.mubr.bf16.gmra.mrb[0].mxu0 %v512
      %v2648 = vpop.f32.mrb[0].mxu0
      %v2649 = vadd.f32 %v2608, %v2648
      %v2650 = vpop.f32.mrb[0].mxu0
      %v2651 = vadd.f32 %v2610, %v2650
      %v2652 = vpop.f32.mrb[0].mxu0
      %v2653 = vpop.f32.mrb[0].mxu0
      %2654 = vdwg.mxu0
      %2655 = vmatprep.subr.bf16.mxu0 %v2051
      %2656 = vmatpush1.bf16.msra.mxu0 %v2050
      %2657 = vmatprep.subr.bf16.mxu0 %v2055
      %2658 = vmatpush1.bf16.msra.mxu0 %v2054
      %2659 = vmatprep.subr.bf16.mxu0 %v2059
      %2660 = vmatpush1.bf16.msra.mxu0 %v2058
      %2661 = vmatprep.subr.bf16.mxu0 %v2063
      %2662 = vmatpush1.bf16.msra.mxu0 %v2062
      %2663 = vmatprep.subr.bf16.mxu0 %v2067
      %2664 = vmatpush1.bf16.msra.mxu0 %v2066
      %2665 = vmatprep.subr.bf16.mxu0 %v2071
      %2666 = vmatpush1.bf16.msra.mxu0 %v2070
      %2667 = vmatprep.subr.bf16.mxu0 %v2075
      %2668 = vmatpush1.bf16.msra.mxu0 %v2074
      %2669 = vmatprep.subr.bf16.mxu0 %v2079
      %2670 = vmatpush1.bf16.msra.mxu0 %v2078
      %2671 = vmatprep.subr.bf16.mxu0 %v2083
      %2672 = vmatpush1.bf16.msra.mxu0 %v2082
      %2673 = vmatprep.subr.bf16.mxu0 %v2087
      %2674 = vmatpush1.bf16.msra.mxu0 %v2086
      %2675 = vmatprep.subr.bf16.mxu0 %v2091
      %2676 = vmatpush1.bf16.msra.mxu0 %v2090
      %2677 = vmatprep.subr.bf16.mxu0 %v2095
      %2678 = vmatpush1.bf16.msra.mxu0 %v2094
      %2679 = vmatprep.subr.bf16.mxu0 %v2099
      %2680 = vmatpush1.bf16.msra.mxu0 %v2098
      %2681 = vmatprep.subr.bf16.mxu0 %v2103
      %2682 = vmatpush1.bf16.msra.mxu0 %v2102
      %2683 = vmatprep.subr.bf16.mxu0 %v2107
      %2684 = vmatpush1.bf16.msra.mxu0 %v2106
      %2685 = vmatprep.subr.bf16.mxu0 %v2111
      %2686 = vmatpush1.bf16.msra.mxu0 %v2110
      %2687 = vmatprep.mubr.bf16.mxu0 %v515
      %2688 = vmatmul.mubr.bf16.gmra.mrb[0].mxu0 %v514
      %v2689 = vpop.f32.mrb[0].mxu0
      %v2690 = vadd.f32 %v2649, %v2689
      %v2691 = vpop.f32.mrb[0].mxu0
      %v2692 = vadd.f32 %v2651, %v2691
      %v2693 = vpop.f32.mrb[0].mxu0
      %v2694 = vpop.f32.mrb[0].mxu0
      %2695 = vdwg.mxu0
      %v2696 = vld [vmem:[%s6] sm:$0xf]
      %v2698 = vlaneseq
      %v2699 = vshrl.u32 %v2698, 7
      %v2700 = vsub.s32 0, %v2699
      %v2701 = vrot.slane %v2696, %v2700
      %v2702 = vlaneseq
      %v2703 = vshrl.u32 %v2702, 7
      %v2704 = vsub.s32 1, %v2703
      %v2705 = vrot.slane %v2696, %v2704
      %v2706 = vlaneseq
      %v2707 = vshrl.u32 %v2706, 7
      %v2708 = vsub.s32 2, %v2707
      %v2709 = vrot.slane %v2696, %v2708
      %v2710 = vlaneseq
      %v2711 = vshrl.u32 %v2710, 7
      %v2712 = vsub.s32 3, %v2711
      %v2713 = vrot.slane %v2696, %v2712
      %v2718 = vadd.f32 %v2526, %v2701
      %v2719 = vadd.f32 %v2528, %v2705
      %v2720 = vadd.f32 %v2690, %v2709
      %v2721 = vadd.f32 %v2692, %v2713
      %v2722 = vmax.f32 %v2718, 0.0
      %v2723 = vmax.f32 %v2719, 0.0
      %v2724 = vmax.f32 %v2720, 0.0
      %v2725 = vmax.f32 %v2721, 0.0
      %v2726 = vpack.c.bf16 %v2722, %v2722
      %v2727 = vpack.c.bf16 %v2723, %v2723
      %v2728 = vpack.c.bf16 %v2724, %v2724
      %v2729 = vpack.c.bf16 %v2725, %v2725
      %v2730 = vld [vmem:[#allocation8] sm:$0xff]
      %v2731 = vld [vmem:[#allocation8 + $0x8] sm:$0xff]
      %v2732 = vld [vmem:[#allocation8 + $0x10] sm:$0xff]
      %v2733 = vld [vmem:[#allocation8 + $0x18] sm:$0xff]
      %v2734 = vld [vmem:[#allocation8 + $0x20] sm:$0xff]
      %v2735 = vld [vmem:[#allocation8 + $0x28] sm:$0xff]
      %v2736 = vld [vmem:[#allocation8 + $0x30] sm:$0xff]
      %v2737 = vld [vmem:[#allocation8 + $0x38] sm:$0xff]
      %v2738 = vld [vmem:[#allocation8 + $0x40] sm:$0xff]
      %v2739 = vld [vmem:[#allocation8 + $0x48] sm:$0xff]
      %v2740 = vld [vmem:[#allocation8 + $0x50] sm:$0xff]
      %v2741 = vld [vmem:[#allocation8 + $0x58] sm:$0xff]
      %v2742 = vld [vmem:[#allocation8 + $0x60] sm:$0xff]
      %v2743 = vld [vmem:[#allocation8 + $0x68] sm:$0xff]
      %v2744 = vld [vmem:[#allocation8 + $0x70] sm:$0xff]
      %v2745 = vld [vmem:[#allocation8 + $0x78] sm:$0xff]
      %v2746 = vld [vmem:[#allocation8 + $0x80] sm:$0xff]
      %v2747 = vld [vmem:[#allocation8 + $0x88] sm:$0xff]
      %v2748 = vld [vmem:[#allocation8 + $0x90] sm:$0xff]
      %v2749 = vld [vmem:[#allocation8 + $0x98] sm:$0xff]
      %v2750 = vld [vmem:[#allocation8 + $0xa0] sm:$0xff]
      %v2751 = vld [vmem:[#allocation8 + $0xa8] sm:$0xff]
      %v2752 = vld [vmem:[#allocation8 + $0xb0] sm:$0xff]
      %v2753 = vld [vmem:[#allocation8 + $0xb8] sm:$0xff]
      %v2754 = vld [vmem:[#allocation8 + $0xc0] sm:$0xff]
      %v2755 = vld [vmem:[#allocation8 + $0xc8] sm:$0xff]
      %v2756 = vld [vmem:[#allocation8 + $0xd0] sm:$0xff]
      %v2757 = vld [vmem:[#allocation8 + $0xd8] sm:$0xff]
      %v2758 = vld [vmem:[#allocation8 + $0xe0] sm:$0xff]
      %v2759 = vld [vmem:[#allocation8 + $0xe8] sm:$0xff]
      %v2760 = vld [vmem:[#allocation8 + $0xf0] sm:$0xff]
      %v2761 = vld [vmem:[#allocation8 + $0xf8] sm:$0xff]
      %v2762 = vld [vmem:[#allocation8 + $0x100] sm:$0xff]
      %v2763 = vld [vmem:[#allocation8 + $0x108] sm:$0xff]
      %v2764 = vld [vmem:[#allocation8 + $0x110] sm:$0xff]
      %v2765 = vld [vmem:[#allocation8 + $0x118] sm:$0xff]
      %v2766 = vld [vmem:[#allocation8 + $0x120] sm:$0xff]
      %v2767 = vld [vmem:[#allocation8 + $0x128] sm:$0xff]
      %v2768 = vld [vmem:[#allocation8 + $0x130] sm:$0xff]
      %v2769 = vld [vmem:[#allocation8 + $0x138] sm:$0xff]
      %v2770 = vld [vmem:[#allocation8 + $0x140] sm:$0xff]
      %v2771 = vld [vmem:[#allocation8 + $0x148] sm:$0xff]
      %v2772 = vld [vmem:[#allocation8 + $0x150] sm:$0xff]
      %v2773 = vld [vmem:[#allocation8 + $0x158] sm:$0xff]
      %v2774 = vld [vmem:[#allocation8 + $0x160] sm:$0xff]
      %v2775 = vld [vmem:[#allocation8 + $0x168] sm:$0xff]
      %v2776 = vld [vmem:[#allocation8 + $0x170] sm:$0xff]
      %v2777 = vld [vmem:[#allocation8 + $0x178] sm:$0xff]
      %v2778 = vld [vmem:[#allocation8 + $0x180] sm:$0xff]
      %v2779 = vld [vmem:[#allocation8 + $0x188] sm:$0xff]
      %v2780 = vld [vmem:[#allocation8 + $0x190] sm:$0xff]
      %v2781 = vld [vmem:[#allocation8 + $0x198] sm:$0xff]
      %v2782 = vld [vmem:[#allocation8 + $0x1a0] sm:$0xff]
      %v2783 = vld [vmem:[#allocation8 + $0x1a8] sm:$0xff]
      %v2784 = vld [vmem:[#allocation8 + $0x1b0] sm:$0xff]
      %v2785 = vld [vmem:[#allocation8 + $0x1b8] sm:$0xff]
      %v2786 = vld [vmem:[#allocation8 + $0x1c0] sm:$0xff]
      %v2787 = vld [vmem:[#allocation8 + $0x1c8] sm:$0xff]
      %v2788 = vld [vmem:[#allocation8 + $0x1d0] sm:$0xff]
      %v2789 = vld [vmem:[#allocation8 + $0x1d8] sm:$0xff]
      %v2790 = vld [vmem:[#allocation8 + $0x1e0] sm:$0xff]
      %v2791 = vld [vmem:[#allocation8 + $0x1e8] sm:$0xff]
      %v2792 = vld [vmem:[#allocation8 + $0x1f0] sm:$0xff]
      %v2793 = vld [vmem:[#allocation8 + $0x1f8] sm:$0xff]
      %v2794 = vld [vmem:[%s8] sm:$0x3]
      %v2796 = vlaneseq
      %v2797 = vshrl.u32 %v2796, 7
      %v2798 = vsub.s32 0, %v2797
      %v2799 = vrot.slane %v2794, %v2798
      %v2800 = vlaneseq
      %v2801 = vshrl.u32 %v2800, 7
      %v2802 = vsub.s32 1, %v2801
      %v2803 = vrot.slane %v2794, %v2802
      %v2870 = vunpack.c.l.b16 %v2730
      %v2871 = vunpack.c.h.b16 %v2730
      %v2872 = vunpack.c.l.b16 %v2731
      %v2873 = vunpack.c.h.b16 %v2731
      %v2874 = vunpack.c.l.b16 %v2732
      %v2875 = vunpack.c.h.b16 %v2732
      %v2876 = vunpack.c.l.b16 %v2733
      %v2877 = vunpack.c.h.b16 %v2733
      %v2878 = vunpack.c.l.b16 %v2734
      %v2879 = vunpack.c.h.b16 %v2734
      %v2880 = vunpack.c.l.b16 %v2735
      %v2881 = vunpack.c.h.b16 %v2735
      %v2882 = vunpack.c.l.b16 %v2736
      %v2883 = vunpack.c.h.b16 %v2736
      %v2884 = vunpack.c.l.b16 %v2737
      %v2885 = vunpack.c.h.b16 %v2737
      %v2886 = vunpack.c.l.b16 %v2738
      %v2887 = vunpack.c.h.b16 %v2738
      %v2888 = vunpack.c.l.b16 %v2739
      %v2889 = vunpack.c.h.b16 %v2739
      %v2890 = vunpack.c.l.b16 %v2740
      %v2891 = vunpack.c.h.b16 %v2740
      %v2892 = vunpack.c.l.b16 %v2741
      %v2893 = vunpack.c.h.b16 %v2741
      %v2894 = vunpack.c.l.b16 %v2742
      %v2895 = vunpack.c.h.b16 %v2742
      %v2896 = vunpack.c.l.b16 %v2743
      %v2897 = vunpack.c.h.b16 %v2743
      %v2898 = vunpack.c.l.b16 %v2744
      %v2899 = vunpack.c.h.b16 %v2744
      %v2900 = vunpack.c.l.b16 %v2745
      %v2901 = vunpack.c.h.b16 %v2745
      %v2902 = vunpack.c.l.b16 %v2746
      %v2903 = vunpack.c.h.b16 %v2746
      %v2904 = vunpack.c.l.b16 %v2747
      %v2905 = vunpack.c.h.b16 %v2747
      %v2906 = vunpack.c.l.b16 %v2748
      %v2907 = vunpack.c.h.b16 %v2748
      %v2908 = vunpack.c.l.b16 %v2749
      %v2909 = vunpack.c.h.b16 %v2749
      %v2910 = vunpack.c.l.b16 %v2750
      %v2911 = vunpack.c.h.b16 %v2750
      %v2912 = vunpack.c.l.b16 %v2751
      %v2913 = vunpack.c.h.b16 %v2751
      %v2914 = vunpack.c.l.b16 %v2752
      %v2915 = vunpack.c.h.b16 %v2752
      %v2916 = vunpack.c.l.b16 %v2753
      %v2917 = vunpack.c.h.b16 %v2753
      %v2918 = vunpack.c.l.b16 %v2754
      %v2919 = vunpack.c.h.b16 %v2754
      %v2920 = vunpack.c.l.b16 %v2755
      %v2921 = vunpack.c.h.b16 %v2755
      %v2922 = vunpack.c.l.b16 %v2756
      %v2923 = vunpack.c.h.b16 %v2756
      %v2924 = vunpack.c.l.b16 %v2757
      %v2925 = vunpack.c.h.b16 %v2757
      %v2926 = vunpack.c.l.b16 %v2758
      %v2927 = vunpack.c.h.b16 %v2758
      %v2928 = vunpack.c.l.b16 %v2759
      %v2929 = vunpack.c.h.b16 %v2759
      %v2930 = vunpack.c.l.b16 %v2760
      %v2931 = vunpack.c.h.b16 %v2760
      %v2932 = vunpack.c.l.b16 %v2761
      %v2933 = vunpack.c.h.b16 %v2761
      %v2934 = vunpack.c.l.b16 %v2762
      %v2935 = vunpack.c.h.b16 %v2762
      %v2936 = vunpack.c.l.b16 %v2763
      %v2937 = vunpack.c.h.b16 %v2763
      %v2938 = vunpack.c.l.b16 %v2764
      %v2939 = vunpack.c.h.b16 %v2764
      %v2940 = vunpack.c.l.b16 %v2765
      %v2941 = vunpack.c.h.b16 %v2765
      %v2942 = vunpack.c.l.b16 %v2766
      %v2943 = vunpack.c.h.b16 %v2766
      %v2944 = vunpack.c.l.b16 %v2767
      %v2945 = vunpack.c.h.b16 %v2767
      %v2946 = vunpack.c.l.b16 %v2768
      %v2947 = vunpack.c.h.b16 %v2768
      %v2948 = vunpack.c.l.b16 %v2769
      %v2949 = vunpack.c.h.b16 %v2769
      %v2950 = vunpack.c.l.b16 %v2770
      %v2951 = vunpack.c.h.b16 %v2770
      %v2952 = vunpack.c.l.b16 %v2771
      %v2953 = vunpack.c.h.b16 %v2771
      %v2954 = vunpack.c.l.b16 %v2772
      %v2955 = vunpack.c.h.b16 %v2772
      %v2956 = vunpack.c.l.b16 %v2773
      %v2957 = vunpack.c.h.b16 %v2773
      %v2958 = vunpack.c.l.b16 %v2774
      %v2959 = vunpack.c.h.b16 %v2774
      %v2960 = vunpack.c.l.b16 %v2775
      %v2961 = vunpack.c.h.b16 %v2775
      %v2962 = vunpack.c.l.b16 %v2776
      %v2963 = vunpack.c.h.b16 %v2776
      %v2964 = vunpack.c.l.b16 %v2777
      %v2965 = vunpack.c.h.b16 %v2777
      %v2966 = vunpack.c.l.b16 %v2778
      %v2967 = vunpack.c.h.b16 %v2778
      %v2968 = vunpack.c.l.b16 %v2779
      %v2969 = vunpack.c.h.b16 %v2779
      %v2970 = vunpack.c.l.b16 %v2780
      %v2971 = vunpack.c.h.b16 %v2780
      %v2972 = vunpack.c.l.b16 %v2781
      %v2973 = vunpack.c.h.b16 %v2781
      %v2974 = vunpack.c.l.b16 %v2782
      %v2975 = vunpack.c.h.b16 %v2782
      %v2976 = vunpack.c.l.b16 %v2783
      %v2977 = vunpack.c.h.b16 %v2783
      %v2978 = vunpack.c.l.b16 %v2784
      %v2979 = vunpack.c.h.b16 %v2784
      %v2980 = vunpack.c.l.b16 %v2785
      %v2981 = vunpack.c.h.b16 %v2785
      %v2982 = vunpack.c.l.b16 %v2786
      %v2983 = vunpack.c.h.b16 %v2786
      %v2984 = vunpack.c.l.b16 %v2787
      %v2985 = vunpack.c.h.b16 %v2787
      %v2986 = vunpack.c.l.b16 %v2788
      %v2987 = vunpack.c.h.b16 %v2788
      %v2988 = vunpack.c.l.b16 %v2789
      %v2989 = vunpack.c.h.b16 %v2789
      %v2990 = vunpack.c.l.b16 %v2790
      %v2991 = vunpack.c.h.b16 %v2790
      %v2992 = vunpack.c.l.b16 %v2791
      %v2993 = vunpack.c.h.b16 %v2791
      %v2994 = vunpack.c.l.b16 %v2792
      %v2995 = vunpack.c.h.b16 %v2792
      %v2996 = vunpack.c.l.b16 %v2793
      %v2997 = vunpack.c.h.b16 %v2793
      %v2998 = vpack.c.b16 %v2872, %v2870
      %v2999 = vpack.c.b16 %v2873, %v2871
      %v3000 = vpack.c.b16 %v2876, %v2874
      %v3001 = vpack.c.b16 %v2877, %v2875
      %v3002 = vpack.c.b16 %v2880, %v2878
      %v3003 = vpack.c.b16 %v2881, %v2879
      %v3004 = vpack.c.b16 %v2884, %v2882
      %v3005 = vpack.c.b16 %v2885, %v2883
      %v3006 = vpack.c.b16 %v2888, %v2886
      %v3007 = vpack.c.b16 %v2889, %v2887
      %v3008 = vpack.c.b16 %v2892, %v2890
      %v3009 = vpack.c.b16 %v2893, %v2891
      %v3010 = vpack.c.b16 %v2896, %v2894
      %v3011 = vpack.c.b16 %v2897, %v2895
      %v3012 = vpack.c.b16 %v2900, %v2898
      %v3013 = vpack.c.b16 %v2901, %v2899
      %v3014 = vpack.c.b16 %v2904, %v2902
      %v3015 = vpack.c.b16 %v2905, %v2903
      %v3016 = vpack.c.b16 %v2908, %v2906
      %v3017 = vpack.c.b16 %v2909, %v2907
      %v3018 = vpack.c.b16 %v2912, %v2910
      %v3019 = vpack.c.b16 %v2913, %v2911
      %v3020 = vpack.c.b16 %v2916, %v2914
      %v3021 = vpack.c.b16 %v2917, %v2915
      %v3022 = vpack.c.b16 %v2920, %v2918
      %v3023 = vpack.c.b16 %v2921, %v2919
      %v3024 = vpack.c.b16 %v2924, %v2922
      %v3025 = vpack.c.b16 %v2925, %v2923
      %v3026 = vpack.c.b16 %v2928, %v2926
      %v3027 = vpack.c.b16 %v2929, %v2927
      %v3028 = vpack.c.b16 %v2932, %v2930
      %v3029 = vpack.c.b16 %v2933, %v2931
      %v3030 = vpack.c.b16 %v2936, %v2934
      %v3031 = vpack.c.b16 %v2937, %v2935
      %v3032 = vpack.c.b16 %v2940, %v2938
      %v3033 = vpack.c.b16 %v2941, %v2939
      %v3034 = vpack.c.b16 %v2944, %v2942
      %v3035 = vpack.c.b16 %v2945, %v2943
      %v3036 = vpack.c.b16 %v2948, %v2946
      %v3037 = vpack.c.b16 %v2949, %v2947
      %v3038 = vpack.c.b16 %v2952, %v2950
      %v3039 = vpack.c.b16 %v2953, %v2951
      %v3040 = vpack.c.b16 %v2956, %v2954
      %v3041 = vpack.c.b16 %v2957, %v2955
      %v3042 = vpack.c.b16 %v2960, %v2958
      %v3043 = vpack.c.b16 %v2961, %v2959
      %v3044 = vpack.c.b16 %v2964, %v2962
      %v3045 = vpack.c.b16 %v2965, %v2963
      %v3046 = vpack.c.b16 %v2968, %v2966
      %v3047 = vpack.c.b16 %v2969, %v2967
      %v3048 = vpack.c.b16 %v2972, %v2970
      %v3049 = vpack.c.b16 %v2973, %v2971
      %v3050 = vpack.c.b16 %v2976, %v2974
      %v3051 = vpack.c.b16 %v2977, %v2975
      %v3052 = vpack.c.b16 %v2980, %v2978
      %v3053 = vpack.c.b16 %v2981, %v2979
      %v3054 = vpack.c.b16 %v2984, %v2982
      %v3055 = vpack.c.b16 %v2985, %v2983
      %v3056 = vpack.c.b16 %v2988, %v2986
      %v3057 = vpack.c.b16 %v2989, %v2987
      %v3058 = vpack.c.b16 %v2992, %v2990
      %v3059 = vpack.c.b16 %v2993, %v2991
      %v3060 = vpack.c.b16 %v2996, %v2994
      %v3061 = vpack.c.b16 %v2997, %v2995
      %3126 = vmatprep.subr.bf16.mxu0 %v2999
      %3127 = vmatpush1.bf16.msra.mxu0 %v2998
      %3128 = vmatprep.subr.bf16.mxu0 %v3001
      %3129 = vmatpush1.bf16.msra.mxu0 %v3000
      %3130 = vmatprep.subr.bf16.mxu0 %v3003
      %3131 = vmatpush1.bf16.msra.mxu0 %v3002
      %3132 = vmatprep.subr.bf16.mxu0 %v3005
      %3133 = vmatpush1.bf16.msra.mxu0 %v3004
      %3134 = vmatprep.subr.bf16.mxu0 %v3007
      %3135 = vmatpush1.bf16.msra.mxu0 %v3006
      %3136 = vmatprep.subr.bf16.mxu0 %v3009
      %3137 = vmatpush1.bf16.msra.mxu0 %v3008
      %3138 = vmatprep.subr.bf16.mxu0 %v3011
      %3139 = vmatpush1.bf16.msra.mxu0 %v3010
      %3140 = vmatprep.subr.bf16.mxu0 %v3013
      %3141 = vmatpush1.bf16.msra.mxu0 %v3012
      %3142 = vmatprep.subr.bf16.mxu0 %v3015
      %3143 = vmatpush1.bf16.msra.mxu0 %v3014
      %3144 = vmatprep.subr.bf16.mxu0 %v3017
      %3145 = vmatpush1.bf16.msra.mxu0 %v3016
      %3146 = vmatprep.subr.bf16.mxu0 %v3019
      %3147 = vmatpush1.bf16.msra.mxu0 %v3018
      %3148 = vmatprep.subr.bf16.mxu0 %v3021
      %3149 = vmatpush1.bf16.msra.mxu0 %v3020
      %3150 = vmatprep.subr.bf16.mxu0 %v3023
      %3151 = vmatpush1.bf16.msra.mxu0 %v3022
      %3152 = vmatprep.subr.bf16.mxu0 %v3025
      %3153 = vmatpush1.bf16.msra.mxu0 %v3024
      %3154 = vmatprep.subr.bf16.mxu0 %v3027
      %3155 = vmatpush1.bf16.msra.mxu0 %v3026
      %3156 = vmatprep.subr.bf16.mxu0 %v3029
      %3157 = vmatpush1.bf16.msra.mxu0 %v3028
      %3158 = vmatprep.mubr.bf16.mxu0 %v2727
      %3159 = vmatmul.mubr.bf16.gmra.mrb[0].mxu0 %v2726
      %v3160 = vpop.f32.mrb[0].mxu0
      %v3161 = vadd.f32 %v2799, %v3160
      %v3162 = vpop.f32.mrb[0].mxu0
      %v3163 = vadd.f32 %v2803, %v3162
      %v3164 = vpop.f32.mrb[0].mxu0
      %v3165 = vpop.f32.mrb[0].mxu0
      %3166 = vdwg.mxu0
      %3167 = vmatprep.subr.bf16.mxu0 %v3031
      %3168 = vmatpush1.bf16.msra.mxu0 %v3030
      %3169 = vmatprep.subr.bf16.mxu0 %v3033
      %3170 = vmatpush1.bf16.msra.mxu0 %v3032
      %3171 = vmatprep.subr.bf16.mxu0 %v3035
      %3172 = vmatpush1.bf16.msra.mxu0 %v3034
      %3173 = vmatprep.subr.bf16.mxu0 %v3037
      %3174 = vmatpush1.bf16.msra.mxu0 %v3036
      %3175 = vmatprep.subr.bf16.mxu0 %v3039
      %3176 = vmatpush1.bf16.msra.mxu0 %v3038
      %3177 = vmatprep.subr.bf16.mxu0 %v3041
      %3178 = vmatpush1.bf16.msra.mxu0 %v3040
      %3179 = vmatprep.subr.bf16.mxu0 %v3043
      %3180 = vmatpush1.bf16.msra.mxu0 %v3042
      %3181 = vmatprep.subr.bf16.mxu0 %v3045
      %3182 = vmatpush1.bf16.msra.mxu0 %v3044
      %3183 = vmatprep.subr.bf16.mxu0 %v3047
      %3184 = vmatpush1.bf16.msra.mxu0 %v3046
      %3185 = vmatprep.subr.bf16.mxu0 %v3049
      %3186 = vmatpush1.bf16.msra.mxu0 %v3048
      %3187 = vmatprep.subr.bf16.mxu0 %v3051
      %3188 = vmatpush1.bf16.msra.mxu0 %v3050
      %3189 = vmatprep.subr.bf16.mxu0 %v3053
      %3190 = vmatpush1.bf16.msra.mxu0 %v3052
      %3191 = vmatprep.subr.bf16.mxu0 %v3055
      %3192 = vmatpush1.bf16.msra.mxu0 %v3054
      %3193 = vmatprep.subr.bf16.mxu0 %v3057
      %3194 = vmatpush1.bf16.msra.mxu0 %v3056
      %3195 = vmatprep.subr.bf16.mxu0 %v3059
      %3196 = vmatpush1.bf16.msra.mxu0 %v3058
      %3197 = vmatprep.subr.bf16.mxu0 %v3061
      %3198 = vmatpush1.bf16.msra.mxu0 %v3060
      %3199 = vmatprep.mubr.bf16.mxu0 %v2729
      %3200 = vmatmul.mubr.bf16.gmra.mrb[0].mxu0 %v2728
      %v3201 = vpop.f32.mrb[0].mxu0
      %v3202 = vadd.f32 %v3161, %v3201
      %v3203 = vpop.f32.mrb[0].mxu0
      %v3204 = vadd.f32 %v3163, %v3203
      %v3205 = vpop.f32.mrb[0].mxu0
      %v3206 = vpop.f32.mrb[0].mxu0
      %3207 = vdwg.mxu0
      %v3208 = vmax.f32 %v3202, 0.0
      %v3209 = vmax.f32 %v3204, 0.0
      %v3210 = vpack.c.bf16 %v3208, %v3208
      %v3211 = vpack.c.bf16 %v3209, %v3209
      %v3212 = vld [vmem:[%s9] sm:$0xf]
      %v3213 = vld [vmem:[%s9 + $0x4] sm:$0xf]
      %v3214 = vld [vmem:[%s9 + $0x8] sm:$0xf]
      %v3215 = vld [vmem:[%s9 + $0xc] sm:$0xf]
      %v3216 = vld [vmem:[%s9 + $0x10] sm:$0xf]
      %v3217 = vld [vmem:[%s9 + $0x14] sm:$0xf]
      %v3218 = vld [vmem:[%s9 + $0x18] sm:$0xf]
      %v3219 = vld [vmem:[%s9 + $0x1c] sm:$0xf]
      %v3220 = vld [vmem:[%s9 + $0x20] sm:$0xf]
      %v3221 = vld [vmem:[%s9 + $0x24] sm:$0xf]
      %v3222 = vld [vmem:[%s9 + $0x28] sm:$0xf]
      %v3223 = vld [vmem:[%s9 + $0x2c] sm:$0xf]
      %v3224 = vld [vmem:[%s9 + $0x30] sm:$0xf]
      %v3225 = vld [vmem:[%s9 + $0x34] sm:$0xf]
      %v3226 = vld [vmem:[%s9 + $0x38] sm:$0xf]
      %v3227 = vld [vmem:[%s9 + $0x3c] sm:$0xf]
      %v3228 = vld [vmem:[%s9 + $0x40] sm:$0xf]
      %v3229 = vld [vmem:[%s9 + $0x44] sm:$0xf]
      %v3230 = vld [vmem:[%s9 + $0x48] sm:$0xf]
      %v3231 = vld [vmem:[%s9 + $0x4c] sm:$0xf]
      %v3232 = vld [vmem:[%s9 + $0x50] sm:$0xf]
      %v3233 = vld [vmem:[%s9 + $0x54] sm:$0xf]
      %v3234 = vld [vmem:[%s9 + $0x58] sm:$0xf]
      %v3235 = vld [vmem:[%s9 + $0x5c] sm:$0xf]
      %v3236 = vld [vmem:[%s9 + $0x60] sm:$0xf]
      %v3237 = vld [vmem:[%s9 + $0x64] sm:$0xf]
      %v3238 = vld [vmem:[%s9 + $0x68] sm:$0xf]
      %v3239 = vld [vmem:[%s9 + $0x6c] sm:$0xf]
      %v3240 = vld [vmem:[%s9 + $0x70] sm:$0xf]
      %v3241 = vld [vmem:[%s9 + $0x74] sm:$0xf]
      %v3242 = vld [vmem:[%s9 + $0x78] sm:$0xf]
      %v3243 = vld [vmem:[%s9 + $0x7c] sm:$0xf]
      %v3244 = vld [vmem:[%s10] sm:$0x1]
      %v3246 = vlaneseq
      %v3247 = vshrl.u32 %v3246, 7
      %v3248 = vsub.s32 0, %v3247
      %v3249 = vrot.slane %v3244, %v3248
      %v3283 = vunpack.c.l.b16 %v3212
      %v3284 = vunpack.c.l.b16 %v3213
      %v3285 = vunpack.c.l.b16 %v3214
      %v3286 = vunpack.c.l.b16 %v3215
      %v3287 = vunpack.c.l.b16 %v3216
      %v3288 = vunpack.c.l.b16 %v3217
      %v3289 = vunpack.c.l.b16 %v3218
      %v3290 = vunpack.c.l.b16 %v3219
      %v3291 = vunpack.c.l.b16 %v3220
      %v3292 = vunpack.c.l.b16 %v3221
      %v3293 = vunpack.c.l.b16 %v3222
      %v3294 = vunpack.c.l.b16 %v3223
      %v3295 = vunpack.c.l.b16 %v3224
      %v3296 = vunpack.c.l.b16 %v3225
      %v3297 = vunpack.c.l.b16 %v3226
      %v3298 = vunpack.c.l.b16 %v3227
      %v3299 = vunpack.c.l.b16 %v3228
      %v3300 = vunpack.c.l.b16 %v3229
      %v3301 = vunpack.c.l.b16 %v3230
      %v3302 = vunpack.c.l.b16 %v3231
      %v3303 = vunpack.c.l.b16 %v3232
      %v3304 = vunpack.c.l.b16 %v3233
      %v3305 = vunpack.c.l.b16 %v3234
      %v3306 = vunpack.c.l.b16 %v3235
      %v3307 = vunpack.c.l.b16 %v3236
      %v3308 = vunpack.c.l.b16 %v3237
      %v3309 = vunpack.c.l.b16 %v3238
      %v3310 = vunpack.c.l.b16 %v3239
      %v3311 = vunpack.c.l.b16 %v3240
      %v3312 = vunpack.c.l.b16 %v3241
      %v3313 = vunpack.c.l.b16 %v3242
      %v3314 = vunpack.c.l.b16 %v3243
      %v3315 = vpack.c.b16 %v3284, %v3283
      %v3316 = vpack.c.b16 %v3286, %v3285
      %v3317 = vpack.c.b16 %v3288, %v3287
      %v3318 = vpack.c.b16 %v3290, %v3289
      %v3319 = vpack.c.b16 %v3292, %v3291
      %v3320 = vpack.c.b16 %v3294, %v3293
      %v3321 = vpack.c.b16 %v3296, %v3295
      %v3322 = vpack.c.b16 %v3298, %v3297
      %v3323 = vpack.c.b16 %v3300, %v3299
      %v3324 = vpack.c.b16 %v3302, %v3301
      %v3325 = vpack.c.b16 %v3304, %v3303
      %v3326 = vpack.c.b16 %v3306, %v3305
      %v3327 = vpack.c.b16 %v3308, %v3307
      %v3328 = vpack.c.b16 %v3310, %v3309
      %v3329 = vpack.c.b16 %v3312, %v3311
      %v3330 = vpack.c.b16 %v3314, %v3313
      %3347 = vmatprep.subr.bf16.mxu0 0
      %3348 = vmatpush1.bf16.msra.mxu0 %v3315
      %3349 = vmatprep.subr.bf16.mxu0 0
      %3350 = vmatpush1.bf16.msra.mxu0 %v3316
      %3351 = vmatprep.subr.bf16.mxu0 0
      %3352 = vmatpush1.bf16.msra.mxu0 %v3317
      %3353 = vmatprep.subr.bf16.mxu0 0
      %3354 = vmatpush1.bf16.msra.mxu0 %v3318
      %3355 = vmatprep.subr.bf16.mxu0 0
      %3356 = vmatpush1.bf16.msra.mxu0 %v3319
      %3357 = vmatprep.subr.bf16.mxu0 0
      %3358 = vmatpush1.bf16.msra.mxu0 %v3320
      %3359 = vmatprep.subr.bf16.mxu0 0
      %3360 = vmatpush1.bf16.msra.mxu0 %v3321
      %3361 = vmatprep.subr.bf16.mxu0 0
      %3362 = vmatpush1.bf16.msra.mxu0 %v3322
      %3363 = vmatprep.subr.bf16.mxu0 0
      %3364 = vmatpush1.bf16.msra.mxu0 %v3323
      %3365 = vmatprep.subr.bf16.mxu0 0
      %3366 = vmatpush1.bf16.msra.mxu0 %v3324
      %3367 = vmatprep.subr.bf16.mxu0 0
      %3368 = vmatpush1.bf16.msra.mxu0 %v3325
      %3369 = vmatprep.subr.bf16.mxu0 0
      %3370 = vmatpush1.bf16.msra.mxu0 %v3326
      %3371 = vmatprep.subr.bf16.mxu0 0
      %3372 = vmatpush1.bf16.msra.mxu0 %v3327
      %3373 = vmatprep.subr.bf16.mxu0 0
      %3374 = vmatpush1.bf16.msra.mxu0 %v3328
      %3375 = vmatprep.subr.bf16.mxu0 0
      %3376 = vmatpush1.bf16.msra.mxu0 %v3329
      %3377 = vmatprep.subr.bf16.mxu0 0
      %3378 = vmatpush1.bf16.msra.mxu0 %v3330
      %3379 = vmatprep.mubr.bf16.mxu0 %v3211
      %3380 = vmatmul.mubr.bf16.gmra.mrb[0].mxu0 %v3210
      %v3381 = vpop.f32.mrb[0].mxu0
      %v3382 = vadd.f32 %v3249, %v3381
      %v3383 = vpop.f32.mrb[0].mxu0
      %v3384 = vpop.f32.mrb[0].mxu0
      %v3385 = vpop.f32.mrb[0].mxu0
      %3386 = vdwg.mxu0
      %v3387 = vmax.f32 %v3382, 0.0
      %v3388 = vpack.c.bf16 %v3387, %v3387
      %v3389 = vld [vmem:[%s11] sm:$0xf]
      %v3390 = vld [vmem:[%s11 + $0x4] sm:$0xf]
      %v3391 = vld [vmem:[%s11 + $0x8] sm:$0xf]
      %v3392 = vld [vmem:[%s11 + $0xc] sm:$0xf]
      %v3393 = vld [vmem:[%s11 + $0x10] sm:$0xf]
      %v3394 = vld [vmem:[%s11 + $0x14] sm:$0xf]
      %v3395 = vld [vmem:[%s11 + $0x18] sm:$0xf]
      %v3396 = vld [vmem:[%s11 + $0x1c] sm:$0xf]
      %v3397 = vld [vmem:[%s11 + $0x20] sm:$0xf]
      %v3398 = vld [vmem:[%s11 + $0x24] sm:$0xf]
      %v3399 = vld [vmem:[%s11 + $0x28] sm:$0xf]
      %v3400 = vld [vmem:[%s11 + $0x2c] sm:$0xf]
      %v3401 = vld [vmem:[%s11 + $0x30] sm:$0xf]
      %v3402 = vld [vmem:[%s11 + $0x34] sm:$0xf]
      %v3403 = vld [vmem:[%s11 + $0x38] sm:$0xf]
      %v3404 = vld [vmem:[%s11 + $0x3c] sm:$0xf]
      %v3405 = vld [vmem:[%s12] sm:$0x1]
      %v3407 = vlaneseq
      %v3408 = vshrl.u32 %v3407, 7
      %v3409 = vsub.s32 0, %v3408
      %v3410 = vrot.slane %v3405, %v3409
      %v3428 = vunpack.c.l.b16 %v3389
      %v3429 = vunpack.c.l.b16 %v3390
      %v3430 = vunpack.c.l.b16 %v3391
      %v3431 = vunpack.c.l.b16 %v3392
      %v3432 = vunpack.c.l.b16 %v3393
      %v3433 = vunpack.c.l.b16 %v3394
      %v3434 = vunpack.c.l.b16 %v3395
      %v3435 = vunpack.c.l.b16 %v3396
      %v3436 = vunpack.c.l.b16 %v3397
      %v3437 = vunpack.c.l.b16 %v3398
      %v3438 = vunpack.c.l.b16 %v3399
      %v3439 = vunpack.c.l.b16 %v3400
      %v3440 = vunpack.c.l.b16 %v3401
      %v3441 = vunpack.c.l.b16 %v3402
      %v3442 = vunpack.c.l.b16 %v3403
      %v3443 = vunpack.c.l.b16 %v3404
      %v3444 = vpack.c.b16 %v3429, %v3428
      %v3445 = vpack.c.b16 %v3431, %v3430
      %v3446 = vpack.c.b16 %v3433, %v3432
      %v3447 = vpack.c.b16 %v3435, %v3434
      %v3448 = vpack.c.b16 %v3437, %v3436
      %v3449 = vpack.c.b16 %v3439, %v3438
      %v3450 = vpack.c.b16 %v3441, %v3440
      %v3451 = vpack.c.b16 %v3443, %v3442
      %3460 = vmatprep.subr.bf16.mxu0 0
      %3461 = vmatpush1.bf16.msra.mxu0 %v3444
      %3462 = vmatprep.subr.bf16.mxu0 0
      %3463 = vmatpush1.bf16.msra.mxu0 %v3445
      %3464 = vmatprep.subr.bf16.mxu0 0
      %3465 = vmatpush1.bf16.msra.mxu0 %v3446
      %3466 = vmatprep.subr.bf16.mxu0 0
      %3467 = vmatpush1.bf16.msra.mxu0 %v3447
      %3468 = vmatprep.subr.bf16.mxu0 0
      %3469 = vmatpush1.bf16.msra.mxu0 %v3448
      %3470 = vmatprep.subr.bf16.mxu0 0
      %3471 = vmatpush1.bf16.msra.mxu0 %v3449
      %3472 = vmatprep.subr.bf16.mxu0 0
      %3473 = vmatpush1.bf16.msra.mxu0 %v3450
      %3474 = vmatprep.subr.bf16.mxu0 0
      %3475 = vmatpush1.bf16.msra.mxu0 %v3451
      %3476 = vmatprep.subr.bf16.mxu0 0
      %3477 = vmatpush1.bf16.msra.mxu0 0
      %3478 = vmatprep.subr.bf16.mxu0 0
      %3479 = vmatpush1.bf16.msra.mxu0 0
      %3480 = vmatprep.subr.bf16.mxu0 0
      %3481 = vmatpush1.bf16.msra.mxu0 0
      %3482 = vmatprep.subr.bf16.mxu0 0
      %3483 = vmatpush1.bf16.msra.mxu0 0
      %3484 = vmatprep.subr.bf16.mxu0 0
      %3485 = vmatpush1.bf16.msra.mxu0 0
      %3486 = vmatprep.subr.bf16.mxu0 0
      %3487 = vmatpush1.bf16.msra.mxu0 0
      %3488 = vmatprep.subr.bf16.mxu0 0
      %3489 = vmatpush1.bf16.msra.mxu0 0
      %3490 = vmatprep.subr.bf16.mxu0 0
      %3491 = vmatpush1.bf16.msra.mxu0 0
      %3492 = vmatprep.mubr.bf16.mxu0 0
      %3493 = vmatmul.mubr.bf16.gmra.mrb[0].mxu0 %v3388
      %v3494 = vpop.f32.mrb[0].mxu0
      %v3495 = vadd.f32 %v3410, %v3494
      %v3496 = vpop.f32.mrb[0].mxu0
      %v3497 = vpop.f32.mrb[0].mxu0
      %v3498 = vpop.f32.mrb[0].mxu0
      %3499 = vdwg.mxu0
      %v3500 = vmax.f32 %v3495, 0.0
      %v3501 = vpack.c.bf16 %v3500, %v3500
      %v3502 = vld [vmem:[%s13] sm:$0xf]
      %v3503 = vld [vmem:[%s13 + $0x4] sm:$0xf]
      %v3504 = vld [vmem:[%s13 + $0x8] sm:$0xf]
      %v3505 = vld [vmem:[%s13 + $0xc] sm:$0xf]
      %v3506 = vld [vmem:[%s13 + $0x10] sm:$0xf]
      %v3507 = vld [vmem:[%s13 + $0x14] sm:$0xf]
      %v3508 = vld [vmem:[%s13 + $0x18] sm:$0xf]
      %v3509 = vld [vmem:[%s13 + $0x1c] sm:$0xf]
      %v3510 = vld [vmem:[%s14] sm:$0x1]
      %v3512 = vlaneseq
      %v3513 = vshrl.u32 %v3512, 7
      %v3514 = vsub.s32 0, %v3513
      %v3515 = vrot.slane %v3510, %v3514
      %v3525 = vunpack.c.l.b16 %v3502
      %v3526 = vunpack.c.l.b16 %v3503
      %v3527 = vunpack.c.l.b16 %v3504
      %v3528 = vunpack.c.l.b16 %v3505
      %v3529 = vunpack.c.l.b16 %v3506
      %v3530 = vunpack.c.l.b16 %v3507
      %v3531 = vunpack.c.l.b16 %v3508
      %v3532 = vunpack.c.l.b16 %v3509
      %v3533 = vpack.c.b16 %v3526, %v3525
      %v3534 = vpack.c.b16 %v3528, %v3527
      %v3535 = vpack.c.b16 %v3530, %v3529
      %v3536 = vpack.c.b16 %v3532, %v3531
      %vm3541 = vcmask 523264
      %v3543 = vsel %vm3541, %v3501, 0
      %3545 = vmatprep.subr.bf16.mxu0 0
      %3546 = vmatpush1.bf16.msra.mxu0 %v3533
      %3547 = vmatprep.subr.bf16.mxu0 0
      %3548 = vmatpush1.bf16.msra.mxu0 %v3534
      %3549 = vmatprep.subr.bf16.mxu0 0
      %3550 = vmatpush1.bf16.msra.mxu0 %v3535
      %3551 = vmatprep.subr.bf16.mxu0 0
      %3552 = vmatpush1.bf16.msra.mxu0 %v3536
      %3553 = vmatprep.subr.bf16.mxu0 0
      %3554 = vmatpush1.bf16.msra.mxu0 0
      %3555 = vmatprep.subr.bf16.mxu0 0
      %3556 = vmatpush1.bf16.msra.mxu0 0
      %3557 = vmatprep.subr.bf16.mxu0 0
      %3558 = vmatpush1.bf16.msra.mxu0 0
      %3559 = vmatprep.subr.bf16.mxu0 0
      %3560 = vmatpush1.bf16.msra.mxu0 0
      %3561 = vmatprep.subr.bf16.mxu0 0
      %3562 = vmatpush1.bf16.msra.mxu0 0
      %3563 = vmatprep.subr.bf16.mxu0 0
      %3564 = vmatpush1.bf16.msra.mxu0 0
      %3565 = vmatprep.subr.bf16.mxu0 0
      %3566 = vmatpush1.bf16.msra.mxu0 0
      %3567 = vmatprep.subr.bf16.mxu0 0
      %3568 = vmatpush1.bf16.msra.mxu0 0
      %3569 = vmatprep.subr.bf16.mxu0 0
      %3570 = vmatpush1.bf16.msra.mxu0 0
      %3571 = vmatprep.subr.bf16.mxu0 0
      %3572 = vmatpush1.bf16.msra.mxu0 0
      %3573 = vmatprep.subr.bf16.mxu0 0
      %3574 = vmatpush1.bf16.msra.mxu0 0
      %3575 = vmatprep.subr.bf16.mxu0 0
      %3576 = vmatpush1.bf16.msra.mxu0 0
      %3577 = vmatprep.mubr.bf16.mxu0 0
      %3578 = vmatmul.mubr.bf16.gmra.mrb[0].mxu0 %v3543
      %v3579 = vpop.f32.mrb[0].mxu0
      %v3580 = vadd.f32 %v3515, %v3579
      %v3581 = vpop.f32.mrb[0].mxu0
      %v3582 = vpop.f32.mrb[0].mxu0
      %v3583 = vpop.f32.mrb[0].mxu0
      %3584 = vdwg.mxu0
      %3585 = vst [vmem:[#allocation9] sm:$0x3] %v3580
    $region81: #{face_recognizer_forward.1} parent=1 // pred_fallthru
      _
    // Predicated region
    $region82: #{face_recognizer_forward.1} parent=1 // pred_check
      _
    $region83: #{face_recognizer_forward.1} parent=1 // pred_check_branch
      %3587 = sbr.rel (0) target = $region85
    $region84: #{face_recognizer_forward.1} parent=1 // pred_region
      %s3589 = ssub.s32 32, 32
      %3590 = vsyncadd [#allocation5], %s3589
      %s3592 = sshll.u32 [#allocation9], 4
      %s3593 = int_to_ptr.vmem [resolvable:$true] %s3592
      %3595 = dma.vmem_to_hbm [thread:$0]  %s3593, 32, %s15, [#allocation5]
    $region85: #{face_recognizer_forward.1} parent=1 // pred_fallthru
      _
    // Predicated region
    $region86: #{face_recognizer_forward.1} parent=1 // pred_check
      _
    $region87: #{face_recognizer_forward.1} parent=1 // pred_check_branch
      %3597 = sbr.rel (0) target = $region89
    $region88: #{face_recognizer_forward.1} parent=1 // pred_region
      %3598 = dma.done [#allocation5], 32
    $region89: #{face_recognizer_forward.1} parent=1 // pred_fallthru
      _
    %3599 = vsyncpa [#allocation4], 1
    %3600 = vsyncpa [#allocation7], 1
    %3601 = vsyncpa [#allocation5], 1

</llo_original>
